<compile_context>
chip_gen: v6e
topology: v6e:2x2x1
jax: 0.10.0
libtpu: 0.0.40
codegen_flags: <defaults>
</compile_context>

<pallas_src>
import numpy as np
import jax
import jax.numpy as jnp
from jax import lax
from jax.experimental import pallas as pl
from jax.experimental.pallas import tpu as pltpu

# ----------------------------- configuration --------------------------------
PAD_ID = 0
VOCAB = 64
EMB = 32          # embedding_size
HID = 32          # rnn_size
MAX_PATH_LENGTH = 8
_SUBLANE = 8


def _round_up(n, m):
    return ((n + m - 1) // m) * m


# ------------------------------ Pallas kernels -------------------------------
def _lstm_unrolled(x_flat, lens, wih, whh, bg, hs_scr):
    """Single-layer unidirectional LSTM, statically unrolled over time.

    x_flat : (T*B, E) bf16 value     time-major inputs, flattened
    lens   : (B, 1)  f32 value       per-sequence lengths
    wih    : (E, 4H) bf16 value      W_ih^T  (gate order i, f, g, o)
    whh    : (H, 4H) bf16 value      W_hh^T
    bg     : (1, 4H) f32 value       b_ih + b_hh
    hs_scr : (T*B, H) f32 VMEM scratch — receives zero-masked hidden states
                                     (matching pad_packed_sequence outputs)
    """
    B = lens.shape[0]
    T = x_flat.shape[0] // B
    H = whh.shape[0]

    # Input projection hoisted out of the recurrence: ONE big MXU dot.
    xg = jnp.dot(x_flat, wih, preferred_element_type=jnp.float32) + bg   # (T*B, 4H)

    # Full-width gate activations: lane-iota select between tanh (g) / sigmoid.
    lane = lax.broadcasted_iota(jnp.int32, (B, 4 * H), 1)
    is_g = jnp.logical_and(lane >= 2 * H, lane < 3 * H)

    h = jnp.zeros((B, H), jnp.float32)
    c = jnp.zeros((B, H), jnp.float32)
    for t in range(T):                                        # static unroll, T <= 8
        gates = xg[t * B:(t + 1) * B, :] + jnp.dot(
            h.astype(jnp.bfloat16), whh, preferred_element_type=jnp.float32)
        act = jnp.where(is_g, jnp.tanh(gates), jax.nn.sigmoid(gates))    # (B, 4H)
        i_g = act[:, 0:H]
        f_g = act[:, H:2 * H]
        g_g = act[:, 2 * H:3 * H]
        o_g = act[:, 3 * H:4 * H]
        c_new = f_g * c + i_g * g_g
        h_new = o_g * jnp.tanh(c_new)
        valid = (lens > t).astype(jnp.float32)                # (B, 1) in-kernel mask
        # Freeze carried h/c past each sequence length (packed-sequence semantics).
        c = valid * c_new + (1.0 - valid) * c
        h = valid * h_new + (1.0 - valid) * h
        hs_scr[t * B:(t + 1) * B, :] = h * valid              # zero past length


def token_encoder_kernel(x_ref, len_ref, wih_ref, whh_ref, bg_ref,
                         wlin_ref, blin_ref, ln_g_ref, ln_b_ref,
                         watt_ref, batt_ref, out_ref, hs_scr):
    """Fused token encoder: LSTM -> token_linear -> LayerNorm -> tanh ->
    attention scores -> masked softmax over time -> weighted sum of the
    pre-norm linear outputs.  x_ref: (T*B, E) bf16, out_ref: (B, E) f32."""
    lens = len_ref[...]                                            # (B, 1)
    B = lens.shape[0]
    T = x_ref.shape[0] // B
    E = wlin_ref.shape[-1]

    _lstm_unrolled(x_ref[...], lens, wih_ref[...], whh_ref[...], bg_ref[...],
                   hs_scr)

    # token_linear on the whole (T*B, H) slab -> one MXU pass (bf16 operands).
    lin = (jnp.dot(hs_scr[...].astype(jnp.bfloat16), wlin_ref[...],
                   preferred_element_type=jnp.float32) + blin_ref[...])   # (T*B, E)
    lin3 = lin.reshape(T, B, E)                                    # leading-dim split

    # token_norm (LayerNorm) + tanh
    mu = jnp.mean(lin3, axis=-1, keepdims=True)
    var = jnp.mean(jnp.square(lin3 - mu), axis=-1, keepdims=True)
    q3 = jnp.tanh((lin3 - mu) * lax.rsqrt(var + 1e-5) * ln_g_ref[...]
                  + ln_b_ref[...])

    # LocalAttention scores: Linear(E, 1) -> (T, B, 1)
    s3 = jnp.sum(q3 * watt_ref[...], axis=-1, keepdims=True) + batt_ref[...]

    # Vectorized masked softmax over time (pad == position >= length).
    t_idx = lax.broadcasted_iota(jnp.int32, (T, B, 1), 0).astype(jnp.float32)
    valid = t_idx < lens[None, :, :]                               # (T, B, 1)
    s3 = jnp.where(valid, s3, -1e9)
    m = jnp.max(s3, axis=0, keepdims=True)                         # (1, B, 1)
    e = jnp.exp(s3 - m)                                            # masked -> ~0
    denom = jnp.sum(e, axis=0)                                     # (B, 1)
    acc = jnp.sum(e * lin3, axis=0)                                # (B, E)

    # Zero fully-padded batch columns (lens == 0) for robustness.
    col_ok = (lens > 0.0).astype(jnp.float32)                      # (B, 1)
    out_ref[...] = acc * pl.reciprocal(denom, approx=True) * col_ok


def path_encoder_kernel(x_ref, len_ref, wih_ref, whh_ref, bg_ref,
                        wu_ref, bu_ref, out_ref, hs_scr):
    """Fused (merged expath + cut-batch) path encoder: LSTM -> unit_linear.
    x_ref: (T*C, E) bf16, out_ref: (T*C, E) f32."""
    _lstm_unrolled(x_ref[...], len_ref[...], wih_ref[...], whh_ref[...],
                   bg_ref[...], hs_scr)
    # unit_linear applied to the whole slab (including zero-padded positions,
    # matching the reference which runs the Linear on the padded LSTM output).
    out_ref[...] = (jnp.dot(hs_scr[...].astype(jnp.bfloat16), wu_ref[...],
                            preferred_element_type=jnp.float32) + bu_ref[...])


# ----------------------------- kernel wrappers --------------------------------
def run_token_encoder(emb_flat, lens, p):
    """emb_flat: [T*U_pad, E] bf16 (U_pad multiple of 8); lens: [U_pad, 1] f32."""
    TB, _ = emb_flat.shape
    B = lens.shape[0]
    H, E = p["lin_wT"].shape
    bf = jnp.bfloat16
    return pl.pallas_call(
        token_encoder_kernel,
        out_shape=jax.ShapeDtypeStruct((B, E), jnp.float32),
        scratch_shapes=[pltpu.VMEM((TB, H), jnp.float32)],
    )(emb_flat, lens,
      p["tok_wihT"].astype(bf), p["tok_whhT"].astype(bf), p["tok_b"],
      p["lin_wT"].astype(bf), p["lin_b"], p["ln_g"], p["ln_b"],
      p["att_w"], p["att_b"])


def run_path_encoder(feats_flat, lens, p):
    """feats_flat: [T*C, E] bf16 (C multiple of 8); lens: [C, 1] f32."""
    TB, _ = feats_flat.shape
    H, E = p["unit_wT"].shape
    bf = jnp.bfloat16
    return pl.pallas_call(
        path_encoder_kernel,
        out_shape=jax.ShapeDtypeStruct((TB, E), jnp.float32),
        scratch_shapes=[pltpu.VMEM((TB, H), jnp.float32)],
    )(feats_flat, lens,
      p["path_wihT"].astype(bf), p["path_whhT"].astype(bf), p["path_b"],
      p["unit_wT"].astype(bf), p["unit_b"])


# --------------------- host-side planning (integer inputs only) ----------------
def _token_plan(units_np):
    Tk, U = units_np.shape
    is_pad = units_np == PAD_ID
    has_pad = is_pad.any(axis=0)
    first_pad = np.where(has_pad, is_pad.argmax(axis=0), Tk).astype(np.int32)
    Tout = max(int(first_pad.max()), 1)
    U_pad = _round_up(U, _SUBLANE)
    ids = np.full((Tout, U_pad), PAD_ID, dtype=np.int32)
    ids[:, :U] = units_np[:Tout]
    lens = np.zeros((U_pad, 1), np.float32)
    lens[:U, 0] = first_pad
    return ids, lens, U_pad


def _unit_to_path_plan(units_per_data, paths_np, path_per_data, zero_row, pad_row):
    """Gather indices into the encoded-unit table reproducing _unit_to_path."""
    n_paths = paths_np.shape[1]
    is_end = paths_np == -1
    has_end = is_end.any(axis=0)
    first_end = np.where(has_end, is_end.argmax(axis=0), paths_np.shape[0])
    max_length = max(int(min(int(first_end.max()), MAX_PATH_LENGTH)), 1)
    idx = np.full((max_length, n_paths), zero_row, dtype=np.int32)
    mask = np.ones((max_length, n_paths), dtype=bool)
    pb, ub = 0, 0
    for i, un in enumerate(units_per_data):
        for j in range(path_per_data[i]):
            col = pb + j
            fe = int(first_end[col])
            bp = paths_np[:fe, col]
            L = min(fe, max_length)
            for t in range(L):
                u = int(bp[t])
                if u < un:
                    idx[t, col] = ub + (u if u >= 0 else un + u)
                else:
                    idx[t, col] = pad_row        # zero_unit (filled with pad_id)
            # TODO(synk): reference uses `> units_num` (not >=); kept for fidelity.
            mask[:L, col] = ((bp < 0) | (bp > un))[:L]
        pb += path_per_data[i]
        ub += un
    return idx, mask


def _cut_batch_plan(num_per_batch, zero_row):
    B = len(num_per_batch)
    max_ctx = int(max(num_per_batch))
    L = max(min(max_ctx, MAX_PATH_LENGTH), 1)      # forward() truncation
    idx = np.full((L, B), zero_row, dtype=np.int32)
    mask = np.ones((L, B), dtype=bool)
    starts = np.append([0], np.cumsum(num_per_batch)[:-1])
    for i, (s, n) in enumerate(zip(starts, num_per_batch)):
        n = min(int(n), L)
        idx[:n, i] = np.arange(s, s + n, dtype=np.int32)
        mask[:n, i] = False
    return idx, mask


def _encoder_plan(idx, mask, zero_row):
    """Truncate to max valid length, pad the column dim to 8, build lengths."""
    T, P = idx.shape
    has = mask.any(axis=0)
    first_pad = np.where(has, mask.argmax(axis=0), T).astype(np.int32)
    Lmax = max(int(first_pad.max()), 1)
    P_pad = _round_up(P, _SUBLANE)
    idx_p = np.full((Lmax, P_pad), zero_row, dtype=np.int32)
    idx_p[:, :P] = idx[:Lmax]
    lens = np.zeros((P_pad, 1), np.float32)
    lens[:P, 0] = first_pad
    return idx_p, lens, mask[:Lmax], P_pad


def _merge_path_plans(exp_idx, exp_lens, cut_idx, cut_lens, zero_row):
    """Concatenate the two path-encoder branches along the batch dim so a
    single pallas_call handles both (shared path_lstm / unit_linear)."""
    L_exp, P_pad = exp_idx.shape
    L_cut, B_pad = cut_idx.shape
    T_m = max(L_exp, L_cut)
    C = P_pad + B_pad
    idx = np.full((T_m, C), zero_row, dtype=np.int32)
    idx[:L_exp, :P_pad] = exp_idx
    idx[:L_cut, P_pad:] = cut_idx
    lens = np.concatenate([exp_lens, cut_lens], axis=0)   # (C, 1)
    return idx, lens, T_m, C


def _splice_plan(exp_mask, cut_mask, path_per_data, P_pad, B_pad, T_m, C):
    """Flat gather indices into [merged_path_out ; zero] reproducing
    _splice_expaths.  Row (t, col) of the merged (T_m, C, E) output lives at
    flat index t*C + col (exp column j -> col=j, cut column b -> col=P_pad+b)."""
    exp_L, _ = exp_mask.shape
    cut_L, B = cut_mask.shape
    max_order_length = max(path_per_data) * exp_L + cut_L
    zero_flat = T_m * C
    idx = np.full((max_order_length, B), zero_flat, dtype=np.int32)
    mask = np.ones((max_order_length, B), dtype=bool)
    pb = 0
    for b in range(B):
        rows = [np.arange(cut_L, dtype=np.int32) * C + (P_pad + b)]
        mrows = [cut_mask[:, b]]
        for j in range(path_per_data[b]):
            col = pb + j
            rows.append(np.arange(exp_L, dtype=np.int32) * C + col)
            mrows.append(exp_mask[:, col])
        rows = np.concatenate(rows)
        mrows = np.concatenate(mrows)
        idx[:rows.shape[0], b] = rows
        mask[:mrows.shape[0], b] = mrows
        pb += path_per_data[b]
    return idx, mask


# ---------------------------- device-side forward -----------------------------
@jax.jit
def _device_forward(p, units_ids, tok_lens, path_idx, path_lens, splice_idx):
    E = p["embedding"].shape[-1]
    Tt, U_pad = units_ids.shape

    # Token encoder (embedding gather is glue; the rest is one fused kernel).
    emb = p["embedding"][units_ids]                                # (Tt, U_pad, E)
    emb_flat = emb.reshape(Tt * U_pad, E).astype(jnp.bfloat16)
    encoded = run_token_encoder(emb_flat, tok_lens, p)             # (U_pad, E)
    src_units = jnp.concatenate(
        [encoded,
         jnp.zeros((1, E), jnp.float32),                           # ZERO_ROW
         jnp.full((1, E), float(PAD_ID), jnp.float32)], axis=0)    # PAD_ROW (zero_unit)

    # Merged path encoder: expath + cut-batch branches in ONE pallas_call.
    Tm, C = path_idx.shape
    feats = src_units[path_idx]                                    # (Tm, C, E)
    feats_flat = feats.reshape(Tm * C, E).astype(jnp.bfloat16)
    path_out = run_path_encoder(feats_flat, path_lens, p)          # (Tm*C, E)

    # _splice_expaths as a single flat gather over the merged output.
    src_splice = jnp.concatenate(
        [path_out, jnp.zeros((1, E), jnp.float32)], axis=0)
    return src_splice[splice_idx]                                  # (L_order, B, E)


def forward(p, units_np, unit_per_data, paths_np, path_per_data):
    units_np = np.asarray(units_np, dtype=np.int32)
    paths_np = np.asarray(paths_np, dtype=np.int32)

    # ---- host planning: pure numpy over the integer inputs, no device syncs ----
    units_ids, tok_lens, U_pad = _token_plan(units_np)
    ZERO_ROW, PAD_ROW = U_pad, U_pad + 1

    exp_idx0, exp_mask0 = _unit_to_path_plan(unit_per_data, paths_np,
                                             path_per_data, ZERO_ROW, PAD_ROW)
    cut_idx0, cut_mask0 = _cut_batch_plan(unit_per_data, ZERO_ROW)

    exp_idx, exp_lens, exp_mask, P_pad = _encoder_plan(exp_idx0, exp_mask0, ZERO_ROW)
    cut_idx, cut_lens, cut_mask, B_pad = _encoder_plan(cut_idx0, cut_mask0, ZERO_ROW)

    path_idx, path_lens, T_m, C = _merge_path_plans(exp_idx, exp_lens,
                                                    cut_idx, cut_lens, ZERO_ROW)
    splice_idx, splice_mask = _splice_plan(exp_mask, cut_mask, path_per_data,
                                           P_pad, B_pad, T_m, C)

    # ---- single jitted device graph: 2 fused kernels + gather glue ----
    out = _device_forward(p, jnp.asarray(units_ids), jnp.asarray(tok_lens),
                          jnp.asarray(path_idx), jnp.asarray(path_lens),
                          jnp.asarray(splice_idx))
    return out, jnp.asarray(splice_mask)


# --------------------------------- params ------------------------------------
def init_params(key, vocab=VOCAB, E=EMB, H=HID):
    ks = jax.random.split(key, 13)

    def rnd(k, shape, s=0.1):
        return (s * jax.random.normal(k, shape)).astype(jnp.float32)

    return {
        "embedding": rnd(ks[0], (vocab, E)),
        # token_lstm: split W_ih^T (E,4H) / W_hh^T (H,4H), gate order i,f,g,o
        "tok_wihT": rnd(ks[1], (E, 4 * H)),
        "tok_whhT": rnd(ks[2], (H, 4 * H)),
        "tok_b":    rnd(ks[3], (1, 4 * H)),          # b_ih + b_hh
        # token_linear (rnn_size -> embedding_size)
        "lin_wT": rnd(ks[4], (H, E)),
        "lin_b":  rnd(ks[5], (1, E)),
        # token_norm (LayerNorm default init)
        "ln_g": jnp.ones((1, E), jnp.float32),
        "ln_b": jnp.zeros((1, E), jnp.float32),
        # token_weight (LocalAttention: Linear(E, 1))
        "att_w": rnd(ks[6], (1, E)),
        "att_b": rnd(ks[7], (1, 1)),
        # path_lstm (split gates)
        "path_wihT": rnd(ks[8], (E, 4 * H)),
        "path_whhT": rnd(ks[9], (H, 4 * H)),
        "path_b":    rnd(ks[10], (1, 4 * H)),
        # unit_linear
        "unit_wT": rnd(ks[11], (H, E)),
        "unit_b":  rnd(ks[12], (1, E)),
    }


# ---------------------------------- main --------------------------------------
if __name__ == "__main__":
    key = jax.random.PRNGKey(0)
    pkey, dkey = jax.random.split(key)
    params = init_params(pkey)

    # Inputs (time-major, like the PyTorch module):
    #   units: int32 [token_seq_len=8, total_units=8], pad_id = 0
    #   unit_per_data = [5, 3]   (total_units = 8)
    #   paths: int32 [path_seq_len=6, total_paths=4], -1 = end marker
    #   path_per_data = [2, 2]
    Tk, U = 8, 8
    unit_per_data = [5, 3]
    path_per_data = [2, 2]
    unit_lengths = np.array([8, 7, 6, 5, 4, 3, 2, 2])
    tokens = np.asarray(jax.random.randint(dkey, (Tk, U), 1, VOCAB), dtype=np.int32)
    units_np = np.where(np.arange(Tk)[:, None] < unit_lengths[None, :],
                        tokens, np.int32(PAD_ID)).astype(np.int32)

    paths_np = np.full((6, 4), -1, dtype=np.int32)
    paths_np[:3, 0] = [0, 2, 4]     # data 0, path 0
    paths_np[:2, 1] = [1, 3]        # data 0, path 1
    paths_np[:3, 2] = [0, 1, 2]     # data 1, path 0
    paths_np[:2, 3] = [2, 0]        # data 1, path 1

    out_features, out_mask = forward(params, units_np, unit_per_data,
                                     paths_np, path_per_data)
    jax.block_until_ready((out_features, out_mask))
    assert out_features.shape == (out_mask.shape[0], len(unit_per_data), EMB)
    assert np.all(np.isfinite(np.asarray(out_features)))
    print("KERNEL_OK")
</pallas_src>

<mosaic_0001>
module attributes {stable_mosaic.version = 11 : i64} {
  func.func @path_encoder_kernel(%arg0: memref<80x32xbf16, #tpu.memory_space<vmem>>, %arg1: memref<16x1xf32, #tpu.memory_space<vmem>>, %arg2: memref<32x128xbf16, #tpu.memory_space<vmem>>, %arg3: memref<32x128xbf16, #tpu.memory_space<vmem>>, %arg4: memref<1x128xf32, #tpu.memory_space<vmem>>, %arg5: memref<32x32xbf16, #tpu.memory_space<vmem>>, %arg6: memref<1x32xf32, #tpu.memory_space<vmem>>, %arg7: memref<80x32xf32, #tpu.memory_space<vmem>>, %arg8: memref<80x32xf32, #tpu.memory_space<vmem>>) attributes {dimension_semantics = [], scalar_prefetch = 0 : i64, scratch_operands = 1 : i64, tpu.core_type = #tpu.core_type<tc>} {
    %c0 = arith.constant 0 : index
    %c0_0 = arith.constant 0 : index
    %0 = vector.load %arg0[%c0, %c0_0] : memref<80x32xbf16, #tpu.memory_space<vmem>>, vector<80x32xbf16>
    %c0_1 = arith.constant 0 : index
    %c0_2 = arith.constant 0 : index
    %1 = vector.load %arg1[%c0_1, %c0_2] : memref<16x1xf32, #tpu.memory_space<vmem>>, vector<16x1xf32>
    %c0_3 = arith.constant 0 : index
    %c0_4 = arith.constant 0 : index
    %2 = vector.load %arg2[%c0_3, %c0_4] : memref<32x128xbf16, #tpu.memory_space<vmem>>, vector<32x128xbf16>
    %c0_5 = arith.constant 0 : index
    %c0_6 = arith.constant 0 : index
    %3 = vector.load %arg3[%c0_5, %c0_6] : memref<32x128xbf16, #tpu.memory_space<vmem>>, vector<32x128xbf16>
    %c0_7 = arith.constant 0 : index
    %c0_8 = arith.constant 0 : index
    %4 = vector.load %arg4[%c0_7, %c0_8] : memref<1x128xf32, #tpu.memory_space<vmem>>, vector<1x128xf32>
    %cst = arith.constant dense<0.000000e+00> : vector<80x128xf32>
    %5 = tpu.matmul %0, %2, %cst {dimension_numbers = #tpu.dot_dimension_numbers<[1], [0], [0], [1], [0, 0, 1, 1], [], []>} : vector<80x32xbf16>, vector<32x128xbf16>, vector<80x128xf32> -> vector<80x128xf32>
    %6 = vector.broadcast %4 : vector<1x128xf32> to vector<80x128xf32>
    %7 = arith.addf %5, %6 : vector<80x128xf32>
    %8 = tpu.iota {dimensions = array<i32: 1>} : vector<16x128xi32>
    %c64_i32 = arith.constant 64 : i32
    %9 = vector.broadcast %c64_i32 : i32 to vector<16x128xi32>
    %10 = arith.cmpi sge, %8, %9 : vector<16x128xi32>
    %c96_i32 = arith.constant 96 : i32
    %11 = vector.broadcast %c96_i32 : i32 to vector<16x128xi32>
    %12 = arith.cmpi slt, %8, %11 : vector<16x128xi32>
    %13 = arith.andi %10, %12 : vector<16x128xi1>
    %cst_9 = arith.constant 0.000000e+00 : f32
    %14 = vector.broadcast %cst_9 : f32 to vector<16x32xf32>
    %cst_10 = arith.constant 0.000000e+00 : f32
    %15 = vector.broadcast %cst_10 : f32 to vector<16x32xf32>
    %16 = vector.extract_strided_slice %7 {offsets = [0, 0], sizes = [16, 128], strides = [1, 1]} : vector<80x128xf32> to vector<16x128xf32>
    %17 = arith.truncf %14 : vector<16x32xf32> to vector<16x32xbf16>
    %cst_11 = arith.constant dense<0.000000e+00> : vector<16x128xf32>
    %18 = tpu.matmul %17, %3, %cst_11 {dimension_numbers = #tpu.dot_dimension_numbers<[1], [0], [0], [1], [0, 0, 1, 1], [], []>} : vector<16x32xbf16>, vector<32x128xbf16>, vector<16x128xf32> -> vector<16x128xf32>
    %19 = arith.addf %16, %18 : vector<16x128xf32>
    %20 = math.tanh %19 : vector<16x128xf32>
    %21 = arith.negf %19 : vector<16x128xf32>
    %22 = math.exp %21 : vector<16x128xf32>
    %cst_12 = arith.constant 1.000000e+00 : f32
    %23 = vector.broadcast %cst_12 : f32 to vector<16x128xf32>
    %24 = arith.addf %23, %22 : vector<16x128xf32>
    %25 = arith.divf %23, %24 : vector<16x128xf32>
    %26 = arith.select %13, %20, %25 : vector<16x128xi1>, vector<16x128xf32>
    %27 = vector.extract_strided_slice %26 {offsets = [0, 0], sizes = [16, 32], strides = [1, 1]} : vector<16x128xf32> to vector<16x32xf32>
    %28 = vector.extract_strided_slice %26 {offsets = [0, 32], sizes = [16, 32], strides = [1, 1]} : vector<16x128xf32> to vector<16x32xf32>
    %29 = vector.extract_strided_slice %26 {offsets = [0, 64], sizes = [16, 32], strides = [1, 1]} : vector<16x128xf32> to vector<16x32xf32>
    %30 = vector.extract_strided_slice %26 {offsets = [0, 96], sizes = [16, 32], strides = [1, 1]} : vector<16x128xf32> to vector<16x32xf32>
    %31 = arith.mulf %28, %15 : vector<16x32xf32>
    %32 = arith.mulf %27, %29 : vector<16x32xf32>
    %33 = arith.addf %31, %32 : vector<16x32xf32>
    %34 = math.tanh %33 : vector<16x32xf32>
    %35 = arith.mulf %30, %34 : vector<16x32xf32>
    %cst_13 = arith.constant 0.000000e+00 : f32
    %36 = vector.broadcast %cst_13 : f32 to vector<16x1xf32>
    %37 = arith.cmpf ogt, %1, %36 : vector<16x1xf32>
    %38 = arith.extui %37 : vector<16x1xi1> to vector<16x1xi32>
    %39 = arith.sitofp %38 : vector<16x1xi32> to vector<16x1xf32>
    %40 = vector.broadcast %39 : vector<16x1xf32> to vector<16x32xf32>
    %41 = arith.mulf %40, %33 : vector<16x32xf32>
    %cst_14 = arith.constant 1.000000e+00 : f32
    %42 = vector.broadcast %cst_14 : f32 to vector<16x1xf32>
    %43 = arith.subf %42, %39 : vector<16x1xf32>
    %44 = vector.broadcast %43 : vector<16x1xf32> to vector<16x32xf32>
    %45 = arith.mulf %44, %15 : vector<16x32xf32>
    %46 = arith.addf %41, %45 : vector<16x32xf32>
    %47 = vector.broadcast %39 : vector<16x1xf32> to vector<16x32xf32>
    %48 = arith.mulf %47, %35 : vector<16x32xf32>
    %cst_15 = arith.constant 1.000000e+00 : f32
    %49 = vector.broadcast %cst_15 : f32 to vector<16x1xf32>
    %50 = arith.subf %49, %39 : vector<16x1xf32>
    %51 = vector.broadcast %50 : vector<16x1xf32> to vector<16x32xf32>
    %52 = arith.mulf %51, %14 : vector<16x32xf32>
    %53 = arith.addf %48, %52 : vector<16x32xf32>
    %54 = vector.broadcast %39 : vector<16x1xf32> to vector<16x32xf32>
    %55 = arith.mulf %53, %54 : vector<16x32xf32>
    %c0_16 = arith.constant 0 : index
    %c0_17 = arith.constant 0 : index
    %56 = vector.load %arg8[%c0_16, %c0_17] : memref<80x32xf32, #tpu.memory_space<vmem>>, vector<16x32xf32>
    tpu.vector_store %arg8[%c0_16, %c0_17], %55 {strides = array<i32>} : memref<80x32xf32, #tpu.memory_space<vmem>>, vector<16x32xf32>,
    %57 = vector.extract_strided_slice %7 {offsets = [16, 0], sizes = [16, 128], strides = [1, 1]} : vector<80x128xf32> to vector<16x128xf32>
    %58 = arith.truncf %53 : vector<16x32xf32> to vector<16x32xbf16>
    %cst_18 = arith.constant dense<0.000000e+00> : vector<16x128xf32>
    %59 = tpu.matmul %58, %3, %cst_18 {dimension_numbers = #tpu.dot_dimension_numbers<[1], [0], [0], [1], [0, 0, 1, 1], [], []>} : vector<16x32xbf16>, vector<32x128xbf16>, vector<16x128xf32> -> vector<16x128xf32>
    %60 = arith.addf %57, %59 : vector<16x128xf32>
    %61 = math.tanh %60 : vector<16x128xf32>
    %62 = arith.negf %60 : vector<16x128xf32>
    %63 = math.exp %62 : vector<16x128xf32>
    %cst_19 = arith.constant 1.000000e+00 : f32
    %64 = vector.broadcast %cst_19 : f32 to vector<16x128xf32>
    %65 = arith.addf %64, %63 : vector<16x128xf32>
    %66 = arith.divf %64, %65 : vector<16x128xf32>
    %67 = arith.select %13, %61, %66 : vector<16x128xi1>, vector<16x128xf32>
    %68 = vector.extract_strided_slice %67 {offsets = [0, 0], sizes = [16, 32], strides = [1, 1]} : vector<16x128xf32> to vector<16x32xf32>
    %69 = vector.extract_strided_slice %67 {offsets = [0, 32], sizes = [16, 32], strides = [1, 1]} : vector<16x128xf32> to vector<16x32xf32>
    %70 = vector.extract_strided_slice %67 {offsets = [0, 64], sizes = [16, 32], strides = [1, 1]} : vector<16x128xf32> to vector<16x32xf32>
    %71 = vector.extract_strided_slice %67 {offsets = [0, 96], sizes = [16, 32], strides = [1, 1]} : vector<16x128xf32> to vector<16x32xf32>
    %72 = arith.mulf %69, %46 : vector<16x32xf32>
    %73 = arith.mulf %68, %70 : vector<16x32xf32>
    %74 = arith.addf %72, %73 : vector<16x32xf32>
    %75 = math.tanh %74 : vector<16x32xf32>
    %76 = arith.mulf %71, %75 : vector<16x32xf32>
    %cst_20 = arith.constant 1.000000e+00 : f32
    %77 = vector.broadcast %cst_20 : f32 to vector<16x1xf32>
    %78 = arith.cmpf ogt, %1, %77 : vector<16x1xf32>
    %79 = arith.extui %78 : vector<16x1xi1> to vector<16x1xi32>
    %80 = arith.sitofp %79 : vector<16x1xi32> to vector<16x1xf32>
    %81 = vector.broadcast %80 : vector<16x1xf32> to vector<16x32xf32>
    %82 = arith.mulf %81, %74 : vector<16x32xf32>
    %cst_21 = arith.constant 1.000000e+00 : f32
    %83 = vector.broadcast %cst_21 : f32 to vector<16x1xf32>
    %84 = arith.subf %83, %80 : vector<16x1xf32>
    %85 = vector.broadcast %84 : vector<16x1xf32> to vector<16x32xf32>
    %86 = arith.mulf %85, %46 : vector<16x32xf32>
    %87 = arith.addf %82, %86 : vector<16x32xf32>
    %88 = vector.broadcast %80 : vector<16x1xf32> to vector<16x32xf32>
    %89 = arith.mulf %88, %76 : vector<16x32xf32>
    %cst_22 = arith.constant 1.000000e+00 : f32
    %90 = vector.broadcast %cst_22 : f32 to vector<16x1xf32>
    %91 = arith.subf %90, %80 : vector<16x1xf32>
    %92 = vector.broadcast %91 : vector<16x1xf32> to vector<16x32xf32>
    %93 = arith.mulf %92, %53 : vector<16x32xf32>
    %94 = arith.addf %89, %93 : vector<16x32xf32>
    %95 = vector.broadcast %80 : vector<16x1xf32> to vector<16x32xf32>
    %96 = arith.mulf %94, %95 : vector<16x32xf32>
    %c16 = arith.constant 16 : index
    %c0_23 = arith.constant 0 : index
    %97 = vector.load %arg8[%c16, %c0_23] : memref<80x32xf32, #tpu.memory_space<vmem>>, vector<16x32xf32>
    tpu.vector_store %arg8[%c16, %c0_23], %96 {strides = array<i32>} : memref<80x32xf32, #tpu.memory_space<vmem>>, vector<16x32xf32>,
    %98 = vector.extract_strided_slice %7 {offsets = [32, 0], sizes = [16, 128], strides = [1, 1]} : vector<80x128xf32> to vector<16x128xf32>
    %99 = arith.truncf %94 : vector<16x32xf32> to vector<16x32xbf16>
    %cst_24 = arith.constant dense<0.000000e+00> : vector<16x128xf32>
    %100 = tpu.matmul %99, %3, %cst_24 {dimension_numbers = #tpu.dot_dimension_numbers<[1], [0], [0], [1], [0, 0, 1, 1], [], []>} : vector<16x32xbf16>, vector<32x128xbf16>, vector<16x128xf32> -> vector<16x128xf32>
    %101 = arith.addf %98, %100 : vector<16x128xf32>
    %102 = math.tanh %101 : vector<16x128xf32>
    %103 = arith.negf %101 : vector<16x128xf32>
    %104 = math.exp %103 : vector<16x128xf32>
    %cst_25 = arith.constant 1.000000e+00 : f32
    %105 = vector.broadcast %cst_25 : f32 to vector<16x128xf32>
    %106 = arith.addf %105, %104 : vector<16x128xf32>
    %107 = arith.divf %105, %106 : vector<16x128xf32>
    %108 = arith.select %13, %102, %107 : vector<16x128xi1>, vector<16x128xf32>
    %109 = vector.extract_strided_slice %108 {offsets = [0, 0], sizes = [16, 32], strides = [1, 1]} : vector<16x128xf32> to vector<16x32xf32>
    %110 = vector.extract_strided_slice %108 {offsets = [0, 32], sizes = [16, 32], strides = [1, 1]} : vector<16x128xf32> to vector<16x32xf32>
    %111 = vector.extract_strided_slice %108 {offsets = [0, 64], sizes = [16, 32], strides = [1, 1]} : vector<16x128xf32> to vector<16x32xf32>
    %112 = vector.extract_strided_slice %108 {offsets = [0, 96], sizes = [16, 32], strides = [1, 1]} : vector<16x128xf32> to vector<16x32xf32>
    %113 = arith.mulf %110, %87 : vector<16x32xf32>
    %114 = arith.mulf %109, %111 : vector<16x32xf32>
    %115 = arith.addf %113, %114 : vector<16x32xf32>
    %116 = math.tanh %115 : vector<16x32xf32>
    %117 = arith.mulf %112, %116 : vector<16x32xf32>
    %cst_26 = arith.constant 2.000000e+00 : f32
    %118 = vector.broadcast %cst_26 : f32 to vector<16x1xf32>
    %119 = arith.cmpf ogt, %1, %118 : vector<16x1xf32>
    %120 = arith.extui %119 : vector<16x1xi1> to vector<16x1xi32>
    %121 = arith.sitofp %120 : vector<16x1xi32> to vector<16x1xf32>
    %122 = vector.broadcast %121 : vector<16x1xf32> to vector<16x32xf32>
    %123 = arith.mulf %122, %115 : vector<16x32xf32>
    %cst_27 = arith.constant 1.000000e+00 : f32
    %124 = vector.broadcast %cst_27 : f32 to vector<16x1xf32>
    %125 = arith.subf %124, %121 : vector<16x1xf32>
    %126 = vector.broadcast %125 : vector<16x1xf32> to vector<16x32xf32>
    %127 = arith.mulf %126, %87 : vector<16x32xf32>
    %128 = arith.addf %123, %127 : vector<16x32xf32>
    %129 = vector.broadcast %121 : vector<16x1xf32> to vector<16x32xf32>
    %130 = arith.mulf %129, %117 : vector<16x32xf32>
    %cst_28 = arith.constant 1.000000e+00 : f32
    %131 = vector.broadcast %cst_28 : f32 to vector<16x1xf32>
    %132 = arith.subf %131, %121 : vector<16x1xf32>
    %133 = vector.broadcast %132 : vector<16x1xf32> to vector<16x32xf32>
    %134 = arith.mulf %133, %94 : vector<16x32xf32>
    %135 = arith.addf %130, %134 : vector<16x32xf32>
    %136 = vector.broadcast %121 : vector<16x1xf32> to vector<16x32xf32>
    %137 = arith.mulf %135, %136 : vector<16x32xf32>
    %c32 = arith.constant 32 : index
    %c0_29 = arith.constant 0 : index
    %138 = vector.load %arg8[%c32, %c0_29] : memref<80x32xf32, #tpu.memory_space<vmem>>, vector<16x32xf32>
    tpu.vector_store %arg8[%c32, %c0_29], %137 {strides = array<i32>} : memref<80x32xf32, #tpu.memory_space<vmem>>, vector<16x32xf32>,
    %139 = vector.extract_strided_slice %7 {offsets = [48, 0], sizes = [16, 128], strides = [1, 1]} : vector<80x128xf32> to vector<16x128xf32>
    %140 = arith.truncf %135 : vector<16x32xf32> to vector<16x32xbf16>
    %cst_30 = arith.constant dense<0.000000e+00> : vector<16x128xf32>
    %141 = tpu.matmul %140, %3, %cst_30 {dimension_numbers = #tpu.dot_dimension_numbers<[1], [0], [0], [1], [0, 0, 1, 1], [], []>} : vector<16x32xbf16>, vector<32x128xbf16>, vector<16x128xf32> -> vector<16x128xf32>
    %142 = arith.addf %139, %141 : vector<16x128xf32>
    %143 = math.tanh %142 : vector<16x128xf32>
    %144 = arith.negf %142 : vector<16x128xf32>
    %145 = math.exp %144 : vector<16x128xf32>
    %cst_31 = arith.constant 1.000000e+00 : f32
    %146 = vector.broadcast %cst_31 : f32 to vector<16x128xf32>
    %147 = arith.addf %146, %145 : vector<16x128xf32>
    %148 = arith.divf %146, %147 : vector<16x128xf32>
    %149 = arith.select %13, %143, %148 : vector<16x128xi1>, vector<16x128xf32>
    %150 = vector.extract_strided_slice %149 {offsets = [0, 0], sizes = [16, 32], strides = [1, 1]} : vector<16x128xf32> to vector<16x32xf32>
    %151 = vector.extract_strided_slice %149 {offsets = [0, 32], sizes = [16, 32], strides = [1, 1]} : vector<16x128xf32> to vector<16x32xf32>
    %152 = vector.extract_strided_slice %149 {offsets = [0, 64], sizes = [16, 32], strides = [1, 1]} : vector<16x128xf32> to vector<16x32xf32>
    %153 = vector.extract_strided_slice %149 {offsets = [0, 96], sizes = [16, 32], strides = [1, 1]} : vector<16x128xf32> to vector<16x32xf32>
    %154 = arith.mulf %151, %128 : vector<16x32xf32>
    %155 = arith.mulf %150, %152 : vector<16x32xf32>
    %156 = arith.addf %154, %155 : vector<16x32xf32>
    %157 = math.tanh %156 : vector<16x32xf32>
    %158 = arith.mulf %153, %157 : vector<16x32xf32>
    %cst_32 = arith.constant 3.000000e+00 : f32
    %159 = vector.broadcast %cst_32 : f32 to vector<16x1xf32>
    %160 = arith.cmpf ogt, %1, %159 : vector<16x1xf32>
    %161 = arith.extui %160 : vector<16x1xi1> to vector<16x1xi32>
    %162 = arith.sitofp %161 : vector<16x1xi32> to vector<16x1xf32>
    %163 = vector.broadcast %162 : vector<16x1xf32> to vector<16x32xf32>
    %164 = arith.mulf %163, %156 : vector<16x32xf32>
    %cst_33 = arith.constant 1.000000e+00 : f32
    %165 = vector.broadcast %cst_33 : f32 to vector<16x1xf32>
    %166 = arith.subf %165, %162 : vector<16x1xf32>
    %167 = vector.broadcast %166 : vector<16x1xf32> to vector<16x32xf32>
    %168 = arith.mulf %167, %128 : vector<16x32xf32>
    %169 = arith.addf %164, %168 : vector<16x32xf32>
    %170 = vector.broadcast %162 : vector<16x1xf32> to vector<16x32xf32>
    %171 = arith.mulf %170, %158 : vector<16x32xf32>
    %cst_34 = arith.constant 1.000000e+00 : f32
    %172 = vector.broadcast %cst_34 : f32 to vector<16x1xf32>
    %173 = arith.subf %172, %162 : vector<16x1xf32>
    %174 = vector.broadcast %173 : vector<16x1xf32> to vector<16x32xf32>
    %175 = arith.mulf %174, %135 : vector<16x32xf32>
    %176 = arith.addf %171, %175 : vector<16x32xf32>
    %177 = vector.broadcast %162 : vector<16x1xf32> to vector<16x32xf32>
    %178 = arith.mulf %176, %177 : vector<16x32xf32>
    %c48 = arith.constant 48 : index
    %c0_35 = arith.constant 0 : index
    %179 = vector.load %arg8[%c48, %c0_35] : memref<80x32xf32, #tpu.memory_space<vmem>>, vector<16x32xf32>
    tpu.vector_store %arg8[%c48, %c0_35], %178 {strides = array<i32>} : memref<80x32xf32, #tpu.memory_space<vmem>>, vector<16x32xf32>,
    %180 = vector.extract_strided_slice %7 {offsets = [64, 0], sizes = [16, 128], strides = [1, 1]} : vector<80x128xf32> to vector<16x128xf32>
    %181 = arith.truncf %176 : vector<16x32xf32> to vector<16x32xbf16>
    %cst_36 = arith.constant dense<0.000000e+00> : vector<16x128xf32>
    %182 = tpu.matmul %181, %3, %cst_36 {dimension_numbers = #tpu.dot_dimension_numbers<[1], [0], [0], [1], [0, 0, 1, 1], [], []>} : vector<16x32xbf16>, vector<32x128xbf16>, vector<16x128xf32> -> vector<16x128xf32>
    %183 = arith.addf %180, %182 : vector<16x128xf32>
    %184 = math.tanh %183 : vector<16x128xf32>
    %185 = arith.negf %183 : vector<16x128xf32>
    %186 = math.exp %185 : vector<16x128xf32>
    %cst_37 = arith.constant 1.000000e+00 : f32
    %187 = vector.broadcast %cst_37 : f32 to vector<16x128xf32>
    %188 = arith.addf %187, %186 : vector<16x128xf32>
    %189 = arith.divf %187, %188 : vector<16x128xf32>
    %190 = arith.select %13, %184, %189 : vector<16x128xi1>, vector<16x128xf32>
    %191 = vector.extract_strided_slice %190 {offsets = [0, 0], sizes = [16, 32], strides = [1, 1]} : vector<16x128xf32> to vector<16x32xf32>
    %192 = vector.extract_strided_slice %190 {offsets = [0, 32], sizes = [16, 32], strides = [1, 1]} : vector<16x128xf32> to vector<16x32xf32>
    %193 = vector.extract_strided_slice %190 {offsets = [0, 64], sizes = [16, 32], strides = [1, 1]} : vector<16x128xf32> to vector<16x32xf32>
    %194 = vector.extract_strided_slice %190 {offsets = [0, 96], sizes = [16, 32], strides = [1, 1]} : vector<16x128xf32> to vector<16x32xf32>
    %195 = arith.mulf %192, %169 : vector<16x32xf32>
    %196 = arith.mulf %191, %193 : vector<16x32xf32>
    %197 = arith.addf %195, %196 : vector<16x32xf32>
    %198 = math.tanh %197 : vector<16x32xf32>
    %199 = arith.mulf %194, %198 : vector<16x32xf32>
    %cst_38 = arith.constant 4.000000e+00 : f32
    %200 = vector.broadcast %cst_38 : f32 to vector<16x1xf32>
    %201 = arith.cmpf ogt, %1, %200 : vector<16x1xf32>
    %202 = arith.extui %201 : vector<16x1xi1> to vector<16x1xi32>
    %203 = arith.sitofp %202 : vector<16x1xi32> to vector<16x1xf32>
    %204 = vector.broadcast %203 : vector<16x1xf32> to vector<16x32xf32>
    %205 = arith.mulf %204, %199 : vector<16x32xf32>
    %cst_39 = arith.constant 1.000000e+00 : f32
    %206 = vector.broadcast %cst_39 : f32 to vector<16x1xf32>
    %207 = arith.subf %206, %203 : vector<16x1xf32>
    %208 = vector.broadcast %207 : vector<16x1xf32> to vector<16x32xf32>
    %209 = arith.mulf %208, %176 : vector<16x32xf32>
    %210 = arith.addf %205, %209 : vector<16x32xf32>
    %211 = vector.broadcast %203 : vector<16x1xf32> to vector<16x32xf32>
    %212 = arith.mulf %210, %211 : vector<16x32xf32>
    %c64 = arith.constant 64 : index
    %c0_40 = arith.constant 0 : index
    %213 = vector.load %arg8[%c64, %c0_40] : memref<80x32xf32, #tpu.memory_space<vmem>>, vector<16x32xf32>
    tpu.vector_store %arg8[%c64, %c0_40], %212 {strides = array<i32>} : memref<80x32xf32, #tpu.memory_space<vmem>>, vector<16x32xf32>,
    %c0_41 = arith.constant 0 : index
    %c0_42 = arith.constant 0 : index
    %214 = vector.load %arg8[%c0_41, %c0_42] : memref<80x32xf32, #tpu.memory_space<vmem>>, vector<80x32xf32>
    %215 = arith.truncf %214 : vector<80x32xf32> to vector<80x32xbf16>
    %c0_43 = arith.constant 0 : index
    %c0_44 = arith.constant 0 : index
    %216 = vector.load %arg5[%c0_43, %c0_44] : memref<32x32xbf16, #tpu.memory_space<vmem>>, vector<32x32xbf16>
    %cst_45 = arith.constant dense<0.000000e+00> : vector<80x32xf32>
    %217 = tpu.matmul %215, %216, %cst_45 {dimension_numbers = #tpu.dot_dimension_numbers<[1], [0], [0], [1], [0, 0, 1, 1], [], []>} : vector<80x32xbf16>, vector<32x32xbf16>, vector<80x32xf32> -> vector<80x32xf32>
    %c0_46 = arith.constant 0 : index
    %c0_47 = arith.constant 0 : index
    %218 = vector.load %arg6[%c0_46, %c0_47] : memref<1x32xf32, #tpu.memory_space<vmem>>, vector<1x32xf32>
    %219 = vector.broadcast %218 : vector<1x32xf32> to vector<80x32xf32>
    %220 = arith.addf %217, %219 : vector<80x32xf32>
    %c0_48 = arith.constant 0 : index
    %c0_49 = arith.constant 0 : index
    %221 = vector.load %arg7[%c0_48, %c0_49] : memref<80x32xf32, #tpu.memory_space<vmem>>, vector<80x32xf32>
    tpu.vector_store %arg7[%c0_48, %c0_49], %220 {strides = array<i32>} : memref<80x32xf32, #tpu.memory_space<vmem>>, vector<80x32xf32>,
    return
  }
}

module attributes {stable_mosaic.version = 11 : i64} {
  func.func @token_encoder_kernel(%arg0: memref<64x32xbf16, #tpu.memory_space<vmem>>, %arg1: memref<8x1xf32, #tpu.memory_space<vmem>>, %arg2: memref<32x128xbf16, #tpu.memory_space<vmem>>, %arg3: memref<32x128xbf16, #tpu.memory_space<vmem>>, %arg4: memref<1x128xf32, #tpu.memory_space<vmem>>, %arg5: memref<32x32xbf16, #tpu.memory_space<vmem>>, %arg6: memref<1x32xf32, #tpu.memory_space<vmem>>, %arg7: memref<1x32xf32, #tpu.memory_space<vmem>>, %arg8: memref<1x32xf32, #tpu.memory_space<vmem>>, %arg9: memref<1x32xf32, #tpu.memory_space<vmem>>, %arg10: memref<1x1xf32, #tpu.memory_space<vmem>>, %arg11: memref<8x32xf32, #tpu.memory_space<vmem>>, %arg12: memref<64x32xf32, #tpu.memory_space<vmem>>) attributes {dimension_semantics = [], scalar_prefetch = 0 : i64, scratch_operands = 1 : i64, tpu.core_type = #tpu.core_type<tc>} {
    %c0 = arith.constant 0 : index
    %c0_0 = arith.constant 0 : index
    %0 = vector.load %arg1[%c0, %c0_0] : memref<8x1xf32, #tpu.memory_space<vmem>>, vector<8x1xf32>
    %c0_1 = arith.constant 0 : index
    %c0_2 = arith.constant 0 : index
    %1 = vector.load %arg0[%c0_1, %c0_2] : memref<64x32xbf16, #tpu.memory_space<vmem>>, vector<64x32xbf16>
    %c0_3 = arith.constant 0 : index
    %c0_4 = arith.constant 0 : index
    %2 = vector.load %arg2[%c0_3, %c0_4] : memref<32x128xbf16, #tpu.memory_space<vmem>>, vector<32x128xbf16>
    %c0_5 = arith.constant 0 : index
    %c0_6 = arith.constant 0 : index
    %3 = vector.load %arg3[%c0_5, %c0_6] : memref<32x128xbf16, #tpu.memory_space<vmem>>, vector<32x128xbf16>
    %c0_7 = arith.constant 0 : index
    %c0_8 = arith.constant 0 : index
    %4 = vector.load %arg4[%c0_7, %c0_8] : memref<1x128xf32, #tpu.memory_space<vmem>>, vector<1x128xf32>
    %cst = arith.constant dense<0.000000e+00> : vector<64x128xf32>
    %5 = tpu.matmul %1, %2, %cst {dimension_numbers = #tpu.dot_dimension_numbers<[1], [0], [0], [1], [0, 0, 1, 1], [], []>} : vector<64x32xbf16>, vector<32x128xbf16>, vector<64x128xf32> -> vector<64x128xf32>
    %6 = vector.broadcast %4 : vector<1x128xf32> to vector<64x128xf32>
    %7 = arith.addf %5, %6 : vector<64x128xf32>
    %8 = tpu.iota {dimensions = array<i32: 1>} : vector<8x128xi32>
    %c64_i32 = arith.constant 64 : i32
    %9 = vector.broadcast %c64_i32 : i32 to vector<8x128xi32>
    %10 = arith.cmpi sge, %8, %9 : vector<8x128xi32>
    %c96_i32 = arith.constant 96 : i32
    %11 = vector.broadcast %c96_i32 : i32 to vector<8x128xi32>
    %12 = arith.cmpi slt, %8, %11 : vector<8x128xi32>
    %13 = arith.andi %10, %12 : vector<8x128xi1>
    %cst_9 = arith.constant 0.000000e+00 : f32
    %14 = vector.broadcast %cst_9 : f32 to vector<8x32xf32>
    %cst_10 = arith.constant 0.000000e+00 : f32
    %15 = vector.broadcast %cst_10 : f32 to vector<8x32xf32>
    %16 = vector.extract_strided_slice %7 {offsets = [0, 0], sizes = [8, 128], strides = [1, 1]} : vector<64x128xf32> to vector<8x128xf32>
    %17 = arith.truncf %14 : vector<8x32xf32> to vector<8x32xbf16>
    %cst_11 = arith.constant dense<0.000000e+00> : vector<8x128xf32>
    %18 = tpu.matmul %17, %3, %cst_11 {dimension_numbers = #tpu.dot_dimension_numbers<[1], [0], [0], [1], [0, 0, 1, 1], [], []>} : vector<8x32xbf16>, vector<32x128xbf16>, vector<8x128xf32> -> vector<8x128xf32>
    %19 = arith.addf %16, %18 : vector<8x128xf32>
    %20 = math.tanh %19 : vector<8x128xf32>
    %21 = arith.negf %19 : vector<8x128xf32>
    %22 = math.exp %21 : vector<8x128xf32>
    %cst_12 = arith.constant 1.000000e+00 : f32
    %23 = vector.broadcast %cst_12 : f32 to vector<8x128xf32>
    %24 = arith.addf %23, %22 : vector<8x128xf32>
    %25 = arith.divf %23, %24 : vector<8x128xf32>
    %26 = arith.select %13, %20, %25 : vector<8x128xi1>, vector<8x128xf32>
    %27 = vector.extract_strided_slice %26 {offsets = [0, 0], sizes = [8, 32], strides = [1, 1]} : vector<8x128xf32> to vector<8x32xf32>
    %28 = vector.extract_strided_slice %26 {offsets = [0, 32], sizes = [8, 32], strides = [1, 1]} : vector<8x128xf32> to vector<8x32xf32>
    %29 = vector.extract_strided_slice %26 {offsets = [0, 64], sizes = [8, 32], strides = [1, 1]} : vector<8x128xf32> to vector<8x32xf32>
    %30 = vector.extract_strided_slice %26 {offsets = [0, 96], sizes = [8, 32], strides = [1, 1]} : vector<8x128xf32> to vector<8x32xf32>
    %31 = arith.mulf %28, %15 : vector<8x32xf32>
    %32 = arith.mulf %27, %29 : vector<8x32xf32>
    %33 = arith.addf %31, %32 : vector<8x32xf32>
    %34 = math.tanh %33 : vector<8x32xf32>
    %35 = arith.mulf %30, %34 : vector<8x32xf32>
    %cst_13 = arith.constant 0.000000e+00 : f32
    %36 = vector.broadcast %cst_13 : f32 to vector<8x1xf32>
    %37 = arith.cmpf ogt, %0, %36 : vector<8x1xf32>
    %38 = arith.extui %37 : vector<8x1xi1> to vector<8x1xi32>
    %39 = arith.sitofp %38 : vector<8x1xi32> to vector<8x1xf32>
    %40 = vector.broadcast %39 : vector<8x1xf32> to vector<8x32xf32>
    %41 = arith.mulf %40, %33 : vector<8x32xf32>
    %cst_14 = arith.constant 1.000000e+00 : f32
    %42 = vector.broadcast %cst_14 : f32 to vector<8x1xf32>
    %43 = arith.subf %42, %39 : vector<8x1xf32>
    %44 = vector.broadcast %43 : vector<8x1xf32> to vector<8x32xf32>
    %45 = arith.mulf %44, %15 : vector<8x32xf32>
    %46 = arith.addf %41, %45 : vector<8x32xf32>
    %47 = vector.broadcast %39 : vector<8x1xf32> to vector<8x32xf32>
    %48 = arith.mulf %47, %35 : vector<8x32xf32>
    %cst_15 = arith.constant 1.000000e+00 : f32
    %49 = vector.broadcast %cst_15 : f32 to vector<8x1xf32>
    %50 = arith.subf %49, %39 : vector<8x1xf32>
    %51 = vector.broadcast %50 : vector<8x1xf32> to vector<8x32xf32>
    %52 = arith.mulf %51, %14 : vector<8x32xf32>
    %53 = arith.addf %48, %52 : vector<8x32xf32>
    %54 = vector.broadcast %39 : vector<8x1xf32> to vector<8x32xf32>
    %55 = arith.mulf %53, %54 : vector<8x32xf32>
    %c0_16 = arith.constant 0 : index
    %c0_17 = arith.constant 0 : index
    %56 = vector.load %arg12[%c0_16, %c0_17] : memref<64x32xf32, #tpu.memory_space<vmem>>, vector<8x32xf32>
    tpu.vector_store %arg12[%c0_16, %c0_17], %55 {strides = array<i32>} : memref<64x32xf32, #tpu.memory_space<vmem>>, vector<8x32xf32>,
    %57 = vector.extract_strided_slice %7 {offsets = [8, 0], sizes = [8, 128], strides = [1, 1]} : vector<64x128xf32> to vector<8x128xf32>
    %58 = arith.truncf %53 : vector<8x32xf32> to vector<8x32xbf16>
    %cst_18 = arith.constant dense<0.000000e+00> : vector<8x128xf32>
    %59 = tpu.matmul %58, %3, %cst_18 {dimension_numbers = #tpu.dot_dimension_numbers<[1], [0], [0], [1], [0, 0, 1, 1], [], []>} : vector<8x32xbf16>, vector<32x128xbf16>, vector<8x128xf32> -> vector<8x128xf32>
    %60 = arith.addf %57, %59 : vector<8x128xf32>
    %61 = math.tanh %60 : vector<8x128xf32>
    %62 = arith.negf %60 : vector<8x128xf32>
    %63 = math.exp %62 : vector<8x128xf32>
    %cst_19 = arith.constant 1.000000e+00 : f32
    %64 = vector.broadcast %cst_19 : f32 to vector<8x128xf32>
    %65 = arith.addf %64, %63 : vector<8x128xf32>
    %66 = arith.divf %64, %65 : vector<8x128xf32>
    %67 = arith.select %13, %61, %66 : vector<8x128xi1>, vector<8x128xf32>
    %68 = vector.extract_strided_slice %67 {offsets = [0, 0], sizes = [8, 32], strides = [1, 1]} : vector<8x128xf32> to vector<8x32xf32>
    %69 = vector.extract_strided_slice %67 {offsets = [0, 32], sizes = [8, 32], strides = [1, 1]} : vector<8x128xf32> to vector<8x32xf32>
    %70 = vector.extract_strided_slice %67 {offsets = [0, 64], sizes = [8, 32], strides = [1, 1]} : vector<8x128xf32> to vector<8x32xf32>
    %71 = vector.extract_strided_slice %67 {offsets = [0, 96], sizes = [8, 32], strides = [1, 1]} : vector<8x128xf32> to vector<8x32xf32>
    %72 = arith.mulf %69, %46 : vector<8x32xf32>
    %73 = arith.mulf %68, %70 : vector<8x32xf32>
    %74 = arith.addf %72, %73 : vector<8x32xf32>
    %75 = math.tanh %74 : vector<8x32xf32>
    %76 = arith.mulf %71, %75 : vector<8x32xf32>
    %cst_20 = arith.constant 1.000000e+00 : f32
    %77 = vector.broadcast %cst_20 : f32 to vector<8x1xf32>
    %78 = arith.cmpf ogt, %0, %77 : vector<8x1xf32>
    %79 = arith.extui %78 : vector<8x1xi1> to vector<8x1xi32>
    %80 = arith.sitofp %79 : vector<8x1xi32> to vector<8x1xf32>
    %81 = vector.broadcast %80 : vector<8x1xf32> to vector<8x32xf32>
    %82 = arith.mulf %81, %74 : vector<8x32xf32>
    %cst_21 = arith.constant 1.000000e+00 : f32
    %83 = vector.broadcast %cst_21 : f32 to vector<8x1xf32>
    %84 = arith.subf %83, %80 : vector<8x1xf32>
    %85 = vector.broadcast %84 : vector<8x1xf32> to vector<8x32xf32>
    %86 = arith.mulf %85, %46 : vector<8x32xf32>
    %87 = arith.addf %82, %86 : vector<8x32xf32>
    %88 = vector.broadcast %80 : vector<8x1xf32> to vector<8x32xf32>
    %89 = arith.mulf %88, %76 : vector<8x32xf32>
    %cst_22 = arith.constant 1.000000e+00 : f32
    %90 = vector.broadcast %cst_22 : f32 to vector<8x1xf32>
    %91 = arith.subf %90, %80 : vector<8x1xf32>
    %92 = vector.broadcast %91 : vector<8x1xf32> to vector<8x32xf32>
    %93 = arith.mulf %92, %53 : vector<8x32xf32>
    %94 = arith.addf %89, %93 : vector<8x32xf32>
    %95 = vector.broadcast %80 : vector<8x1xf32> to vector<8x32xf32>
    %96 = arith.mulf %94, %95 : vector<8x32xf32>
    %c8 = arith.constant 8 : index
    %c0_23 = arith.constant 0 : index
    %97 = vector.load %arg12[%c8, %c0_23] : memref<64x32xf32, #tpu.memory_space<vmem>>, vector<8x32xf32>
    tpu.vector_store %arg12[%c8, %c0_23], %96 {strides = array<i32>} : memref<64x32xf32, #tpu.memory_space<vmem>>, vector<8x32xf32>,
    %98 = vector.extract_strided_slice %7 {offsets = [16, 0], sizes = [8, 128], strides = [1, 1]} : vector<64x128xf32> to vector<8x128xf32>
    %99 = arith.truncf %94 : vector<8x32xf32> to vector<8x32xbf16>
    %cst_24 = arith.constant dense<0.000000e+00> : vector<8x128xf32>
    %100 = tpu.matmul %99, %3, %cst_24 {dimension_numbers = #tpu.dot_dimension_numbers<[1], [0], [0], [1], [0, 0, 1, 1], [], []>} : vector<8x32xbf16>, vector<32x128xbf16>, vector<8x128xf32> -> vector<8x128xf32>
    %101 = arith.addf %98, %100 : vector<8x128xf32>
    %102 = math.tanh %101 : vector<8x128xf32>
    %103 = arith.negf %101 : vector<8x128xf32>
    %104 = math.exp %103 : vector<8x128xf32>
    %cst_25 = arith.constant 1.000000e+00 : f32
    %105 = vector.broadcast %cst_25 : f32 to vector<8x128xf32>
    %106 = arith.addf %105, %104 : vector<8x128xf32>
    %107 = arith.divf %105, %106 : vector<8x128xf32>
    %108 = arith.select %13, %102, %107 : vector<8x128xi1>, vector<8x128xf32>
    %109 = vector.extract_strided_slice %108 {offsets = [0, 0], sizes = [8, 32], strides = [1, 1]} : vector<8x128xf32> to vector<8x32xf32>
    %110 = vector.extract_strided_slice %108 {offsets = [0, 32], sizes = [8, 32], strides = [1, 1]} : vector<8x128xf32> to vector<8x32xf32>
    %111 = vector.extract_strided_slice %108 {offsets = [0, 64], sizes = [8, 32], strides = [1, 1]} : vector<8x128xf32> to vector<8x32xf32>
    %112 = vector.extract_strided_slice %108 {offsets = [0, 96], sizes = [8, 32], strides = [1, 1]} : vector<8x128xf32> to vector<8x32xf32>
    %113 = arith.mulf %110, %87 : vector<8x32xf32>
    %114 = arith.mulf %109, %111 : vector<8x32xf32>
    %115 = arith.addf %113, %114 : vector<8x32xf32>
    %116 = math.tanh %115 : vector<8x32xf32>
    %117 = arith.mulf %112, %116 : vector<8x32xf32>
    %cst_26 = arith.constant 2.000000e+00 : f32
    %118 = vector.broadcast %cst_26 : f32 to vector<8x1xf32>
    %119 = arith.cmpf ogt, %0, %118 : vector<8x1xf32>
    %120 = arith.extui %119 : vector<8x1xi1> to vector<8x1xi32>
    %121 = arith.sitofp %120 : vector<8x1xi32> to vector<8x1xf32>
    %122 = vector.broadcast %121 : vector<8x1xf32> to vector<8x32xf32>
    %123 = arith.mulf %122, %115 : vector<8x32xf32>
    %cst_27 = arith.constant 1.000000e+00 : f32
    %124 = vector.broadcast %cst_27 : f32 to vector<8x1xf32>
    %125 = arith.subf %124, %121 : vector<8x1xf32>
    %126 = vector.broadcast %125 : vector<8x1xf32> to vector<8x32xf32>
    %127 = arith.mulf %126, %87 : vector<8x32xf32>
    %128 = arith.addf %123, %127 : vector<8x32xf32>
    %129 = vector.broadcast %121 : vector<8x1xf32> to vector<8x32xf32>
    %130 = arith.mulf %129, %117 : vector<8x32xf32>
    %cst_28 = arith.constant 1.000000e+00 : f32
    %131 = vector.broadcast %cst_28 : f32 to vector<8x1xf32>
    %132 = arith.subf %131, %121 : vector<8x1xf32>
    %133 = vector.broadcast %132 : vector<8x1xf32> to vector<8x32xf32>
    %134 = arith.mulf %133, %94 : vector<8x32xf32>
    %135 = arith.addf %130, %134 : vector<8x32xf32>
    %136 = vector.broadcast %121 : vector<8x1xf32> to vector<8x32xf32>
    %137 = arith.mulf %135, %136 : vector<8x32xf32>
    %c16 = arith.constant 16 : index
    %c0_29 = arith.constant 0 : index
    %138 = vector.load %arg12[%c16, %c0_29] : memref<64x32xf32, #tpu.memory_space<vmem>>, vector<8x32xf32>
    tpu.vector_store %arg12[%c16, %c0_29], %137 {strides = array<i32>} : memref<64x32xf32, #tpu.memory_space<vmem>>, vector<8x32xf32>,
    %139 = vector.extract_strided_slice %7 {offsets = [24, 0], sizes = [8, 128], strides = [1, 1]} : vector<64x128xf32> to vector<8x128xf32>
    %140 = arith.truncf %135 : vector<8x32xf32> to vector<8x32xbf16>
    %cst_30 = arith.constant dense<0.000000e+00> : vector<8x128xf32>
    %141 = tpu.matmul %140, %3, %cst_30 {dimension_numbers = #tpu.dot_dimension_numbers<[1], [0], [0], [1], [0, 0, 1, 1], [], []>} : vector<8x32xbf16>, vector<32x128xbf16>, vector<8x128xf32> -> vector<8x128xf32>
    %142 = arith.addf %139, %141 : vector<8x128xf32>
    %143 = math.tanh %142 : vector<8x128xf32>
    %144 = arith.negf %142 : vector<8x128xf32>
    %145 = math.exp %144 : vector<8x128xf32>
    %cst_31 = arith.constant 1.000000e+00 : f32
    %146 = vector.broadcast %cst_31 : f32 to vector<8x128xf32>
    %147 = arith.addf %146, %145 : vector<8x128xf32>
    %148 = arith.divf %146, %147 : vector<8x128xf32>
    %149 = arith.select %13, %143, %148 : vector<8x128xi1>, vector<8x128xf32>
    %150 = vector.extract_strided_slice %149 {offsets = [0, 0], sizes = [8, 32], strides = [1, 1]} : vector<8x128xf32> to vector<8x32xf32>
    %151 = vector.extract_strided_slice %149 {offsets = [0, 32], sizes = [8, 32], strides = [1, 1]} : vector<8x128xf32> to vector<8x32xf32>
    %152 = vector.extract_strided_slice %149 {offsets = [0, 64], sizes = [8, 32], strides = [1, 1]} : vector<8x128xf32> to vector<8x32xf32>
    %153 = vector.extract_strided_slice %149 {offsets = [0, 96], sizes = [8, 32], strides = [1, 1]} : vector<8x128xf32> to vector<8x32xf32>
    %154 = arith.mulf %151, %128 : vector<8x32xf32>
    %155 = arith.mulf %150, %152 : vector<8x32xf32>
    %156 = arith.addf %154, %155 : vector<8x32xf32>
    %157 = math.tanh %156 : vector<8x32xf32>
    %158 = arith.mulf %153, %157 : vector<8x32xf32>
    %cst_32 = arith.constant 3.000000e+00 : f32
    %159 = vector.broadcast %cst_32 : f32 to vector<8x1xf32>
    %160 = arith.cmpf ogt, %0, %159 : vector<8x1xf32>
    %161 = arith.extui %160 : vector<8x1xi1> to vector<8x1xi32>
    %162 = arith.sitofp %161 : vector<8x1xi32> to vector<8x1xf32>
    %163 = vector.broadcast %162 : vector<8x1xf32> to vector<8x32xf32>
    %164 = arith.mulf %163, %156 : vector<8x32xf32>
    %cst_33 = arith.constant 1.000000e+00 : f32
    %165 = vector.broadcast %cst_33 : f32 to vector<8x1xf32>
    %166 = arith.subf %165, %162 : vector<8x1xf32>
    %167 = vector.broadcast %166 : vector<8x1xf32> to vector<8x32xf32>
    %168 = arith.mulf %167, %128 : vector<8x32xf32>
    %169 = arith.addf %164, %168 : vector<8x32xf32>
    %170 = vector.broadcast %162 : vector<8x1xf32> to vector<8x32xf32>
    %171 = arith.mulf %170, %158 : vector<8x32xf32>
    %cst_34 = arith.constant 1.000000e+00 : f32
    %172 = vector.broadcast %cst_34 : f32 to vector<8x1xf32>
    %173 = arith.subf %172, %162 : vector<8x1xf32>
    %174 = vector.broadcast %173 : vector<8x1xf32> to vector<8x32xf32>
    %175 = arith.mulf %174, %135 : vector<8x32xf32>
    %176 = arith.addf %171, %175 : vector<8x32xf32>
    %177 = vector.broadcast %162 : vector<8x1xf32> to vector<8x32xf32>
    %178 = arith.mulf %176, %177 : vector<8x32xf32>
    %c24 = arith.constant 24 : index
    %c0_35 = arith.constant 0 : index
    %179 = vector.load %arg12[%c24, %c0_35] : memref<64x32xf32, #tpu.memory_space<vmem>>, vector<8x32xf32>
    tpu.vector_store %arg12[%c24, %c0_35], %178 {strides = array<i32>} : memref<64x32xf32, #tpu.memory_space<vmem>>, vector<8x32xf32>,
    %180 = vector.extract_strided_slice %7 {offsets = [32, 0], sizes = [8, 128], strides = [1, 1]} : vector<64x128xf32> to vector<8x128xf32>
    %181 = arith.truncf %176 : vector<8x32xf32> to vector<8x32xbf16>
    %cst_36 = arith.constant dense<0.000000e+00> : vector<8x128xf32>
    %182 = tpu.matmul %181, %3, %cst_36 {dimension_numbers = #tpu.dot_dimension_numbers<[1], [0], [0], [1], [0, 0, 1, 1], [], []>} : vector<8x32xbf16>, vector<32x128xbf16>, vector<8x128xf32> -> vector<8x128xf32>
    %183 = arith.addf %180, %182 : vector<8x128xf32>
    %184 = math.tanh %183 : vector<8x128xf32>
    %185 = arith.negf %183 : vector<8x128xf32>
    %186 = math.exp %185 : vector<8x128xf32>
    %cst_37 = arith.constant 1.000000e+00 : f32
    %187 = vector.broadcast %cst_37 : f32 to vector<8x128xf32>
    %188 = arith.addf %187, %186 : vector<8x128xf32>
    %189 = arith.divf %187, %188 : vector<8x128xf32>
    %190 = arith.select %13, %184, %189 : vector<8x128xi1>, vector<8x128xf32>
    %191 = vector.extract_strided_slice %190 {offsets = [0, 0], sizes = [8, 32], strides = [1, 1]} : vector<8x128xf32> to vector<8x32xf32>
    %192 = vector.extract_strided_slice %190 {offsets = [0, 32], sizes = [8, 32], strides = [1, 1]} : vector<8x128xf32> to vector<8x32xf32>
    %193 = vector.extract_strided_slice %190 {offsets = [0, 64], sizes = [8, 32], strides = [1, 1]} : vector<8x128xf32> to vector<8x32xf32>
    %194 = vector.extract_strided_slice %190 {offsets = [0, 96], sizes = [8, 32], strides = [1, 1]} : vector<8x128xf32> to vector<8x32xf32>
    %195 = arith.mulf %192, %169 : vector<8x32xf32>
    %196 = arith.mulf %191, %193 : vector<8x32xf32>
    %197 = arith.addf %195, %196 : vector<8x32xf32>
    %198 = math.tanh %197 : vector<8x32xf32>
    %199 = arith.mulf %194, %198 : vector<8x32xf32>
    %cst_38 = arith.constant 4.000000e+00 : f32
    %200 = vector.broadcast %cst_38 : f32 to vector<8x1xf32>
    %201 = arith.cmpf ogt, %0, %200 : vector<8x1xf32>
    %202 = arith.extui %201 : vector<8x1xi1> to vector<8x1xi32>
    %203 = arith.sitofp %202 : vector<8x1xi32> to vector<8x1xf32>
    %204 = vector.broadcast %203 : vector<8x1xf32> to vector<8x32xf32>
    %205 = arith.mulf %204, %197 : vector<8x32xf32>
    %cst_39 = arith.constant 1.000000e+00 : f32
    %206 = vector.broadcast %cst_39 : f32 to vector<8x1xf32>
    %207 = arith.subf %206, %203 : vector<8x1xf32>
    %208 = vector.broadcast %207 : vector<8x1xf32> to vector<8x32xf32>
    %209 = arith.mulf %208, %169 : vector<8x32xf32>
    %210 = arith.addf %205, %209 : vector<8x32xf32>
    %211 = vector.broadcast %203 : vector<8x1xf32> to vector<8x32xf32>
    %212 = arith.mulf %211, %199 : vector<8x32xf32>
    %cst_40 = arith.constant 1.000000e+00 : f32
    %213 = vector.broadcast %cst_40 : f32 to vector<8x1xf32>
    %214 = arith.subf %213, %203 : vector<8x1xf32>
    %215 = vector.broadcast %214 : vector<8x1xf32> to vector<8x32xf32>
    %216 = arith.mulf %215, %176 : vector<8x32xf32>
    %217 = arith.addf %212, %216 : vector<8x32xf32>
    %218 = vector.broadcast %203 : vector<8x1xf32> to vector<8x32xf32>
    %219 = arith.mulf %217, %218 : vector<8x32xf32>
    %c32 = arith.constant 32 : index
    %c0_41 = arith.constant 0 : index
    %220 = vector.load %arg12[%c32, %c0_41] : memref<64x32xf32, #tpu.memory_space<vmem>>, vector<8x32xf32>
    tpu.vector_store %arg12[%c32, %c0_41], %219 {strides = array<i32>} : memref<64x32xf32, #tpu.memory_space<vmem>>, vector<8x32xf32>,
    %221 = vector.extract_strided_slice %7 {offsets = [40, 0], sizes = [8, 128], strides = [1, 1]} : vector<64x128xf32> to vector<8x128xf32>
    %222 = arith.truncf %217 : vector<8x32xf32> to vector<8x32xbf16>
    %cst_42 = arith.constant dense<0.000000e+00> : vector<8x128xf32>
    %223 = tpu.matmul %222, %3, %cst_42 {dimension_numbers = #tpu.dot_dimension_numbers<[1], [0], [0], [1], [0, 0, 1, 1], [], []>} : vector<8x32xbf16>, vector<32x128xbf16>, vector<8x128xf32> -> vector<8x128xf32>
    %224 = arith.addf %221, %223 : vector<8x128xf32>
    %225 = math.tanh %224 : vector<8x128xf32>
    %226 = arith.negf %224 : vector<8x128xf32>
    %227 = math.exp %226 : vector<8x128xf32>
    %cst_43 = arith.constant 1.000000e+00 : f32
    %228 = vector.broadcast %cst_43 : f32 to vector<8x128xf32>
    %229 = arith.addf %228, %227 : vector<8x128xf32>
    %230 = arith.divf %228, %229 : vector<8x128xf32>
    %231 = arith.select %13, %225, %230 : vector<8x128xi1>, vector<8x128xf32>
    %232 = vector.extract_strided_slice %231 {offsets = [0, 0], sizes = [8, 32], strides = [1, 1]} : vector<8x128xf32> to vector<8x32xf32>
    %233 = vector.extract_strided_slice %231 {offsets = [0, 32], sizes = [8, 32], strides = [1, 1]} : vector<8x128xf32> to vector<8x32xf32>
    %234 = vector.extract_strided_slice %231 {offsets = [0, 64], sizes = [8, 32], strides = [1, 1]} : vector<8x128xf32> to vector<8x32xf32>
    %235 = vector.extract_strided_slice %231 {offsets = [0, 96], sizes = [8, 32], strides = [1, 1]} : vector<8x128xf32> to vector<8x32xf32>
    %236 = arith.mulf %233, %210 : vector<8x32xf32>
    %237 = arith.mulf %232, %234 : vector<8x32xf32>
    %238 = arith.addf %236, %237 : vector<8x32xf32>
    %239 = math.tanh %238 : vector<8x32xf32>
    %240 = arith.mulf %235, %239 : vector<8x32xf32>
    %cst_44 = arith.constant 5.000000e+00 : f32
    %241 = vector.broadcast %cst_44 : f32 to vector<8x1xf32>
    %242 = arith.cmpf ogt, %0, %241 : vector<8x1xf32>
    %243 = arith.extui %242 : vector<8x1xi1> to vector<8x1xi32>
    %244 = arith.sitofp %243 : vector<8x1xi32> to vector<8x1xf32>
    %245 = vector.broadcast %244 : vector<8x1xf32> to vector<8x32xf32>
    %246 = arith.mulf %245, %238 : vector<8x32xf32>
    %cst_45 = arith.constant 1.000000e+00 : f32
    %247 = vector.broadcast %cst_45 : f32 to vector<8x1xf32>
    %248 = arith.subf %247, %244 : vector<8x1xf32>
    %249 = vector.broadcast %248 : vector<8x1xf32> to vector<8x32xf32>
    %250 = arith.mulf %249, %210 : vector<8x32xf32>
    %251 = arith.addf %246, %250 : vector<8x32xf32>
    %252 = vector.broadcast %244 : vector<8x1xf32> to vector<8x32xf32>
    %253 = arith.mulf %252, %240 : vector<8x32xf32>
    %cst_46 = arith.constant 1.000000e+00 : f32
    %254 = vector.broadcast %cst_46 : f32 to vector<8x1xf32>
    %255 = arith.subf %254, %244 : vector<8x1xf32>
    %256 = vector.broadcast %255 : vector<8x1xf32> to vector<8x32xf32>
    %257 = arith.mulf %256, %217 : vector<8x32xf32>
    %258 = arith.addf %253, %257 : vector<8x32xf32>
    %259 = vector.broadcast %244 : vector<8x1xf32> to vector<8x32xf32>
    %260 = arith.mulf %258, %259 : vector<8x32xf32>
    %c40 = arith.constant 40 : index
    %c0_47 = arith.constant 0 : index
    %261 = vector.load %arg12[%c40, %c0_47] : memref<64x32xf32, #tpu.memory_space<vmem>>, vector<8x32xf32>
    tpu.vector_store %arg12[%c40, %c0_47], %260 {strides = array<i32>} : memref<64x32xf32, #tpu.memory_space<vmem>>, vector<8x32xf32>,
    %262 = vector.extract_strided_slice %7 {offsets = [48, 0], sizes = [8, 128], strides = [1, 1]} : vector<64x128xf32> to vector<8x128xf32>
    %263 = arith.truncf %258 : vector<8x32xf32> to vector<8x32xbf16>
    %cst_48 = arith.constant dense<0.000000e+00> : vector<8x128xf32>
    %264 = tpu.matmul %263, %3, %cst_48 {dimension_numbers = #tpu.dot_dimension_numbers<[1], [0], [0], [1], [0, 0, 1, 1], [], []>} : vector<8x32xbf16>, vector<32x128xbf16>, vector<8x128xf32> -> vector<8x128xf32>
    %265 = arith.addf %262, %264 : vector<8x128xf32>
    %266 = math.tanh %265 : vector<8x128xf32>
    %267 = arith.negf %265 : vector<8x128xf32>
    %268 = math.exp %267 : vector<8x128xf32>
    %cst_49 = arith.constant 1.000000e+00 : f32
    %269 = vector.broadcast %cst_49 : f32 to vector<8x128xf32>
    %270 = arith.addf %269, %268 : vector<8x128xf32>
    %271 = arith.divf %269, %270 : vector<8x128xf32>
    %272 = arith.select %13, %266, %271 : vector<8x128xi1>, vector<8x128xf32>
    %273 = vector.extract_strided_slice %272 {offsets = [0, 0], sizes = [8, 32], strides = [1, 1]} : vector<8x128xf32> to vector<8x32xf32>
    %274 = vector.extract_strided_slice %272 {offsets = [0, 32], sizes = [8, 32], strides = [1, 1]} : vector<8x128xf32> to vector<8x32xf32>
    %275 = vector.extract_strided_slice %272 {offsets = [0, 64], sizes = [8, 32], strides = [1, 1]} : vector<8x128xf32> to vector<8x32xf32>
    %276 = vector.extract_strided_slice %272 {offsets = [0, 96], sizes = [8, 32], strides = [1, 1]} : vector<8x128xf32> to vector<8x32xf32>
    %277 = arith.mulf %274, %251 : vector<8x32xf32>
    %278 = arith.mulf %273, %275 : vector<8x32xf32>
    %279 = arith.addf %277, %278 : vector<8x32xf32>
    %280 = math.tanh %279 : vector<8x32xf32>
    %281 = arith.mulf %276, %280 : vector<8x32xf32>
    %cst_50 = arith.constant 6.000000e+00 : f32
    %282 = vector.broadcast %cst_50 : f32 to vector<8x1xf32>
    %283 = arith.cmpf ogt, %0, %282 : vector<8x1xf32>
    %284 = arith.extui %283 : vector<8x1xi1> to vector<8x1xi32>
    %285 = arith.sitofp %284 : vector<8x1xi32> to vector<8x1xf32>
    %286 = vector.broadcast %285 : vector<8x1xf32> to vector<8x32xf32>
    %287 = arith.mulf %286, %279 : vector<8x32xf32>
    %cst_51 = arith.constant 1.000000e+00 : f32
    %288 = vector.broadcast %cst_51 : f32 to vector<8x1xf32>
    %289 = arith.subf %288, %285 : vector<8x1xf32>
    %290 = vector.broadcast %289 : vector<8x1xf32> to vector<8x32xf32>
    %291 = arith.mulf %290, %251 : vector<8x32xf32>
    %292 = arith.addf %287, %291 : vector<8x32xf32>
    %293 = vector.broadcast %285 : vector<8x1xf32> to vector<8x32xf32>
    %294 = arith.mulf %293, %281 : vector<8x32xf32>
    %cst_52 = arith.constant 1.000000e+00 : f32
    %295 = vector.broadcast %cst_52 : f32 to vector<8x1xf32>
    %296 = arith.subf %295, %285 : vector<8x1xf32>
    %297 = vector.broadcast %296 : vector<8x1xf32> to vector<8x32xf32>
    %298 = arith.mulf %297, %258 : vector<8x32xf32>
    %299 = arith.addf %294, %298 : vector<8x32xf32>
    %300 = vector.broadcast %285 : vector<8x1xf32> to vector<8x32xf32>
    %301 = arith.mulf %299, %300 : vector<8x32xf32>
    %c48 = arith.constant 48 : index
    %c0_53 = arith.constant 0 : index
    %302 = vector.load %arg12[%c48, %c0_53] : memref<64x32xf32, #tpu.memory_space<vmem>>, vector<8x32xf32>
    tpu.vector_store %arg12[%c48, %c0_53], %301 {strides = array<i32>} : memref<64x32xf32, #tpu.memory_space<vmem>>, vector<8x32xf32>,
    %303 = vector.extract_strided_slice %7 {offsets = [56, 0], sizes = [8, 128], strides = [1, 1]} : vector<64x128xf32> to vector<8x128xf32>
    %304 = arith.truncf %299 : vector<8x32xf32> to vector<8x32xbf16>
    %cst_54 = arith.constant dense<0.000000e+00> : vector<8x128xf32>
    %305 = tpu.matmul %304, %3, %cst_54 {dimension_numbers = #tpu.dot_dimension_numbers<[1], [0], [0], [1], [0, 0, 1, 1], [], []>} : vector<8x32xbf16>, vector<32x128xbf16>, vector<8x128xf32> -> vector<8x128xf32>
    %306 = arith.addf %303, %305 : vector<8x128xf32>
    %307 = math.tanh %306 : vector<8x128xf32>
    %308 = arith.negf %306 : vector<8x128xf32>
    %309 = math.exp %308 : vector<8x128xf32>
    %cst_55 = arith.constant 1.000000e+00 : f32
    %310 = vector.broadcast %cst_55 : f32 to vector<8x128xf32>
    %311 = arith.addf %310, %309 : vector<8x128xf32>
    %312 = arith.divf %310, %311 : vector<8x128xf32>
    %313 = arith.select %13, %307, %312 : vector<8x128xi1>, vector<8x128xf32>
    %314 = vector.extract_strided_slice %313 {offsets = [0, 0], sizes = [8, 32], strides = [1, 1]} : vector<8x128xf32> to vector<8x32xf32>
    %315 = vector.extract_strided_slice %313 {offsets = [0, 32], sizes = [8, 32], strides = [1, 1]} : vector<8x128xf32> to vector<8x32xf32>
    %316 = vector.extract_strided_slice %313 {offsets = [0, 64], sizes = [8, 32], strides = [1, 1]} : vector<8x128xf32> to vector<8x32xf32>
    %317 = vector.extract_strided_slice %313 {offsets = [0, 96], sizes = [8, 32], strides = [1, 1]} : vector<8x128xf32> to vector<8x32xf32>
    %318 = arith.mulf %315, %292 : vector<8x32xf32>
    %319 = arith.mulf %314, %316 : vector<8x32xf32>
    %320 = arith.addf %318, %319 : vector<8x32xf32>
    %321 = math.tanh %320 : vector<8x32xf32>
    %322 = arith.mulf %317, %321 : vector<8x32xf32>
    %cst_56 = arith.constant 7.000000e+00 : f32
    %323 = vector.broadcast %cst_56 : f32 to vector<8x1xf32>
    %324 = arith.cmpf ogt, %0, %323 : vector<8x1xf32>
    %325 = arith.extui %324 : vector<8x1xi1> to vector<8x1xi32>
    %326 = arith.sitofp %325 : vector<8x1xi32> to vector<8x1xf32>
    %327 = vector.broadcast %326 : vector<8x1xf32> to vector<8x32xf32>
    %328 = arith.mulf %327, %322 : vector<8x32xf32>
    %cst_57 = arith.constant 1.000000e+00 : f32
    %329 = vector.broadcast %cst_57 : f32 to vector<8x1xf32>
    %330 = arith.subf %329, %326 : vector<8x1xf32>
    %331 = vector.broadcast %330 : vector<8x1xf32> to vector<8x32xf32>
    %332 = arith.mulf %331, %299 : vector<8x32xf32>
    %333 = arith.addf %328, %332 : vector<8x32xf32>
    %334 = vector.broadcast %326 : vector<8x1xf32> to vector<8x32xf32>
    %335 = arith.mulf %333, %334 : vector<8x32xf32>
    %c56 = arith.constant 56 : index
    %c0_58 = arith.constant 0 : index
    %336 = vector.load %arg12[%c56, %c0_58] : memref<64x32xf32, #tpu.memory_space<vmem>>, vector<8x32xf32>
    tpu.vector_store %arg12[%c56, %c0_58], %335 {strides = array<i32>} : memref<64x32xf32, #tpu.memory_space<vmem>>, vector<8x32xf32>,
    %c0_59 = arith.constant 0 : index
    %c0_60 = arith.constant 0 : index
    %337 = vector.load %arg12[%c0_59, %c0_60] : memref<64x32xf32, #tpu.memory_space<vmem>>, vector<64x32xf32>
    %338 = arith.truncf %337 : vector<64x32xf32> to vector<64x32xbf16>
    %c0_61 = arith.constant 0 : index
    %c0_62 = arith.constant 0 : index
    %339 = vector.load %arg5[%c0_61, %c0_62] : memref<32x32xbf16, #tpu.memory_space<vmem>>, vector<32x32xbf16>
    %cst_63 = arith.constant dense<0.000000e+00> : vector<64x32xf32>
    %340 = tpu.matmul %338, %339, %cst_63 {dimension_numbers = #tpu.dot_dimension_numbers<[1], [0], [0], [1], [0, 0, 1, 1], [], []>} : vector<64x32xbf16>, vector<32x32xbf16>, vector<64x32xf32> -> vector<64x32xf32>
    %c0_64 = arith.constant 0 : index
    %c0_65 = arith.constant 0 : index
    %341 = vector.load %arg6[%c0_64, %c0_65] : memref<1x32xf32, #tpu.memory_space<vmem>>, vector<1x32xf32>
    %342 = vector.broadcast %341 : vector<1x32xf32> to vector<64x32xf32>
    %343 = arith.addf %340, %342 : vector<64x32xf32>
    %344 = vector.shape_cast %343 : vector<64x32xf32> to vector<8x8x32xf32>
    %cst_66 = arith.constant dense<0.000000e+00> : vector<8x8xf32>
    %345 = vector.multi_reduction <add>, %344, %cst_66 [2] : vector<8x8x32xf32> to vector<8x8xf32>
    %346 = vector.shape_cast %345 : vector<8x8xf32> to vector<8x8x1xf32>
    %cst_67 = arith.constant 3.200000e+01 : f32
    %347 = vector.broadcast %cst_67 : f32 to vector<8x8x1xf32>
    %348 = arith.divf %346, %347 : vector<8x8x1xf32>
    %349 = vector.broadcast %348 : vector<8x8x1xf32> to vector<8x8x32xf32>
    %350 = arith.subf %344, %349 : vector<8x8x32xf32>
    %351 = arith.mulf %350, %350 : vector<8x8x32xf32>
    %cst_68 = arith.constant dense<0.000000e+00> : vector<8x8xf32>
    %352 = vector.multi_reduction <add>, %351, %cst_68 [2] : vector<8x8x32xf32> to vector<8x8xf32>
    %353 = vector.shape_cast %352 : vector<8x8xf32> to vector<8x8x1xf32>
    %cst_69 = arith.constant 3.200000e+01 : f32
    %354 = vector.broadcast %cst_69 : f32 to vector<8x8x1xf32>
    %355 = arith.divf %353, %354 : vector<8x8x1xf32>
    %356 = vector.broadcast %348 : vector<8x8x1xf32> to vector<8x8x32xf32>
    %357 = arith.subf %344, %356 : vector<8x8x32xf32>
    %cst_70 = arith.constant 9.99999974E-6 : f32
    %358 = vector.broadcast %cst_70 : f32 to vector<8x8x1xf32>
    %359 = arith.addf %355, %358 : vector<8x8x1xf32>
    %360 = math.rsqrt %359 : vector<8x8x1xf32>
    %361 = vector.broadcast %360 : vector<8x8x1xf32> to vector<8x8x32xf32>
    %362 = arith.mulf %357, %361 : vector<8x8x32xf32>
    %c0_71 = arith.constant 0 : index
    %c0_72 = arith.constant 0 : index
    %363 = vector.load %arg7[%c0_71, %c0_72] : memref<1x32xf32, #tpu.memory_space<vmem>>, vector<1x32xf32>
    %364 = vector.shape_cast %363 : vector<1x32xf32> to vector<1x1x32xf32>
    %365 = vector.broadcast %364 : vector<1x1x32xf32> to vector<8x8x32xf32>
    %366 = arith.mulf %362, %365 : vector<8x8x32xf32>
    %c0_73 = arith.constant 0 : index
    %c0_74 = arith.constant 0 : index
    %367 = vector.load %arg8[%c0_73, %c0_74] : memref<1x32xf32, #tpu.memory_space<vmem>>, vector<1x32xf32>
    %368 = vector.shape_cast %367 : vector<1x32xf32> to vector<1x1x32xf32>
    %369 = vector.broadcast %368 : vector<1x1x32xf32> to vector<8x8x32xf32>
    %370 = arith.addf %366, %369 : vector<8x8x32xf32>
    %371 = math.tanh %370 : vector<8x8x32xf32>
    %c0_75 = arith.constant 0 : index
    %c0_76 = arith.constant 0 : index
    %372 = vector.load %arg9[%c0_75, %c0_76] : memref<1x32xf32, #tpu.memory_space<vmem>>, vector<1x32xf32>
    %373 = vector.shape_cast %372 : vector<1x32xf32> to vector<1x1x32xf32>
    %374 = vector.broadcast %373 : vector<1x1x32xf32> to vector<8x8x32xf32>
    %375 = arith.mulf %371, %374 : vector<8x8x32xf32>
    %cst_77 = arith.constant dense<0.000000e+00> : vector<8x8xf32>
    %376 = vector.multi_reduction <add>, %375, %cst_77 [2] : vector<8x8x32xf32> to vector<8x8xf32>
    %377 = vector.shape_cast %376 : vector<8x8xf32> to vector<8x8x1xf32>
    %c0_78 = arith.constant 0 : index
    %c0_79 = arith.constant 0 : index
    %378 = vector.load %arg10[%c0_78, %c0_79] : memref<1x1xf32, #tpu.memory_space<vmem>>, vector<1x1xf32>
    %379 = vector.shape_cast %378 : vector<1x1xf32> to vector<1x1x1xf32>
    %380 = vector.broadcast %379 : vector<1x1x1xf32> to vector<8x8x1xf32>
    %381 = arith.addf %377, %380 : vector<8x8x1xf32>
    %382 = tpu.iota {dimensions = array<i32: 0>} : vector<8x8x1xi32>
    %383 = arith.sitofp %382 : vector<8x8x1xi32> to vector<8x8x1xf32>
    %384 = vector.shape_cast %0 : vector<8x1xf32> to vector<1x8x1xf32>
    %385 = vector.broadcast %384 : vector<1x8x1xf32> to vector<8x8x1xf32>
    %386 = arith.cmpf olt, %383, %385 : vector<8x8x1xf32>
    %cst_80 = arith.constant -1.000000e+09 : f32
    %387 = vector.broadcast %cst_80 : f32 to vector<8x8x1xf32>
    %388 = arith.select %386, %381, %387 : vector<8x8x1xi1>, vector<8x8x1xf32>
    %cst_81 = arith.constant dense<0xFF800000> : vector<8x1xf32>
    %389 = vector.multi_reduction <maximumf>, %388, %cst_81 [0] : vector<8x8x1xf32> to vector<8x1xf32>
    %390 = vector.shape_cast %389 : vector<8x1xf32> to vector<1x8x1xf32>
    %391 = vector.broadcast %390 : vector<1x8x1xf32> to vector<8x8x1xf32>
    %392 = arith.subf %388, %391 : vector<8x8x1xf32>
    %393 = math.exp %392 : vector<8x8x1xf32>
    %cst_82 = arith.constant dense<0.000000e+00> : vector<8x1xf32>
    %394 = vector.multi_reduction <add>, %393, %cst_82 [0] : vector<8x8x1xf32> to vector<8x1xf32>
    %395 = vector.broadcast %393 : vector<8x8x1xf32> to vector<8x8x32xf32>
    %396 = arith.mulf %395, %344 : vector<8x8x32xf32>
    %cst_83 = arith.constant dense<0.000000e+00> : vector<8x32xf32>
    %397 = vector.multi_reduction <add>, %396, %cst_83 [0] : vector<8x8x32xf32> to vector<8x32xf32>
    %cst_84 = arith.constant 0.000000e+00 : f32
    %398 = vector.broadcast %cst_84 : f32 to vector<8x1xf32>
    %399 = arith.cmpf ogt, %0, %398 : vector<8x1xf32>
    %400 = arith.extui %399 : vector<8x1xi1> to vector<8x1xi32>
    %401 = arith.sitofp %400 : vector<8x1xi32> to vector<8x1xf32>
    %402 = tpu.reciprocal %394 {approx = true} : vector<8x1xf32> -> vector<8x1xf32>
    %403 = vector.broadcast %402 : vector<8x1xf32> to vector<8x32xf32>
    %404 = arith.mulf %397, %403 : vector<8x32xf32>
    %405 = vector.broadcast %401 : vector<8x1xf32> to vector<8x32xf32>
    %406 = arith.mulf %404, %405 : vector<8x32xf32>
    %c0_85 = arith.constant 0 : index
    %c0_86 = arith.constant 0 : index
    %407 = vector.load %arg11[%c0_85, %c0_86] : memref<8x32xf32, #tpu.memory_space<vmem>>, vector<8x32xf32>
    tpu.vector_store %arg11[%c0_85, %c0_86], %406 {strides = array<i32>} : memref<8x32xf32, #tpu.memory_space<vmem>>, vector<8x32xf32>,
    return
  }
}

</mosaic_0001>

<llo_original>
// kernel: _device_forward.3
$region0: #{_device_forward.3}
  #allocation0 [shape = 'u32[]', space=smem, size = 0x4, offset = 0x4, fixed_abs, tag = 'smem constant byte address 0x4 - core index']
  #allocation1 [shape = 'u32[144,128]{1,0:T(1,128)}', space=vmem, size = 0x12000, scoped, tag = 'internal scratch']
  #allocation2 [shape = 'f32[80,32]{1,0:T(8,128)}', space=vmem, size = 0xa000, scoped, tag = 'scratch operand']
  %s0 = inlined_call_operand.vmem [shape: bf16[80,32], index: 0, kind: input, shape index: {}]
  %s1 = inlined_call_operand.vmem [shape: f32[16,1], index: 1, kind: input, shape index: {}]
  %s2 = inlined_call_operand.vmem [shape: bf16[32,128], index: 2, kind: input, shape index: {}]
  %s3 = inlined_call_operand.vmem [shape: bf16[32,128], index: 3, kind: input, shape index: {}]
  %s4 = inlined_call_operand.vmem [shape: f32[1,128], index: 4, kind: input, shape index: {}]
  %s5 = inlined_call_operand.vmem [shape: bf16[32,32], index: 5, kind: input, shape index: {}]
  %s6 = inlined_call_operand.vmem [shape: f32[1,32], index: 6, kind: input, shape index: {}]
  %s7 = inlined_call_operand.vmem [shape: f32[80,32], index: 7, kind: output, shape index: {}]
  %s8 = sld [smem:[#allocation0]]
  $region38: #{_device_forward.3} parent=0
    _
  %s10 = ssub.s32 1, %s8
  %s11 = scalar_select 0, %s10, %s8
  // Predicated region
  $region2: #{_device_forward.3} parent=0 // pred_check
    _
  $region3: #{_device_forward.3} parent=0 // pred_check_branch
    %13 = sbr.rel (0) target = $region5
  $region4: #{_device_forward.3} parent=0 // pred_region
    _
  $region5: #{_device_forward.3} parent=0 // pred_fallthru
    _
  // Predicated region
  $region6: #{_device_forward.3} parent=0 // pred_check
    _
  $region7: #{_device_forward.3} parent=0 // pred_check_branch
    %15 = sbr.rel (0) target = $region9
  $region8: #{_device_forward.3} parent=0 // pred_region
    _
  $region9: #{_device_forward.3} parent=0 // pred_fallthru
    _
  // Predicated region
  $region10: #{_device_forward.3} parent=0 // pred_check
    _
  $region11: #{_device_forward.3} parent=0 // pred_check_branch
    %17 = sbr.rel (0) target = $region13
  $region12: #{_device_forward.3} parent=0 // pred_region
    _
  $region13: #{_device_forward.3} parent=0 // pred_fallthru
    _
  // Predicated region
  $region14: #{_device_forward.3} parent=0 // pred_check
    _
  $region15: #{_device_forward.3} parent=0 // pred_check_branch
    %19 = sbr.rel (0) target = $region17
  $region16: #{_device_forward.3} parent=0 // pred_region
    _
  $region17: #{_device_forward.3} parent=0 // pred_fallthru
    _
  // Predicated region
  $region18: #{_device_forward.3} parent=0 // pred_check
    _
  $region19: #{_device_forward.3} parent=0 // pred_check_branch
    %21 = sbr.rel (0) target = $region21
  $region20: #{_device_forward.3} parent=0 // pred_region
    _
  $region21: #{_device_forward.3} parent=0 // pred_fallthru
    _
  // Predicated region
  $region22: #{_device_forward.3} parent=0 // pred_check
    _
  $region23: #{_device_forward.3} parent=0 // pred_check_branch
    %23 = sbr.rel (0) target = $region25
  $region24: #{_device_forward.3} parent=0 // pred_region
    _
  $region25: #{_device_forward.3} parent=0 // pred_fallthru
    _
  // Predicated region
  $region26: #{_device_forward.3} parent=0 // pred_check
    _
  $region27: #{_device_forward.3} parent=0 // pred_check_branch
    %25 = sbr.rel (0) target = $region29
  $region28: #{_device_forward.3} parent=0 // pred_region
    _
  $region29: #{_device_forward.3} parent=0 // pred_fallthru
    _
  %v27 = vld [vmem:[%s0] sm:$0xf]
  %v28 = vld [vmem:[%s0 + $0x4] sm:$0xf]
  %v29 = vld [vmem:[%s0 + $0x8] sm:$0xf]
  %v30 = vld [vmem:[%s0 + $0xc] sm:$0xf]
  %v31 = vld [vmem:[%s0 + $0x10] sm:$0xf]
  %v32 = vld [vmem:[%s0 + $0x14] sm:$0xf]
  %v33 = vld [vmem:[%s0 + $0x18] sm:$0xf]
  %v34 = vld [vmem:[%s0 + $0x1c] sm:$0xf]
  %v35 = vld [vmem:[%s0 + $0x20] sm:$0xf]
  %v36 = vld [vmem:[%s0 + $0x24] sm:$0xf]
  %v37 = vld [vmem:[%s1] sm:$0xff]
  %v38 = vld [vmem:[%s1 + $0x8] sm:$0xff]
  %v39 = vld [vmem:[%s2] sm:$0xf]
  %v40 = vld [vmem:[%s2 + $0x4] sm:$0xf]
  %v41 = vld [vmem:[%s2 + $0x8] sm:$0xf]
  %v42 = vld [vmem:[%s2 + $0xc] sm:$0xf]
  %v43 = vld [vmem:[%s3] sm:$0xf]
  %v44 = vld [vmem:[%s3 + $0x4] sm:$0xf]
  %v45 = vld [vmem:[%s3 + $0x8] sm:$0xf]
  %v46 = vld [vmem:[%s3 + $0xc] sm:$0xf]
  %v47 = vld [vmem:[%s4] sm:$0x1]
  %v49 = vlaneseq
  %v50 = vshrl.u32 %v49, 7
  %v51 = vsub.s32 0, %v50
  %v52 = vrot.slane %v47, %v51
  %v64 = vunpack.c.l.b16 %v27
  %v65 = vunpack.c.l.b16 %v28
  %v66 = vunpack.c.l.b16 %v29
  %v67 = vunpack.c.l.b16 %v30
  %v68 = vunpack.c.l.b16 %v31
  %v69 = vunpack.c.l.b16 %v32
  %v70 = vunpack.c.l.b16 %v33
  %v71 = vunpack.c.l.b16 %v34
  %v72 = vunpack.c.l.b16 %v35
  %v73 = vunpack.c.l.b16 %v36
  %v74 = vpack.c.b16 %v65, %v64
  %v75 = vpack.c.b16 %v67, %v66
  %v76 = vpack.c.b16 %v69, %v68
  %v77 = vpack.c.b16 %v71, %v70
  %v78 = vpack.c.b16 %v73, %v72
  %v83 = vunpack.c.l.b16 %v39
  %v84 = vunpack.c.l.b16 %v40
  %v85 = vunpack.c.l.b16 %v41
  %v86 = vunpack.c.l.b16 %v42
  %v87 = vpack.c.b16 %v84, %v83
  %v88 = vpack.c.b16 %v86, %v85
  %vm91 = vcmask 261120
  %v93 = vsel %vm91, %v74, 0
  %v96 = vsel %vm91, %v75, 0
  %v99 = vsel %vm91, %v76, 0
  %v102 = vsel %vm91, %v77, 0
  %v105 = vsel %vm91, %v78, 0
  %107 = vmatprep.subr.bf16.mxu0 0
  %108 = vmatpush1.bf16.msra.mxu0 0
  %109 = vmatprep.subr.bf16.mxu0 0
  %110 = vmatpush1.bf16.msra.mxu0 0
  %111 = vmatprep.subr.bf16.mxu0 0
  %112 = vmatpush1.bf16.msra.mxu0 0
  %113 = vmatprep.subr.bf16.mxu0 0
  %114 = vmatpush1.bf16.msra.mxu0 0
  %115 = vmatprep.subr.bf16.mxu0 0
  %116 = vmatpush1.bf16.msra.mxu0 0
  %117 = vmatprep.subr.bf16.mxu0 0
  %118 = vmatpush1.bf16.msra.mxu0 0
  %119 = vmatprep.subr.bf16.mxu0 0
  %120 = vmatpush1.bf16.msra.mxu0 %v88
  %121 = vmatprep.subr.bf16.mxu0 0
  %122 = vmatpush1.bf16.msra.mxu0 %v87
  %123 = vmatprep.subr.bf16.mxu0 0
  %124 = vmatpush2.bf16.msra.mxu0 0
  %125 = vmatprep.subr.bf16.mxu0 0
  %126 = vmatpush2.bf16.msra.mxu0 0
  %127 = vmatprep.subr.bf16.mxu0 0
  %128 = vmatpush2.bf16.msra.mxu0 0
  %129 = vmatprep.subr.bf16.mxu0 0
  %130 = vmatpush2.bf16.msra.mxu0 0
  %131 = vmatprep.subr.bf16.mxu0 0
  %132 = vmatpush2.bf16.msra.mxu0 0
  %133 = vmatprep.subr.bf16.mxu0 0
  %134 = vmatpush2.bf16.msra.mxu0 0
  %135 = vmatprep.subr.bf16.mxu0 0
  %136 = vmatpush2.bf16.msra.mxu0 0
  %137 = vmatprep.subr.bf16.mxu0 0
  %138 = vmatpush2.bf16.msra.mxu0 0
  %139 = vmatprep.mubr.bf16.mxu0 0
  %140 = vmatmul.mubr.bf16.gmra.mxu0 %v93
  %v141 = vpop.f32.mrf.mxu0
  %v142 = vadd.f32 %v52, %v141
  %v143 = vpop.f32.mrf.mxu0
  %v144 = vpop.f32.mrf.mxu0
  %v145 = vadd.f32 %v52, %v144
  %v146 = vpop.f32.mrf.mxu0
  %147 = vmatprep.mubr.bf16.mxu0 0
  %148 = vmatmul.mubr.bf16.gmra.mxu0 %v96
  %v149 = vpop.f32.mrf.mxu0
  %v150 = vadd.f32 %v52, %v149
  %v151 = vpop.f32.mrf.mxu0
  %v152 = vpop.f32.mrf.mxu0
  %v153 = vadd.f32 %v52, %v152
  %v154 = vpop.f32.mrf.mxu0
  %155 = vmatprep.mubr.bf16.mxu0 0
  %156 = vmatmul.mubr.bf16.gmra.mxu0 %v99
  %v157 = vpop.f32.mrf.mxu0
  %v158 = vadd.f32 %v52, %v157
  %v159 = vpop.f32.mrf.mxu0
  %v160 = vpop.f32.mrf.mxu0
  %v161 = vadd.f32 %v52, %v160
  %v162 = vpop.f32.mrf.mxu0
  %163 = vmatprep.mubr.bf16.mxu0 0
  %164 = vmatmul.mubr.bf16.gmra.mxu0 %v102
  %v165 = vpop.f32.mrf.mxu0
  %v166 = vadd.f32 %v52, %v165
  %v167 = vpop.f32.mrf.mxu0
  %v168 = vpop.f32.mrf.mxu0
  %v169 = vadd.f32 %v52, %v168
  %v170 = vpop.f32.mrf.mxu0
  %171 = vmatprep.mubr.bf16.mxu0 0
  %172 = vmatmul.mubr.bf16.gmra.mxu0 %v105
  %v173 = vpop.f32.mrf.mxu0
  %v174 = vadd.f32 %v52, %v173
  %v175 = vpop.f32.mrf.mxu0
  %v176 = vpop.f32.mrf.mxu0
  %v177 = vadd.f32 %v52, %v176
  %v178 = vpop.f32.mrf.mxu0
  %179 = vdwg.mxu0
  %v180 = vlaneseq
  %v181 = vand.u32 %v180, 127
  %vm182 = vcmp.ge.s32.totalorder %v181, 64
  %vm183 = vcmp.lt.s32.totalorder %v181, 96
  %vm184 = vmand %vm182, %vm183
  %v189 = vunpack.c.l.b16 %v43
  %v190 = vunpack.c.l.b16 %v44
  %v191 = vunpack.c.l.b16 %v45
  %v192 = vunpack.c.l.b16 %v46
  %v193 = vpack.c.b16 %v190, %v189
  %v194 = vpack.c.b16 %v192, %v191
  %v198 = vsel %vm91, 0, 0
  %200 = vmatprep.subr.bf16.mxu0 0
  %201 = vmatpush1.bf16.msra.mxu0 0
  %202 = vmatprep.subr.bf16.mxu0 0
  %203 = vmatpush1.bf16.msra.mxu0 0
  %204 = vmatprep.subr.bf16.mxu0 0
  %205 = vmatpush1.bf16.msra.mxu0 0
  %206 = vmatprep.subr.bf16.mxu0 0
  %207 = vmatpush1.bf16.msra.mxu0 0
  %208 = vmatprep.subr.bf16.mxu0 0
  %209 = vmatpush1.bf16.msra.mxu0 0
  %210 = vmatprep.subr.bf16.mxu0 0
  %211 = vmatpush1.bf16.msra.mxu0 0
  %212 = vmatprep.subr.bf16.mxu0 0
  %213 = vmatpush1.bf16.msra.mxu0 %v194
  %214 = vmatprep.subr.bf16.mxu0 0
  %215 = vmatpush1.bf16.msra.mxu0 %v193
  %216 = vmatprep.subr.bf16.mxu0 0
  %217 = vmatpush2.bf16.msra.mxu0 0
  %218 = vmatprep.subr.bf16.mxu0 0
  %219 = vmatpush2.bf16.msra.mxu0 0
  %220 = vmatprep.subr.bf16.mxu0 0
  %221 = vmatpush2.bf16.msra.mxu0 0
  %222 = vmatprep.subr.bf16.mxu0 0
  %223 = vmatpush2.bf16.msra.mxu0 0
  %224 = vmatprep.subr.bf16.mxu0 0
  %225 = vmatpush2.bf16.msra.mxu0 0
  %226 = vmatprep.subr.bf16.mxu0 0
  %227 = vmatpush2.bf16.msra.mxu0 0
  %228 = vmatprep.subr.bf16.mxu0 0
  %229 = vmatpush2.bf16.msra.mxu0 0
  %230 = vmatprep.subr.bf16.mxu0 0
  %231 = vmatpush2.bf16.msra.mxu0 0
  %232 = vmatprep.mubr.bf16.mxu0 0
  %233 = vmatmul.mubr.bf16.gmra.mxu0 %v198
  %v234 = vpop.f32.mrf.mxu0
  %v235 = vadd.f32 0.0, %v234
  %v236 = vpop.f32.mrf.mxu0
  %v237 = vpop.f32.mrf.mxu0
  %v238 = vadd.f32 0.0, %v237
  %v239 = vpop.f32.mrf.mxu0
  %240 = vdwg.mxu0
  %v241 = vadd.f32 %v142, %v235
  %v242 = vadd.f32 %v145, %v238
  %v243 = vtanh.pop %v241
  %v244 = vtanh.pop %v242
  %v245 = vxor.u32 %v241, 2147483648
  %v246 = vxor.u32 %v242, 2147483648
  %v247 = vmul.f32 %v245, 1.442695
  %v248 = vpow.pop %v247
  %v249 = vmul.f32 %v246, 1.442695
  %v250 = vpow.pop %v249
  %v251 = vadd.f32 %v248, 1.0
  %v252 = vadd.f32 %v250, 1.0
  %v253 = vrcp.pop %v251
  %v254 = vmul.f32 1.0, %v253
  %v255 = vrcp.pop %v252
  %v256 = vmul.f32 1.0, %v255
  %v257 = vsel %vm184, %v243, %v254
  %v258 = vsel %vm184, %v244, %v256
  %v259 = vmul.f32 %v257, 0.0
  %v260 = vmul.f32 %v258, 0.0
  %263 = vrot.lane.b32.xlu0 %v257, 64
  %v264 = vpop.permute.xlu0 %263
  %265 = vrot.lane.b32.xlu0 %v258, 64
  %v266 = vpop.permute.xlu0 %265
  %v269 = vmul.f32 %v257, %v264
  %v270 = vmul.f32 %v258, %v266
  %273 = vrot.lane.b32.xlu0 %v269, 32
  %v274 = vpop.permute.xlu0 %273
  %275 = vrot.lane.b32.xlu0 %v270, 32
  %v276 = vpop.permute.xlu0 %275
  %v279 = vadd.f32 %v259, %v274
  %v280 = vadd.f32 %v260, %v276
  %v281 = vtanh.pop %v279
  %v282 = vtanh.pop %v280
  %285 = vrot.lane.b32.xlu0 %v281, 64
  %v286 = vpop.permute.xlu0 %285
  %287 = vrot.lane.b32.xlu0 %v282, 64
  %v288 = vpop.permute.xlu0 %287
  %v291 = vmul.f32 %v257, %v286
  %v292 = vmul.f32 %v258, %v288
  %vm293 = vcmp.gt.f32.partialorder %v37, 0.0
  %vm294 = vcmp.gt.f32.partialorder %v38, 0.0
  %v295 = vsel %vm293, 1, 0
  %v296 = vsel %vm294, 1, 0
  %v297 = vcvt.s32.f32 %v295
  %v298 = vcvt.s32.f32 %v296
  %300 = vset.pattern.permute.xlu0 0
  %301 = vperm.xlu0 %300, %v297
  %v302 = vpop.permute.xlu0 %301
  %305 = vset.pattern.permute.xlu0 0
  %306 = vperm.xlu0 %305, %v298
  %v307 = vpop.permute.xlu0 %306
  %v309 = vmul.f32 %v302, %v279
  %v310 = vmul.f32 %v307, %v280
  %v311 = vsub.f32 1.0, %v297
  %v312 = vsub.f32 1.0, %v298
  %314 = vset.pattern.permute.xlu0 0
  %315 = vperm.xlu0 %314, %v311
  %v316 = vpop.permute.xlu0 %315
  %319 = vset.pattern.permute.xlu0 0
  %320 = vperm.xlu0 %319, %v312
  %v321 = vpop.permute.xlu0 %320
  %v323 = vmul.f32 %v316, 0.0
  %v324 = vmul.f32 %v321, 0.0
  %v325 = vadd.f32 %v309, %v323
  %v326 = vadd.f32 %v310, %v324
  %v327 = vmul.f32 %v302, %v291
  %v328 = vmul.f32 %v307, %v292
  %v329 = vadd.f32 %v327, %v323
  %v330 = vadd.f32 %v328, %v324
  %v331 = vmul.f32 %v329, %v302
  %v332 = vmul.f32 %v330, %v307
  %335 = vrot.lane.b32.xlu0 %v331, 32
  %v336 = vpop.permute.xlu0 %335
  %337 = vrot.lane.b32.xlu0 %v332, 32
  %v338 = vpop.permute.xlu0 %337
  %341 = vst.msk [vmem:[#allocation2] sm:$0xff] %vm91, %v336
  %342 = vst.msk [vmem:[#allocation2 + $0x8] sm:$0xff] %vm91, %v338
  %v343 = vpack.c.bf16 %v330, %v329
  %345 = vrot.lane.b32.xlu0 %v343, 32
  %v346 = vpop.permute.xlu0 %345
  %v348 = vsel %vm91, %v346, 0
  %350 = vmatprep.subr.bf16.mxu0 0
  %351 = vmatpush1.bf16.msra.mxu0 0
  %352 = vmatprep.subr.bf16.mxu0 0
  %353 = vmatpush1.bf16.msra.mxu0 0
  %354 = vmatprep.subr.bf16.mxu0 0
  %355 = vmatpush1.bf16.msra.mxu0 0
  %356 = vmatprep.subr.bf16.mxu0 0
  %357 = vmatpush1.bf16.msra.mxu0 0
  %358 = vmatprep.subr.bf16.mxu0 0
  %359 = vmatpush1.bf16.msra.mxu0 0
  %360 = vmatprep.subr.bf16.mxu0 0
  %361 = vmatpush1.bf16.msra.mxu0 0
  %362 = vmatprep.subr.bf16.mxu0 0
  %363 = vmatpush1.bf16.msra.mxu0 %v194
  %364 = vmatprep.subr.bf16.mxu0 0
  %365 = vmatpush1.bf16.msra.mxu0 %v193
  %366 = vmatprep.subr.bf16.mxu0 0
  %367 = vmatpush2.bf16.msra.mxu0 0
  %368 = vmatprep.subr.bf16.mxu0 0
  %369 = vmatpush2.bf16.msra.mxu0 0
  %370 = vmatprep.subr.bf16.mxu0 0
  %371 = vmatpush2.bf16.msra.mxu0 0
  %372 = vmatprep.subr.bf16.mxu0 0
  %373 = vmatpush2.bf16.msra.mxu0 0
  %374 = vmatprep.subr.bf16.mxu0 0
  %375 = vmatpush2.bf16.msra.mxu0 0
  %376 = vmatprep.subr.bf16.mxu0 0
  %377 = vmatpush2.bf16.msra.mxu0 0
  %378 = vmatprep.subr.bf16.mxu0 0
  %379 = vmatpush2.bf16.msra.mxu0 0
  %380 = vmatprep.subr.bf16.mxu0 0
  %381 = vmatpush2.bf16.msra.mxu0 0
  %382 = vmatprep.mubr.bf16.mxu0 0
  %383 = vmatmul.mubr.bf16.gmra.mxu0 %v348
  %v384 = vpop.f32.mrf.mxu0
  %v385 = vadd.f32 0.0, %v384
  %v386 = vpop.f32.mrf.mxu0
  %v387 = vpop.f32.mrf.mxu0
  %v388 = vadd.f32 0.0, %v387
  %v389 = vpop.f32.mrf.mxu0
  %390 = vdwg.mxu0
  %v391 = vadd.f32 %v150, %v385
  %v392 = vadd.f32 %v153, %v388
  %v393 = vtanh.pop %v391
  %v394 = vtanh.pop %v392
  %v395 = vxor.u32 %v391, 2147483648
  %v396 = vxor.u32 %v392, 2147483648
  %v397 = vmul.f32 %v395, 1.442695
  %v398 = vpow.pop %v397
  %v399 = vmul.f32 %v396, 1.442695
  %v400 = vpow.pop %v399
  %v401 = vadd.f32 %v398, 1.0
  %v402 = vadd.f32 %v400, 1.0
  %v403 = vrcp.pop %v401
  %v404 = vmul.f32 1.0, %v403
  %v405 = vrcp.pop %v402
  %v406 = vmul.f32 1.0, %v405
  %v407 = vsel %vm184, %v393, %v404
  %v408 = vsel %vm184, %v394, %v406
  %v409 = vmul.f32 %v407, %v325
  %v410 = vmul.f32 %v408, %v326
  %413 = vrot.lane.b32.xlu0 %v407, 64
  %v414 = vpop.permute.xlu0 %413
  %415 = vrot.lane.b32.xlu0 %v408, 64
  %v416 = vpop.permute.xlu0 %415
  %v419 = vmul.f32 %v407, %v414
  %v420 = vmul.f32 %v408, %v416
  %423 = vrot.lane.b32.xlu0 %v419, 32
  %v424 = vpop.permute.xlu0 %423
  %425 = vrot.lane.b32.xlu0 %v420, 32
  %v426 = vpop.permute.xlu0 %425
  %v429 = vadd.f32 %v409, %v424
  %v430 = vadd.f32 %v410, %v426
  %v431 = vtanh.pop %v429
  %v432 = vtanh.pop %v430
  %435 = vrot.lane.b32.xlu0 %v431, 64
  %v436 = vpop.permute.xlu0 %435
  %437 = vrot.lane.b32.xlu0 %v432, 64
  %v438 = vpop.permute.xlu0 %437
  %v441 = vmul.f32 %v407, %v436
  %v442 = vmul.f32 %v408, %v438
  %vm443 = vcmp.gt.f32.partialorder %v37, 1.0
  %vm444 = vcmp.gt.f32.partialorder %v38, 1.0
  %v445 = vsel %vm443, 1, 0
  %v446 = vsel %vm444, 1, 0
  %v447 = vcvt.s32.f32 %v445
  %v448 = vcvt.s32.f32 %v446
  %450 = vset.pattern.permute.xlu0 0
  %451 = vperm.xlu0 %450, %v447
  %v452 = vpop.permute.xlu0 %451
  %455 = vset.pattern.permute.xlu0 0
  %456 = vperm.xlu0 %455, %v448
  %v457 = vpop.permute.xlu0 %456
  %v459 = vmul.f32 %v452, %v429
  %v460 = vmul.f32 %v457, %v430
  %v461 = vsub.f32 1.0, %v447
  %v462 = vsub.f32 1.0, %v448
  %464 = vset.pattern.permute.xlu0 0
  %465 = vperm.xlu0 %464, %v461
  %v466 = vpop.permute.xlu0 %465
  %469 = vset.pattern.permute.xlu0 0
  %470 = vperm.xlu0 %469, %v462
  %v471 = vpop.permute.xlu0 %470
  %v473 = vmul.f32 %v466, %v325
  %v474 = vmul.f32 %v471, %v326
  %v475 = vadd.f32 %v459, %v473
  %v476 = vadd.f32 %v460, %v474
  %v477 = vmul.f32 %v452, %v441
  %v478 = vmul.f32 %v457, %v442
  %v479 = vmul.f32 %v466, %v329
  %v480 = vmul.f32 %v471, %v330
  %v481 = vadd.f32 %v477, %v479
  %v482 = vadd.f32 %v478, %v480
  %v483 = vmul.f32 %v481, %v452
  %v484 = vmul.f32 %v482, %v457
  %487 = vrot.lane.b32.xlu0 %v483, 32
  %v488 = vpop.permute.xlu0 %487
  %489 = vrot.lane.b32.xlu0 %v484, 32
  %v490 = vpop.permute.xlu0 %489
  %493 = vst.msk [vmem:[#allocation2 + $0x10] sm:$0xff] %vm91, %v488
  %494 = vst.msk [vmem:[#allocation2 + $0x18] sm:$0xff] %vm91, %v490
  %v495 = vpack.c.bf16 %v482, %v481
  %497 = vrot.lane.b32.xlu0 %v495, 32
  %v498 = vpop.permute.xlu0 %497
  %v500 = vsel %vm91, %v498, 0
  %502 = vmatprep.subr.bf16.mxu0 0
  %503 = vmatpush1.bf16.msra.mxu0 0
  %504 = vmatprep.subr.bf16.mxu0 0
  %505 = vmatpush1.bf16.msra.mxu0 0
  %506 = vmatprep.subr.bf16.mxu0 0
  %507 = vmatpush1.bf16.msra.mxu0 0
  %508 = vmatprep.subr.bf16.mxu0 0
  %509 = vmatpush1.bf16.msra.mxu0 0
  %510 = vmatprep.subr.bf16.mxu0 0
  %511 = vmatpush1.bf16.msra.mxu0 0
  %512 = vmatprep.subr.bf16.mxu0 0
  %513 = vmatpush1.bf16.msra.mxu0 0
  %514 = vmatprep.subr.bf16.mxu0 0
  %515 = vmatpush1.bf16.msra.mxu0 %v194
  %516 = vmatprep.subr.bf16.mxu0 0
  %517 = vmatpush1.bf16.msra.mxu0 %v193
  %518 = vmatprep.subr.bf16.mxu0 0
  %519 = vmatpush2.bf16.msra.mxu0 0
  %520 = vmatprep.subr.bf16.mxu0 0
  %521 = vmatpush2.bf16.msra.mxu0 0
  %522 = vmatprep.subr.bf16.mxu0 0
  %523 = vmatpush2.bf16.msra.mxu0 0
  %524 = vmatprep.subr.bf16.mxu0 0
  %525 = vmatpush2.bf16.msra.mxu0 0
  %526 = vmatprep.subr.bf16.mxu0 0
  %527 = vmatpush2.bf16.msra.mxu0 0
  %528 = vmatprep.subr.bf16.mxu0 0
  %529 = vmatpush2.bf16.msra.mxu0 0
  %530 = vmatprep.subr.bf16.mxu0 0
  %531 = vmatpush2.bf16.msra.mxu0 0
  %532 = vmatprep.subr.bf16.mxu0 0
  %533 = vmatpush2.bf16.msra.mxu0 0
  %534 = vmatprep.mubr.bf16.mxu0 0
  %535 = vmatmul.mubr.bf16.gmra.mxu0 %v500
  %v536 = vpop.f32.mrf.mxu0
  %v537 = vadd.f32 0.0, %v536
  %v538 = vpop.f32.mrf.mxu0
  %v539 = vpop.f32.mrf.mxu0
  %v540 = vadd.f32 0.0, %v539
  %v541 = vpop.f32.mrf.mxu0
  %542 = vdwg.mxu0
  %v543 = vadd.f32 %v158, %v537
  %v544 = vadd.f32 %v161, %v540
  %v545 = vtanh.pop %v543
  %v546 = vtanh.pop %v544
  %v547 = vxor.u32 %v543, 2147483648
  %v548 = vxor.u32 %v544, 2147483648
  %v549 = vmul.f32 %v547, 1.442695
  %v550 = vpow.pop %v549
  %v551 = vmul.f32 %v548, 1.442695
  %v552 = vpow.pop %v551
  %v553 = vadd.f32 %v550, 1.0
  %v554 = vadd.f32 %v552, 1.0
  %v555 = vrcp.pop %v553
  %v556 = vmul.f32 1.0, %v555
  %v557 = vrcp.pop %v554
  %v558 = vmul.f32 1.0, %v557
  %v559 = vsel %vm184, %v545, %v556
  %v560 = vsel %vm184, %v546, %v558
  %v561 = vmul.f32 %v559, %v475
  %v562 = vmul.f32 %v560, %v476
  %565 = vrot.lane.b32.xlu0 %v559, 64
  %v566 = vpop.permute.xlu0 %565
  %567 = vrot.lane.b32.xlu0 %v560, 64
  %v568 = vpop.permute.xlu0 %567
  %v571 = vmul.f32 %v559, %v566
  %v572 = vmul.f32 %v560, %v568
  %575 = vrot.lane.b32.xlu0 %v571, 32
  %v576 = vpop.permute.xlu0 %575
  %577 = vrot.lane.b32.xlu0 %v572, 32
  %v578 = vpop.permute.xlu0 %577
  %v581 = vadd.f32 %v561, %v576
  %v582 = vadd.f32 %v562, %v578
  %v583 = vtanh.pop %v581
  %v584 = vtanh.pop %v582
  %587 = vrot.lane.b32.xlu0 %v583, 64
  %v588 = vpop.permute.xlu0 %587
  %589 = vrot.lane.b32.xlu0 %v584, 64
  %v590 = vpop.permute.xlu0 %589
  %v593 = vmul.f32 %v559, %v588
  %v594 = vmul.f32 %v560, %v590
  %vm595 = vcmp.gt.f32.partialorder %v37, 2.0
  %vm596 = vcmp.gt.f32.partialorder %v38, 2.0
  %v597 = vsel %vm595, 1, 0
  %v598 = vsel %vm596, 1, 0
  %v599 = vcvt.s32.f32 %v597
  %v600 = vcvt.s32.f32 %v598
  %602 = vset.pattern.permute.xlu0 0
  %603 = vperm.xlu0 %602, %v599
  %v604 = vpop.permute.xlu0 %603
  %607 = vset.pattern.permute.xlu0 0
  %608 = vperm.xlu0 %607, %v600
  %v609 = vpop.permute.xlu0 %608
  %v611 = vmul.f32 %v604, %v581
  %v612 = vmul.f32 %v609, %v582
  %v613 = vsub.f32 1.0, %v599
  %v614 = vsub.f32 1.0, %v600
  %616 = vset.pattern.permute.xlu0 0
  %617 = vperm.xlu0 %616, %v613
  %v618 = vpop.permute.xlu0 %617
  %621 = vset.pattern.permute.xlu0 0
  %622 = vperm.xlu0 %621, %v614
  %v623 = vpop.permute.xlu0 %622
  %v625 = vmul.f32 %v618, %v475
  %v626 = vmul.f32 %v623, %v476
  %v627 = vadd.f32 %v611, %v625
  %v628 = vadd.f32 %v612, %v626
  %v629 = vmul.f32 %v604, %v593
  %v630 = vmul.f32 %v609, %v594
  %v631 = vmul.f32 %v618, %v481
  %v632 = vmul.f32 %v623, %v482
  %v633 = vadd.f32 %v629, %v631
  %v634 = vadd.f32 %v630, %v632
  %v635 = vmul.f32 %v633, %v604
  %v636 = vmul.f32 %v634, %v609
  %639 = vrot.lane.b32.xlu0 %v635, 32
  %v640 = vpop.permute.xlu0 %639
  %641 = vrot.lane.b32.xlu0 %v636, 32
  %v642 = vpop.permute.xlu0 %641
  %645 = vst.msk [vmem:[#allocation2 + $0x20] sm:$0xff] %vm91, %v640
  %646 = vst.msk [vmem:[#allocation2 + $0x28] sm:$0xff] %vm91, %v642
  %v647 = vpack.c.bf16 %v634, %v633
  %649 = vrot.lane.b32.xlu0 %v647, 32
  %v650 = vpop.permute.xlu0 %649
  %v652 = vsel %vm91, %v650, 0
  %654 = vmatprep.subr.bf16.mxu0 0
  %655 = vmatpush1.bf16.msra.mxu0 0
  %656 = vmatprep.subr.bf16.mxu0 0
  %657 = vmatpush1.bf16.msra.mxu0 0
  %658 = vmatprep.subr.bf16.mxu0 0
  %659 = vmatpush1.bf16.msra.mxu0 0
  %660 = vmatprep.subr.bf16.mxu0 0
  %661 = vmatpush1.bf16.msra.mxu0 0
  %662 = vmatprep.subr.bf16.mxu0 0
  %663 = vmatpush1.bf16.msra.mxu0 0
  %664 = vmatprep.subr.bf16.mxu0 0
  %665 = vmatpush1.bf16.msra.mxu0 0
  %666 = vmatprep.subr.bf16.mxu0 0
  %667 = vmatpush1.bf16.msra.mxu0 %v194
  %668 = vmatprep.subr.bf16.mxu0 0
  %669 = vmatpush1.bf16.msra.mxu0 %v193
  %670 = vmatprep.subr.bf16.mxu0 0
  %671 = vmatpush2.bf16.msra.mxu0 0
  %672 = vmatprep.subr.bf16.mxu0 0
  %673 = vmatpush2.bf16.msra.mxu0 0
  %674 = vmatprep.subr.bf16.mxu0 0
  %675 = vmatpush2.bf16.msra.mxu0 0
  %676 = vmatprep.subr.bf16.mxu0 0
  %677 = vmatpush2.bf16.msra.mxu0 0
  %678 = vmatprep.subr.bf16.mxu0 0
  %679 = vmatpush2.bf16.msra.mxu0 0
  %680 = vmatprep.subr.bf16.mxu0 0
  %681 = vmatpush2.bf16.msra.mxu0 0
  %682 = vmatprep.subr.bf16.mxu0 0
  %683 = vmatpush2.bf16.msra.mxu0 0
  %684 = vmatprep.subr.bf16.mxu0 0
  %685 = vmatpush2.bf16.msra.mxu0 0
  %686 = vmatprep.mubr.bf16.mxu0 0
  %687 = vmatmul.mubr.bf16.gmra.mxu0 %v652
  %v688 = vpop.f32.mrf.mxu0
  %v689 = vadd.f32 0.0, %v688
  %v690 = vpop.f32.mrf.mxu0
  %v691 = vpop.f32.mrf.mxu0
  %v692 = vadd.f32 0.0, %v691
  %v693 = vpop.f32.mrf.mxu0
  %694 = vdwg.mxu0
  %v695 = vadd.f32 %v166, %v689
  %v696 = vadd.f32 %v169, %v692
  %v697 = vtanh.pop %v695
  %v698 = vtanh.pop %v696
  %v699 = vxor.u32 %v695, 2147483648
  %v700 = vxor.u32 %v696, 2147483648
  %v701 = vmul.f32 %v699, 1.442695
  %v702 = vpow.pop %v701
  %v703 = vmul.f32 %v700, 1.442695
  %v704 = vpow.pop %v703
  %v705 = vadd.f32 %v702, 1.0
  %v706 = vadd.f32 %v704, 1.0
  %v707 = vrcp.pop %v705
  %v708 = vmul.f32 1.0, %v707
  %v709 = vrcp.pop %v706
  %v710 = vmul.f32 1.0, %v709
  %v711 = vsel %vm184, %v697, %v708
  %v712 = vsel %vm184, %v698, %v710
  %v713 = vmul.f32 %v711, %v627
  %v714 = vmul.f32 %v712, %v628
  %717 = vrot.lane.b32.xlu0 %v711, 64
  %v718 = vpop.permute.xlu0 %717
  %719 = vrot.lane.b32.xlu0 %v712, 64
  %v720 = vpop.permute.xlu0 %719
  %v723 = vmul.f32 %v711, %v718
  %v724 = vmul.f32 %v712, %v720
  %727 = vrot.lane.b32.xlu0 %v723, 32
  %v728 = vpop.permute.xlu0 %727
  %729 = vrot.lane.b32.xlu0 %v724, 32
  %v730 = vpop.permute.xlu0 %729
  %v733 = vadd.f32 %v713, %v728
  %v734 = vadd.f32 %v714, %v730
  %v735 = vtanh.pop %v733
  %v736 = vtanh.pop %v734
  %739 = vrot.lane.b32.xlu0 %v735, 64
  %v740 = vpop.permute.xlu0 %739
  %741 = vrot.lane.b32.xlu0 %v736, 64
  %v742 = vpop.permute.xlu0 %741
  %v745 = vmul.f32 %v711, %v740
  %v746 = vmul.f32 %v712, %v742
  %vm747 = vcmp.gt.f32.partialorder %v37, 3.0
  %vm748 = vcmp.gt.f32.partialorder %v38, 3.0
  %v749 = vsel %vm747, 1, 0
  %v750 = vsel %vm748, 1, 0
  %v751 = vcvt.s32.f32 %v749
  %v752 = vcvt.s32.f32 %v750
  %754 = vset.pattern.permute.xlu0 0
  %755 = vperm.xlu0 %754, %v751
  %v756 = vpop.permute.xlu0 %755
  %759 = vset.pattern.permute.xlu0 0
  %760 = vperm.xlu0 %759, %v752
  %v761 = vpop.permute.xlu0 %760
  %v763 = vmul.f32 %v756, %v733
  %v764 = vmul.f32 %v761, %v734
  %v765 = vsub.f32 1.0, %v751
  %v766 = vsub.f32 1.0, %v752
  %768 = vset.pattern.permute.xlu0 0
  %769 = vperm.xlu0 %768, %v765
  %v770 = vpop.permute.xlu0 %769
  %773 = vset.pattern.permute.xlu0 0
  %774 = vperm.xlu0 %773, %v766
  %v775 = vpop.permute.xlu0 %774
  %v777 = vmul.f32 %v770, %v627
  %v778 = vmul.f32 %v775, %v628
  %v779 = vadd.f32 %v763, %v777
  %v780 = vadd.f32 %v764, %v778
  %v781 = vmul.f32 %v756, %v745
  %v782 = vmul.f32 %v761, %v746
  %v783 = vmul.f32 %v770, %v633
  %v784 = vmul.f32 %v775, %v634
  %v785 = vadd.f32 %v781, %v783
  %v786 = vadd.f32 %v782, %v784
  %v787 = vmul.f32 %v785, %v756
  %v788 = vmul.f32 %v786, %v761
  %791 = vrot.lane.b32.xlu0 %v787, 32
  %v792 = vpop.permute.xlu0 %791
  %793 = vrot.lane.b32.xlu0 %v788, 32
  %v794 = vpop.permute.xlu0 %793
  %797 = vst.msk [vmem:[#allocation2 + $0x30] sm:$0xff] %vm91, %v792
  %798 = vst.msk [vmem:[#allocation2 + $0x38] sm:$0xff] %vm91, %v794
  %v799 = vpack.c.bf16 %v786, %v785
  %801 = vrot.lane.b32.xlu0 %v799, 32
  %v802 = vpop.permute.xlu0 %801
  %v804 = vsel %vm91, %v802, 0
  %806 = vmatprep.subr.bf16.mxu0 0
  %807 = vmatpush1.bf16.msra.mxu0 0
  %808 = vmatprep.subr.bf16.mxu0 0
  %809 = vmatpush1.bf16.msra.mxu0 0
  %810 = vmatprep.subr.bf16.mxu0 0
  %811 = vmatpush1.bf16.msra.mxu0 0
  %812 = vmatprep.subr.bf16.mxu0 0
  %813 = vmatpush1.bf16.msra.mxu0 0
  %814 = vmatprep.subr.bf16.mxu0 0
  %815 = vmatpush1.bf16.msra.mxu0 0
  %816 = vmatprep.subr.bf16.mxu0 0
  %817 = vmatpush1.bf16.msra.mxu0 0
  %818 = vmatprep.subr.bf16.mxu0 0
  %819 = vmatpush1.bf16.msra.mxu0 %v194
  %820 = vmatprep.subr.bf16.mxu0 0
  %821 = vmatpush1.bf16.msra.mxu0 %v193
  %822 = vmatprep.subr.bf16.mxu0 0
  %823 = vmatpush2.bf16.msra.mxu0 0
  %824 = vmatprep.subr.bf16.mxu0 0
  %825 = vmatpush2.bf16.msra.mxu0 0
  %826 = vmatprep.subr.bf16.mxu0 0
  %827 = vmatpush2.bf16.msra.mxu0 0
  %828 = vmatprep.subr.bf16.mxu0 0
  %829 = vmatpush2.bf16.msra.mxu0 0
  %830 = vmatprep.subr.bf16.mxu0 0
  %831 = vmatpush2.bf16.msra.mxu0 0
  %832 = vmatprep.subr.bf16.mxu0 0
  %833 = vmatpush2.bf16.msra.mxu0 0
  %834 = vmatprep.subr.bf16.mxu0 0
  %835 = vmatpush2.bf16.msra.mxu0 0
  %836 = vmatprep.subr.bf16.mxu0 0
  %837 = vmatpush2.bf16.msra.mxu0 0
  %838 = vmatprep.mubr.bf16.mxu0 0
  %839 = vmatmul.mubr.bf16.gmra.mxu0 %v804
  %v840 = vpop.f32.mrf.mxu0
  %v841 = vadd.f32 0.0, %v840
  %v842 = vpop.f32.mrf.mxu0
  %v843 = vpop.f32.mrf.mxu0
  %v844 = vadd.f32 0.0, %v843
  %v845 = vpop.f32.mrf.mxu0
  %846 = vdwg.mxu0
  %v847 = vadd.f32 %v174, %v841
  %v848 = vadd.f32 %v177, %v844
  %v849 = vtanh.pop %v847
  %v850 = vtanh.pop %v848
  %v851 = vxor.u32 %v847, 2147483648
  %v852 = vxor.u32 %v848, 2147483648
  %v853 = vmul.f32 %v851, 1.442695
  %v854 = vpow.pop %v853
  %v855 = vmul.f32 %v852, 1.442695
  %v856 = vpow.pop %v855
  %v857 = vadd.f32 %v854, 1.0
  %v858 = vadd.f32 %v856, 1.0
  %v859 = vrcp.pop %v857
  %v860 = vmul.f32 1.0, %v859
  %v861 = vrcp.pop %v858
  %v862 = vmul.f32 1.0, %v861
  %v863 = vsel %vm184, %v849, %v860
  %v864 = vsel %vm184, %v850, %v862
  %v865 = vmul.f32 %v863, %v779
  %v866 = vmul.f32 %v864, %v780
  %869 = vrot.lane.b32.xlu0 %v863, 64
  %v870 = vpop.permute.xlu0 %869
  %871 = vrot.lane.b32.xlu0 %v864, 64
  %v872 = vpop.permute.xlu0 %871
  %v875 = vmul.f32 %v863, %v870
  %v876 = vmul.f32 %v864, %v872
  %879 = vrot.lane.b32.xlu0 %v875, 32
  %v880 = vpop.permute.xlu0 %879
  %881 = vrot.lane.b32.xlu0 %v876, 32
  %v882 = vpop.permute.xlu0 %881
  %v885 = vadd.f32 %v865, %v880
  %v886 = vadd.f32 %v866, %v882
  %v887 = vtanh.pop %v885
  %v888 = vtanh.pop %v886
  %891 = vrot.lane.b32.xlu0 %v887, 64
  %v892 = vpop.permute.xlu0 %891
  %893 = vrot.lane.b32.xlu0 %v888, 64
  %v894 = vpop.permute.xlu0 %893
  %v897 = vmul.f32 %v863, %v892
  %v898 = vmul.f32 %v864, %v894
  %vm899 = vcmp.gt.f32.partialorder %v37, 4.0
  %vm900 = vcmp.gt.f32.partialorder %v38, 4.0
  %v901 = vsel %vm899, 1, 0
  %v902 = vsel %vm900, 1, 0
  %v903 = vcvt.s32.f32 %v901
  %v904 = vcvt.s32.f32 %v902
  %906 = vset.pattern.permute.xlu0 0
  %907 = vperm.xlu0 %906, %v903
  %v908 = vpop.permute.xlu0 %907
  %911 = vset.pattern.permute.xlu0 0
  %912 = vperm.xlu0 %911, %v904
  %v913 = vpop.permute.xlu0 %912
  %v915 = vmul.f32 %v908, %v897
  %v916 = vmul.f32 %v913, %v898
  %v917 = vsub.f32 1.0, %v903
  %v918 = vsub.f32 1.0, %v904
  %920 = vset.pattern.permute.xlu0 0
  %921 = vperm.xlu0 %920, %v917
  %v922 = vpop.permute.xlu0 %921
  %925 = vset.pattern.permute.xlu0 0
  %926 = vperm.xlu0 %925, %v918
  %v927 = vpop.permute.xlu0 %926
  %v929 = vmul.f32 %v922, %v785
  %v930 = vmul.f32 %v927, %v786
  %v931 = vadd.f32 %v915, %v929
  %v932 = vadd.f32 %v916, %v930
  %v933 = vmul.f32 %v931, %v908
  %v934 = vmul.f32 %v932, %v913
  %937 = vrot.lane.b32.xlu0 %v933, 32
  %v938 = vpop.permute.xlu0 %937
  %939 = vrot.lane.b32.xlu0 %v934, 32
  %v940 = vpop.permute.xlu0 %939
  %943 = vst.msk [vmem:[#allocation2 + $0x40] sm:$0xff] %vm91, %v938
  %944 = vst.msk [vmem:[#allocation2 + $0x48] sm:$0xff] %vm91, %v940
  %v945 = vld [vmem:[#allocation2] sm:$0xff]
  %v946 = vld [vmem:[#allocation2 + $0x8] sm:$0xff]
  %v947 = vld [vmem:[#allocation2 + $0x10] sm:$0xff]
  %v948 = vld [vmem:[#allocation2 + $0x18] sm:$0xff]
  %v949 = vld [vmem:[#allocation2 + $0x20] sm:$0xff]
  %v950 = vld [vmem:[#allocation2 + $0x28] sm:$0xff]
  %v951 = vld [vmem:[#allocation2 + $0x30] sm:$0xff]
  %v952 = vld [vmem:[#allocation2 + $0x38] sm:$0xff]
  %v953 = vld [vmem:[#allocation2 + $0x40] sm:$0xff]
  %v954 = vld [vmem:[#allocation2 + $0x48] sm:$0xff]
  %v955 = vpack.c.bf16 %v946, %v945
  %v956 = vpack.c.bf16 %v948, %v947
  %v957 = vpack.c.bf16 %v950, %v949
  %v958 = vpack.c.bf16 %v952, %v951
  %v959 = vpack.c.bf16 %v954, %v953
  %v960 = vld [vmem:[%s5] sm:$0xf]
  %v961 = vld [vmem:[%s5 + $0x4] sm:$0xf]
  %v962 = vld [vmem:[%s5 + $0x8] sm:$0xf]
  %v963 = vld [vmem:[%s5 + $0xc] sm:$0xf]
  %v964 = vld [vmem:[%s6] sm:$0x1]
  %v966 = vlaneseq
  %v967 = vshrl.u32 %v966, 7
  %v968 = vsub.s32 0, %v967
  %v969 = vrot.slane %v964, %v968
  %v975 = vunpack.c.l.b16 %v960
  %v976 = vunpack.c.l.b16 %v961
  %v977 = vunpack.c.l.b16 %v962
  %v978 = vunpack.c.l.b16 %v963
  %v979 = vpack.c.b16 %v976, %v975
  %v980 = vpack.c.b16 %v978, %v977
  %v984 = vsel %vm91, %v955, 0
  %v987 = vsel %vm91, %v956, 0
  %v990 = vsel %vm91, %v957, 0
  %v993 = vsel %vm91, %v958, 0
  %v996 = vsel %vm91, %v959, 0
  %998 = vmatprep.subr.bf16.mxu0 0
  %999 = vmatpush1.bf16.msra.mxu0 0
  %1000 = vmatprep.subr.bf16.mxu0 0
  %1001 = vmatpush1.bf16.msra.mxu0 0
  %1002 = vmatprep.subr.bf16.mxu0 0
  %1003 = vmatpush1.bf16.msra.mxu0 0
  %1004 = vmatprep.subr.bf16.mxu0 0
  %1005 = vmatpush1.bf16.msra.mxu0 0
  %1006 = vmatprep.subr.bf16.mxu0 0
  %1007 = vmatpush1.bf16.msra.mxu0 0
  %1008 = vmatprep.subr.bf16.mxu0 0
  %1009 = vmatpush1.bf16.msra.mxu0 0
  %1010 = vmatprep.subr.bf16.mxu0 0
  %1011 = vmatpush1.bf16.msra.mxu0 %v980
  %1012 = vmatprep.subr.bf16.mxu0 0
  %1013 = vmatpush1.bf16.msra.mxu0 %v979
  %1014 = vmatprep.subr.bf16.mxu0 0
  %1015 = vmatpush2.bf16.msra.mxu0 0
  %1016 = vmatprep.subr.bf16.mxu0 0
  %1017 = vmatpush2.bf16.msra.mxu0 0
  %1018 = vmatprep.subr.bf16.mxu0 0
  %1019 = vmatpush2.bf16.msra.mxu0 0
  %1020 = vmatprep.subr.bf16.mxu0 0
  %1021 = vmatpush2.bf16.msra.mxu0 0
  %1022 = vmatprep.subr.bf16.mxu0 0
  %1023 = vmatpush2.bf16.msra.mxu0 0
  %1024 = vmatprep.subr.bf16.mxu0 0
  %1025 = vmatpush2.bf16.msra.mxu0 0
  %1026 = vmatprep.subr.bf16.mxu0 0
  %1027 = vmatpush2.bf16.msra.mxu0 0
  %1028 = vmatprep.subr.bf16.mxu0 0
  %1029 = vmatpush2.bf16.msra.mxu0 0
  %1030 = vmatprep.mubr.bf16.mxu0 0
  %1031 = vmatmul.mubr.bf16.gmra.mxu0 %v984
  %v1032 = vpop.f32.mrf.mxu0
  %v1033 = vadd.f32 %v969, %v1032
  %v1034 = vpop.f32.mrf.mxu0
  %v1035 = vpop.f32.mrf.mxu0
  %v1036 = vadd.f32 %v969, %v1035
  %v1037 = vpop.f32.mrf.mxu0
  %1038 = vmatprep.mubr.bf16.mxu0 0
  %1039 = vmatmul.mubr.bf16.gmra.mxu0 %v987
  %v1040 = vpop.f32.mrf.mxu0
  %v1041 = vadd.f32 %v969, %v1040
  %v1042 = vpop.f32.mrf.mxu0
  %v1043 = vpop.f32.mrf.mxu0
  %v1044 = vadd.f32 %v969, %v1043
  %v1045 = vpop.f32.mrf.mxu0
  %1046 = vmatprep.mubr.bf16.mxu0 0
  %1047 = vmatmul.mubr.bf16.gmra.mxu0 %v990
  %v1048 = vpop.f32.mrf.mxu0
  %v1049 = vadd.f32 %v969, %v1048
  %v1050 = vpop.f32.mrf.mxu0
  %v1051 = vpop.f32.mrf.mxu0
  %v1052 = vadd.f32 %v969, %v1051
  %v1053 = vpop.f32.mrf.mxu0
  %1054 = vmatprep.mubr.bf16.mxu0 0
  %1055 = vmatmul.mubr.bf16.gmra.mxu0 %v993
  %v1056 = vpop.f32.mrf.mxu0
  %v1057 = vadd.f32 %v969, %v1056
  %v1058 = vpop.f32.mrf.mxu0
  %v1059 = vpop.f32.mrf.mxu0
  %v1060 = vadd.f32 %v969, %v1059
  %v1061 = vpop.f32.mrf.mxu0
  %1062 = vmatprep.mubr.bf16.mxu0 0
  %1063 = vmatmul.mubr.bf16.gmra.mxu0 %v996
  %v1064 = vpop.f32.mrf.mxu0
  %v1065 = vadd.f32 %v969, %v1064
  %v1066 = vpop.f32.mrf.mxu0
  %v1067 = vpop.f32.mrf.mxu0
  %v1068 = vadd.f32 %v969, %v1067
  %v1069 = vpop.f32.mrf.mxu0
  %1070 = vdwg.mxu0
  %1071 = vst.msk [vmem:[%s7] sm:$0xff] %vm91, %v1033
  %1072 = vst.msk [vmem:[%s7 + $0x8] sm:$0xff] %vm91, %v1036
  %1073 = vst.msk [vmem:[%s7 + $0x10] sm:$0xff] %vm91, %v1041
  %1074 = vst.msk [vmem:[%s7 + $0x18] sm:$0xff] %vm91, %v1044
  %1075 = vst.msk [vmem:[%s7 + $0x20] sm:$0xff] %vm91, %v1049
  %1076 = vst.msk [vmem:[%s7 + $0x28] sm:$0xff] %vm91, %v1052
  %1077 = vst.msk [vmem:[%s7 + $0x30] sm:$0xff] %vm91, %v1057
  %1078 = vst.msk [vmem:[%s7 + $0x38] sm:$0xff] %vm91, %v1060
  %1079 = vst.msk [vmem:[%s7 + $0x40] sm:$0xff] %vm91, %v1065
  %1080 = vst.msk [vmem:[%s7 + $0x48] sm:$0xff] %vm91, %v1068
  // Predicated region
  $region30: #{_device_forward.3} parent=0 // pred_check
    _
  $region31: #{_device_forward.3} parent=0 // pred_check_branch
    %1082 = sbr.rel (0) target = $region33
  $region32: #{_device_forward.3} parent=0 // pred_region
    _
  $region33: #{_device_forward.3} parent=0 // pred_fallthru
    _
  // Predicated region
  $region34: #{_device_forward.3} parent=0 // pred_check
    _
  $region35: #{_device_forward.3} parent=0 // pred_check_branch
    %1084 = sbr.rel (0) target = $region37
  $region36: #{_device_forward.3} parent=0 // pred_region
    _
  $region37: #{_device_forward.3} parent=0 // pred_fallthru
    _

// kernel: _device_forward.2
$region0: #{_device_forward.2}
  #allocation0 [shape = 'u32[]', space=smem, size = 0x4, offset = 0x4, fixed_abs, tag = 'smem constant byte address 0x4 - core index']
  #allocation1 [shape = 'u32[144,128]{1,0:T(1,128)}', space=vmem, size = 0x12000, scoped, tag = 'internal scratch']
  #allocation2 [shape = 'f32[64,32]{1,0:T(8,128)}', space=vmem, size = 0x8000, scoped, tag = 'scratch operand']
  #allocation3 [shape = 'f32[1,1]{1,0:T(1,128)S(1)}', space=vmem, size = 0x200, scoped, tag = 'scoped memory for _device_forward.2']
  %s0 = inlined_call_operand.vmem [shape: bf16[64,32], index: 0, kind: input, shape index: {}]
  %s1 = inlined_call_operand.vmem [shape: f32[8,1], index: 1, kind: input, shape index: {}]
  %s2 = inlined_call_operand.vmem [shape: bf16[32,128], index: 2, kind: input, shape index: {}]
  %s3 = inlined_call_operand.vmem [shape: bf16[32,128], index: 3, kind: input, shape index: {}]
  %s4 = inlined_call_operand.vmem [shape: f32[1,128], index: 4, kind: input, shape index: {}]
  %s5 = inlined_call_operand.vmem [shape: bf16[32,32], index: 5, kind: input, shape index: {}]
  %s6 = inlined_call_operand.vmem [shape: f32[1,32], index: 6, kind: input, shape index: {}]
  %s7 = inlined_call_operand.vmem [shape: f32[1,32], index: 7, kind: input, shape index: {}]
  %s8 = inlined_call_operand.vmem [shape: f32[1,32], index: 8, kind: input, shape index: {}]
  %s9 = inlined_call_operand.vmem [shape: f32[1,32], index: 9, kind: input, shape index: {}]
  %s10 = inlined_call_operand.<no memory space> [shape: f32[1,1], index: 10, kind: input, shape index: {}]
  %s11 = inlined_call_operand.vmem [shape: f32[8,32], index: 11, kind: output, shape index: {}]
  %s12 = sld [smem:[#allocation0]]
  $region54: #{_device_forward.2} parent=0
    _
  %s14 = ssub.s32 1, %s12
  %s15 = scalar_select 0, %s14, %s12
  %v16 = vstv %s10
  %17 = vst [vmem:[#allocation3] sm:$0x1] %v16
  // Predicated region
  $region2: #{_device_forward.2} parent=0 // pred_check
    _
  $region3: #{_device_forward.2} parent=0 // pred_check_branch
    %19 = sbr.rel (0) target = $region5
  $region4: #{_device_forward.2} parent=0 // pred_region
    _
  $region5: #{_device_forward.2} parent=0 // pred_fallthru
    _
  // Predicated region
  $region6: #{_device_forward.2} parent=0 // pred_check
    _
  $region7: #{_device_forward.2} parent=0 // pred_check_branch
    %21 = sbr.rel (0) target = $region9
  $region8: #{_device_forward.2} parent=0 // pred_region
    _
  $region9: #{_device_forward.2} parent=0 // pred_fallthru
    _
  // Predicated region
  $region10: #{_device_forward.2} parent=0 // pred_check
    _
  $region11: #{_device_forward.2} parent=0 // pred_check_branch
    %23 = sbr.rel (0) target = $region13
  $region12: #{_device_forward.2} parent=0 // pred_region
    _
  $region13: #{_device_forward.2} parent=0 // pred_fallthru
    _
  // Predicated region
  $region14: #{_device_forward.2} parent=0 // pred_check
    _
  $region15: #{_device_forward.2} parent=0 // pred_check_branch
    %25 = sbr.rel (0) target = $region17
  $region16: #{_device_forward.2} parent=0 // pred_region
    _
  $region17: #{_device_forward.2} parent=0 // pred_fallthru
    _
  // Predicated region
  $region18: #{_device_forward.2} parent=0 // pred_check
    _
  $region19: #{_device_forward.2} parent=0 // pred_check_branch
    %27 = sbr.rel (0) target = $region21
  $region20: #{_device_forward.2} parent=0 // pred_region
    _
  $region21: #{_device_forward.2} parent=0 // pred_fallthru
    _
  // Predicated region
  $region22: #{_device_forward.2} parent=0 // pred_check
    _
  $region23: #{_device_forward.2} parent=0 // pred_check_branch
    %29 = sbr.rel (0) target = $region25
  $region24: #{_device_forward.2} parent=0 // pred_region
    _
  $region25: #{_device_forward.2} parent=0 // pred_fallthru
    _
  // Predicated region
  $region26: #{_device_forward.2} parent=0 // pred_check
    _
  $region27: #{_device_forward.2} parent=0 // pred_check_branch
    %31 = sbr.rel (0) target = $region29
  $region28: #{_device_forward.2} parent=0 // pred_region
    _
  $region29: #{_device_forward.2} parent=0 // pred_fallthru
    _
  // Predicated region
  $region30: #{_device_forward.2} parent=0 // pred_check
    _
  $region31: #{_device_forward.2} parent=0 // pred_check_branch
    %33 = sbr.rel (0) target = $region33
  $region32: #{_device_forward.2} parent=0 // pred_region
    _
  $region33: #{_device_forward.2} parent=0 // pred_fallthru
    _
  // Predicated region
  $region34: #{_device_forward.2} parent=0 // pred_check
    _
  $region35: #{_device_forward.2} parent=0 // pred_check_branch
    %35 = sbr.rel (0) target = $region37
  $region36: #{_device_forward.2} parent=0 // pred_region
    _
  $region37: #{_device_forward.2} parent=0 // pred_fallthru
    _
  // Predicated region
  $region38: #{_device_forward.2} parent=0 // pred_check
    _
  $region39: #{_device_forward.2} parent=0 // pred_check_branch
    %37 = sbr.rel (0) target = $region41
  $region40: #{_device_forward.2} parent=0 // pred_region
    _
  $region41: #{_device_forward.2} parent=0 // pred_fallthru
    _
  // Predicated region
  $region42: #{_device_forward.2} parent=0 // pred_check
    _
  $region43: #{_device_forward.2} parent=0 // pred_check_branch
    %39 = sbr.rel (0) target = $region45
  $region44: #{_device_forward.2} parent=0 // pred_region
    _
  $region45: #{_device_forward.2} parent=0 // pred_fallthru
    _
  %v41 = vld [vmem:[%s1] sm:$0xff]
  %v42 = vld [vmem:[%s0] sm:$0xf]
  %v43 = vld [vmem:[%s0 + $0x4] sm:$0xf]
  %v44 = vld [vmem:[%s0 + $0x8] sm:$0xf]
  %v45 = vld [vmem:[%s0 + $0xc] sm:$0xf]
  %v46 = vld [vmem:[%s0 + $0x10] sm:$0xf]
  %v47 = vld [vmem:[%s0 + $0x14] sm:$0xf]
  %v48 = vld [vmem:[%s0 + $0x18] sm:$0xf]
  %v49 = vld [vmem:[%s0 + $0x1c] sm:$0xf]
  %v50 = vld [vmem:[%s2] sm:$0xf]
  %v51 = vld [vmem:[%s2 + $0x4] sm:$0xf]
  %v52 = vld [vmem:[%s2 + $0x8] sm:$0xf]
  %v53 = vld [vmem:[%s2 + $0xc] sm:$0xf]
  %v54 = vld [vmem:[%s3] sm:$0xf]
  %v55 = vld [vmem:[%s3 + $0x4] sm:$0xf]
  %v56 = vld [vmem:[%s3 + $0x8] sm:$0xf]
  %v57 = vld [vmem:[%s3 + $0xc] sm:$0xf]
  %v58 = vld [vmem:[%s4] sm:$0x1]
  %v60 = vlaneseq
  %v61 = vshrl.u32 %v60, 7
  %v62 = vsub.s32 0, %v61
  %v63 = vrot.slane %v58, %v62
  %v73 = vunpack.c.l.b16 %v42
  %v74 = vunpack.c.l.b16 %v43
  %v75 = vunpack.c.l.b16 %v44
  %v76 = vunpack.c.l.b16 %v45
  %v77 = vunpack.c.l.b16 %v46
  %v78 = vunpack.c.l.b16 %v47
  %v79 = vunpack.c.l.b16 %v48
  %v80 = vunpack.c.l.b16 %v49
  %v81 = vpack.c.b16 %v74, %v73
  %v82 = vpack.c.b16 %v76, %v75
  %v83 = vpack.c.b16 %v78, %v77
  %v84 = vpack.c.b16 %v80, %v79
  %v89 = vunpack.c.l.b16 %v50
  %v90 = vunpack.c.l.b16 %v51
  %v91 = vunpack.c.l.b16 %v52
  %v92 = vunpack.c.l.b16 %v53
  %v93 = vpack.c.b16 %v90, %v89
  %v94 = vpack.c.b16 %v92, %v91
  %vm97 = vcmask 261120
  %v99 = vsel %vm97, %v81, 0
  %v102 = vsel %vm97, %v82, 0
  %v105 = vsel %vm97, %v83, 0
  %v108 = vsel %vm97, %v84, 0
  %110 = vmatprep.subr.bf16.mxu0 0
  %111 = vmatpush1.bf16.msra.mxu0 0
  %112 = vmatprep.subr.bf16.mxu0 0
  %113 = vmatpush1.bf16.msra.mxu0 0
  %114 = vmatprep.subr.bf16.mxu0 0
  %115 = vmatpush1.bf16.msra.mxu0 0
  %116 = vmatprep.subr.bf16.mxu0 0
  %117 = vmatpush1.bf16.msra.mxu0 0
  %118 = vmatprep.subr.bf16.mxu0 0
  %119 = vmatpush1.bf16.msra.mxu0 0
  %120 = vmatprep.subr.bf16.mxu0 0
  %121 = vmatpush1.bf16.msra.mxu0 0
  %122 = vmatprep.subr.bf16.mxu0 0
  %123 = vmatpush1.bf16.msra.mxu0 %v94
  %124 = vmatprep.subr.bf16.mxu0 0
  %125 = vmatpush1.bf16.msra.mxu0 %v93
  %126 = vmatprep.subr.bf16.mxu0 0
  %127 = vmatpush2.bf16.msra.mxu0 0
  %128 = vmatprep.subr.bf16.mxu0 0
  %129 = vmatpush2.bf16.msra.mxu0 0
  %130 = vmatprep.subr.bf16.mxu0 0
  %131 = vmatpush2.bf16.msra.mxu0 0
  %132 = vmatprep.subr.bf16.mxu0 0
  %133 = vmatpush2.bf16.msra.mxu0 0
  %134 = vmatprep.subr.bf16.mxu0 0
  %135 = vmatpush2.bf16.msra.mxu0 0
  %136 = vmatprep.subr.bf16.mxu0 0
  %137 = vmatpush2.bf16.msra.mxu0 0
  %138 = vmatprep.subr.bf16.mxu0 0
  %139 = vmatpush2.bf16.msra.mxu0 0
  %140 = vmatprep.subr.bf16.mxu0 0
  %141 = vmatpush2.bf16.msra.mxu0 0
  %142 = vmatprep.mubr.bf16.mxu0 0
  %143 = vmatmul.mubr.bf16.gmra.mxu0 %v99
  %v144 = vpop.f32.mrf.mxu0
  %v145 = vadd.f32 %v63, %v144
  %v146 = vpop.f32.mrf.mxu0
  %v147 = vpop.f32.mrf.mxu0
  %v148 = vadd.f32 %v63, %v147
  %v149 = vpop.f32.mrf.mxu0
  %150 = vmatprep.mubr.bf16.mxu0 0
  %151 = vmatmul.mubr.bf16.gmra.mxu0 %v102
  %v152 = vpop.f32.mrf.mxu0
  %v153 = vadd.f32 %v63, %v152
  %v154 = vpop.f32.mrf.mxu0
  %v155 = vpop.f32.mrf.mxu0
  %v156 = vadd.f32 %v63, %v155
  %v157 = vpop.f32.mrf.mxu0
  %158 = vmatprep.mubr.bf16.mxu0 0
  %159 = vmatmul.mubr.bf16.gmra.mxu0 %v105
  %v160 = vpop.f32.mrf.mxu0
  %v161 = vadd.f32 %v63, %v160
  %v162 = vpop.f32.mrf.mxu0
  %v163 = vpop.f32.mrf.mxu0
  %v164 = vadd.f32 %v63, %v163
  %v165 = vpop.f32.mrf.mxu0
  %166 = vmatprep.mubr.bf16.mxu0 0
  %167 = vmatmul.mubr.bf16.gmra.mxu0 %v108
  %v168 = vpop.f32.mrf.mxu0
  %v169 = vadd.f32 %v63, %v168
  %v170 = vpop.f32.mrf.mxu0
  %v171 = vpop.f32.mrf.mxu0
  %v172 = vadd.f32 %v63, %v171
  %v173 = vpop.f32.mrf.mxu0
  %174 = vdwg.mxu0
  %v175 = vlaneseq
  %v176 = vand.u32 %v175, 127
  %vm177 = vcmp.ge.s32.totalorder %v176, 64
  %vm178 = vcmp.lt.s32.totalorder %v176, 96
  %vm179 = vmand %vm177, %vm178
  %v184 = vunpack.c.l.b16 %v54
  %v185 = vunpack.c.l.b16 %v55
  %v186 = vunpack.c.l.b16 %v56
  %v187 = vunpack.c.l.b16 %v57
  %v188 = vpack.c.b16 %v185, %v184
  %v189 = vpack.c.b16 %v187, %v186
  %v193 = vsel %vm97, 0, 0
  %195 = vmatprep.subr.bf16.mxu0 0
  %196 = vmatpush1.bf16.msra.mxu0 0
  %197 = vmatprep.subr.bf16.mxu0 0
  %198 = vmatpush1.bf16.msra.mxu0 0
  %199 = vmatprep.subr.bf16.mxu0 0
  %200 = vmatpush1.bf16.msra.mxu0 0
  %201 = vmatprep.subr.bf16.mxu0 0
  %202 = vmatpush1.bf16.msra.mxu0 0
  %203 = vmatprep.subr.bf16.mxu0 0
  %204 = vmatpush1.bf16.msra.mxu0 0
  %205 = vmatprep.subr.bf16.mxu0 0
  %206 = vmatpush1.bf16.msra.mxu0 0
  %207 = vmatprep.subr.bf16.mxu0 0
  %208 = vmatpush1.bf16.msra.mxu0 %v189
  %209 = vmatprep.subr.bf16.mxu0 0
  %210 = vmatpush1.bf16.msra.mxu0 %v188
  %211 = vmatprep.subr.bf16.mxu0 0
  %212 = vmatpush2.bf16.msra.mxu0 0
  %213 = vmatprep.subr.bf16.mxu0 0
  %214 = vmatpush2.bf16.msra.mxu0 0
  %215 = vmatprep.subr.bf16.mxu0 0
  %216 = vmatpush2.bf16.msra.mxu0 0
  %217 = vmatprep.subr.bf16.mxu0 0
  %218 = vmatpush2.bf16.msra.mxu0 0
  %219 = vmatprep.subr.bf16.mxu0 0
  %220 = vmatpush2.bf16.msra.mxu0 0
  %221 = vmatprep.subr.bf16.mxu0 0
  %222 = vmatpush2.bf16.msra.mxu0 0
  %223 = vmatprep.subr.bf16.mxu0 0
  %224 = vmatpush2.bf16.msra.mxu0 0
  %225 = vmatprep.subr.bf16.mxu0 0
  %226 = vmatpush2.bf16.msra.mxu0 0
  %227 = vmatprep.mubr.bf16.mxu0 0
  %228 = vmatmul.mubr.bf16.gmra.mxu0 %v193
  %v229 = vpop.f32.mrf.mxu0
  %v230 = vadd.f32 0.0, %v229
  %v231 = vpop.f32.mrf.mxu0
  %v232 = vpop.f32.mrf.mxu0
  %v233 = vpop.f32.mrf.mxu0
  %234 = vdwg.mxu0
  %v235 = vadd.f32 %v145, %v230
  %v236 = vtanh.pop %v235
  %v237 = vxor.u32 %v235, 2147483648
  %v238 = vmul.f32 %v237, 1.442695
  %v239 = vpow.pop %v238
  %v240 = vadd.f32 %v239, 1.0
  %v241 = vrcp.pop %v240
  %v242 = vmul.f32 1.0, %v241
  %v243 = vsel %vm179, %v236, %v242
  %v244 = vmul.f32 %v243, 0.0
  %246 = vrot.lane.b32.xlu0 %v243, 64
  %v247 = vpop.permute.xlu0 %246
  %v249 = vmul.f32 %v243, %v247
  %251 = vrot.lane.b32.xlu0 %v249, 32
  %v252 = vpop.permute.xlu0 %251
  %v254 = vadd.f32 %v244, %v252
  %v255 = vtanh.pop %v254
  %257 = vrot.lane.b32.xlu0 %v255, 64
  %v258 = vpop.permute.xlu0 %257
  %v260 = vmul.f32 %v243, %v258
  %vm261 = vcmp.gt.f32.partialorder %v41, 0.0
  %v262 = vsel %vm261, 1, 0
  %v263 = vcvt.s32.f32 %v262
  %265 = vset.pattern.permute.xlu0 0
  %266 = vperm.xlu0 %265, %v263
  %v267 = vpop.permute.xlu0 %266
  %v269 = vmul.f32 %v267, %v254
  %v270 = vsub.f32 1.0, %v263
  %272 = vset.pattern.permute.xlu0 0
  %273 = vperm.xlu0 %272, %v270
  %v274 = vpop.permute.xlu0 %273
  %v276 = vmul.f32 %v274, 0.0
  %v277 = vadd.f32 %v269, %v276
  %v278 = vmul.f32 %v267, %v260
  %v279 = vadd.f32 %v278, %v276
  %v280 = vmul.f32 %v279, %v267
  %282 = vrot.lane.b32.xlu0 %v280, 32
  %v283 = vpop.permute.xlu0 %282
  %285 = vst.msk [vmem:[#allocation2] sm:$0xff] %vm97, %v283
  %v286 = vpack.c.bf16 %v279, %v279
  %288 = vrot.lane.b32.xlu0 %v286, 32
  %v289 = vpop.permute.xlu0 %288
  %v291 = vsel %vm97, %v289, 0
  %293 = vmatprep.subr.bf16.mxu0 0
  %294 = vmatpush1.bf16.msra.mxu0 0
  %295 = vmatprep.subr.bf16.mxu0 0
  %296 = vmatpush1.bf16.msra.mxu0 0
  %297 = vmatprep.subr.bf16.mxu0 0
  %298 = vmatpush1.bf16.msra.mxu0 0
  %299 = vmatprep.subr.bf16.mxu0 0
  %300 = vmatpush1.bf16.msra.mxu0 0
  %301 = vmatprep.subr.bf16.mxu0 0
  %302 = vmatpush1.bf16.msra.mxu0 0
  %303 = vmatprep.subr.bf16.mxu0 0
  %304 = vmatpush1.bf16.msra.mxu0 0
  %305 = vmatprep.subr.bf16.mxu0 0
  %306 = vmatpush1.bf16.msra.mxu0 %v189
  %307 = vmatprep.subr.bf16.mxu0 0
  %308 = vmatpush1.bf16.msra.mxu0 %v188
  %309 = vmatprep.subr.bf16.mxu0 0
  %310 = vmatpush2.bf16.msra.mxu0 0
  %311 = vmatprep.subr.bf16.mxu0 0
  %312 = vmatpush2.bf16.msra.mxu0 0
  %313 = vmatprep.subr.bf16.mxu0 0
  %314 = vmatpush2.bf16.msra.mxu0 0
  %315 = vmatprep.subr.bf16.mxu0 0
  %316 = vmatpush2.bf16.msra.mxu0 0
  %317 = vmatprep.subr.bf16.mxu0 0
  %318 = vmatpush2.bf16.msra.mxu0 0
  %319 = vmatprep.subr.bf16.mxu0 0
  %320 = vmatpush2.bf16.msra.mxu0 0
  %321 = vmatprep.subr.bf16.mxu0 0
  %322 = vmatpush2.bf16.msra.mxu0 0
  %323 = vmatprep.subr.bf16.mxu0 0
  %324 = vmatpush2.bf16.msra.mxu0 0
  %325 = vmatprep.mubr.bf16.mxu0 0
  %326 = vmatmul.mubr.bf16.gmra.mxu0 %v291
  %v327 = vpop.f32.mrf.mxu0
  %v328 = vadd.f32 0.0, %v327
  %v329 = vpop.f32.mrf.mxu0
  %v330 = vpop.f32.mrf.mxu0
  %v331 = vpop.f32.mrf.mxu0
  %332 = vdwg.mxu0
  %v333 = vadd.f32 %v148, %v328
  %v334 = vtanh.pop %v333
  %v335 = vxor.u32 %v333, 2147483648
  %v336 = vmul.f32 %v335, 1.442695
  %v337 = vpow.pop %v336
  %v338 = vadd.f32 %v337, 1.0
  %v339 = vrcp.pop %v338
  %v340 = vmul.f32 1.0, %v339
  %v341 = vsel %vm179, %v334, %v340
  %v342 = vmul.f32 %v341, %v277
  %344 = vrot.lane.b32.xlu0 %v341, 64
  %v345 = vpop.permute.xlu0 %344
  %v347 = vmul.f32 %v341, %v345
  %349 = vrot.lane.b32.xlu0 %v347, 32
  %v350 = vpop.permute.xlu0 %349
  %v352 = vadd.f32 %v342, %v350
  %v353 = vtanh.pop %v352
  %355 = vrot.lane.b32.xlu0 %v353, 64
  %v356 = vpop.permute.xlu0 %355
  %v358 = vmul.f32 %v341, %v356
  %vm359 = vcmp.gt.f32.partialorder %v41, 1.0
  %v360 = vsel %vm359, 1, 0
  %v361 = vcvt.s32.f32 %v360
  %363 = vset.pattern.permute.xlu0 0
  %364 = vperm.xlu0 %363, %v361
  %v365 = vpop.permute.xlu0 %364
  %v367 = vmul.f32 %v365, %v352
  %v368 = vsub.f32 1.0, %v361
  %370 = vset.pattern.permute.xlu0 0
  %371 = vperm.xlu0 %370, %v368
  %v372 = vpop.permute.xlu0 %371
  %v374 = vmul.f32 %v372, %v277
  %v375 = vadd.f32 %v367, %v374
  %v376 = vmul.f32 %v365, %v358
  %v377 = vmul.f32 %v372, %v279
  %v378 = vadd.f32 %v376, %v377
  %v379 = vmul.f32 %v378, %v365
  %381 = vrot.lane.b32.xlu0 %v379, 32
  %v382 = vpop.permute.xlu0 %381
  %384 = vst.msk [vmem:[#allocation2 + $0x8] sm:$0xff] %vm97, %v382
  %v385 = vpack.c.bf16 %v378, %v378
  %387 = vrot.lane.b32.xlu0 %v385, 32
  %v388 = vpop.permute.xlu0 %387
  %v390 = vsel %vm97, %v388, 0
  %392 = vmatprep.subr.bf16.mxu0 0
  %393 = vmatpush1.bf16.msra.mxu0 0
  %394 = vmatprep.subr.bf16.mxu0 0
  %395 = vmatpush1.bf16.msra.mxu0 0
  %396 = vmatprep.subr.bf16.mxu0 0
  %397 = vmatpush1.bf16.msra.mxu0 0
  %398 = vmatprep.subr.bf16.mxu0 0
  %399 = vmatpush1.bf16.msra.mxu0 0
  %400 = vmatprep.subr.bf16.mxu0 0
  %401 = vmatpush1.bf16.msra.mxu0 0
  %402 = vmatprep.subr.bf16.mxu0 0
  %403 = vmatpush1.bf16.msra.mxu0 0
  %404 = vmatprep.subr.bf16.mxu0 0
  %405 = vmatpush1.bf16.msra.mxu0 %v189
  %406 = vmatprep.subr.bf16.mxu0 0
  %407 = vmatpush1.bf16.msra.mxu0 %v188
  %408 = vmatprep.subr.bf16.mxu0 0
  %409 = vmatpush2.bf16.msra.mxu0 0
  %410 = vmatprep.subr.bf16.mxu0 0
  %411 = vmatpush2.bf16.msra.mxu0 0
  %412 = vmatprep.subr.bf16.mxu0 0
  %413 = vmatpush2.bf16.msra.mxu0 0
  %414 = vmatprep.subr.bf16.mxu0 0
  %415 = vmatpush2.bf16.msra.mxu0 0
  %416 = vmatprep.subr.bf16.mxu0 0
  %417 = vmatpush2.bf16.msra.mxu0 0
  %418 = vmatprep.subr.bf16.mxu0 0
  %419 = vmatpush2.bf16.msra.mxu0 0
  %420 = vmatprep.subr.bf16.mxu0 0
  %421 = vmatpush2.bf16.msra.mxu0 0
  %422 = vmatprep.subr.bf16.mxu0 0
  %423 = vmatpush2.bf16.msra.mxu0 0
  %424 = vmatprep.mubr.bf16.mxu0 0
  %425 = vmatmul.mubr.bf16.gmra.mxu0 %v390
  %v426 = vpop.f32.mrf.mxu0
  %v427 = vadd.f32 0.0, %v426
  %v428 = vpop.f32.mrf.mxu0
  %v429 = vpop.f32.mrf.mxu0
  %v430 = vpop.f32.mrf.mxu0
  %431 = vdwg.mxu0
  %v432 = vadd.f32 %v153, %v427
  %v433 = vtanh.pop %v432
  %v434 = vxor.u32 %v432, 2147483648
  %v435 = vmul.f32 %v434, 1.442695
  %v436 = vpow.pop %v435
  %v437 = vadd.f32 %v436, 1.0
  %v438 = vrcp.pop %v437
  %v439 = vmul.f32 1.0, %v438
  %v440 = vsel %vm179, %v433, %v439
  %v441 = vmul.f32 %v440, %v375
  %443 = vrot.lane.b32.xlu0 %v440, 64
  %v444 = vpop.permute.xlu0 %443
  %v446 = vmul.f32 %v440, %v444
  %448 = vrot.lane.b32.xlu0 %v446, 32
  %v449 = vpop.permute.xlu0 %448
  %v451 = vadd.f32 %v441, %v449
  %v452 = vtanh.pop %v451
  %454 = vrot.lane.b32.xlu0 %v452, 64
  %v455 = vpop.permute.xlu0 %454
  %v457 = vmul.f32 %v440, %v455
  %vm458 = vcmp.gt.f32.partialorder %v41, 2.0
  %v459 = vsel %vm458, 1, 0
  %v460 = vcvt.s32.f32 %v459
  %462 = vset.pattern.permute.xlu0 0
  %463 = vperm.xlu0 %462, %v460
  %v464 = vpop.permute.xlu0 %463
  %v466 = vmul.f32 %v464, %v451
  %v467 = vsub.f32 1.0, %v460
  %469 = vset.pattern.permute.xlu0 0
  %470 = vperm.xlu0 %469, %v467
  %v471 = vpop.permute.xlu0 %470
  %v473 = vmul.f32 %v471, %v375
  %v474 = vadd.f32 %v466, %v473
  %v475 = vmul.f32 %v464, %v457
  %v476 = vmul.f32 %v471, %v378
  %v477 = vadd.f32 %v475, %v476
  %v478 = vmul.f32 %v477, %v464
  %480 = vrot.lane.b32.xlu0 %v478, 32
  %v481 = vpop.permute.xlu0 %480
  %483 = vst.msk [vmem:[#allocation2 + $0x10] sm:$0xff] %vm97, %v481
  %v484 = vpack.c.bf16 %v477, %v477
  %486 = vrot.lane.b32.xlu0 %v484, 32
  %v487 = vpop.permute.xlu0 %486
  %v489 = vsel %vm97, %v487, 0
  %491 = vmatprep.subr.bf16.mxu0 0
  %492 = vmatpush1.bf16.msra.mxu0 0
  %493 = vmatprep.subr.bf16.mxu0 0
  %494 = vmatpush1.bf16.msra.mxu0 0
  %495 = vmatprep.subr.bf16.mxu0 0
  %496 = vmatpush1.bf16.msra.mxu0 0
  %497 = vmatprep.subr.bf16.mxu0 0
  %498 = vmatpush1.bf16.msra.mxu0 0
  %499 = vmatprep.subr.bf16.mxu0 0
  %500 = vmatpush1.bf16.msra.mxu0 0
  %501 = vmatprep.subr.bf16.mxu0 0
  %502 = vmatpush1.bf16.msra.mxu0 0
  %503 = vmatprep.subr.bf16.mxu0 0
  %504 = vmatpush1.bf16.msra.mxu0 %v189
  %505 = vmatprep.subr.bf16.mxu0 0
  %506 = vmatpush1.bf16.msra.mxu0 %v188
  %507 = vmatprep.subr.bf16.mxu0 0
  %508 = vmatpush2.bf16.msra.mxu0 0
  %509 = vmatprep.subr.bf16.mxu0 0
  %510 = vmatpush2.bf16.msra.mxu0 0
  %511 = vmatprep.subr.bf16.mxu0 0
  %512 = vmatpush2.bf16.msra.mxu0 0
  %513 = vmatprep.subr.bf16.mxu0 0
  %514 = vmatpush2.bf16.msra.mxu0 0
  %515 = vmatprep.subr.bf16.mxu0 0
  %516 = vmatpush2.bf16.msra.mxu0 0
  %517 = vmatprep.subr.bf16.mxu0 0
  %518 = vmatpush2.bf16.msra.mxu0 0
  %519 = vmatprep.subr.bf16.mxu0 0
  %520 = vmatpush2.bf16.msra.mxu0 0
  %521 = vmatprep.subr.bf16.mxu0 0
  %522 = vmatpush2.bf16.msra.mxu0 0
  %523 = vmatprep.mubr.bf16.mxu0 0
  %524 = vmatmul.mubr.bf16.gmra.mxu0 %v489
  %v525 = vpop.f32.mrf.mxu0
  %v526 = vadd.f32 0.0, %v525
  %v527 = vpop.f32.mrf.mxu0
  %v528 = vpop.f32.mrf.mxu0
  %v529 = vpop.f32.mrf.mxu0
  %530 = vdwg.mxu0
  %v531 = vadd.f32 %v156, %v526
  %v532 = vtanh.pop %v531
  %v533 = vxor.u32 %v531, 2147483648
  %v534 = vmul.f32 %v533, 1.442695
  %v535 = vpow.pop %v534
  %v536 = vadd.f32 %v535, 1.0
  %v537 = vrcp.pop %v536
  %v538 = vmul.f32 1.0, %v537
  %v539 = vsel %vm179, %v532, %v538
  %v540 = vmul.f32 %v539, %v474
  %542 = vrot.lane.b32.xlu0 %v539, 64
  %v543 = vpop.permute.xlu0 %542
  %v545 = vmul.f32 %v539, %v543
  %547 = vrot.lane.b32.xlu0 %v545, 32
  %v548 = vpop.permute.xlu0 %547
  %v550 = vadd.f32 %v540, %v548
  %v551 = vtanh.pop %v550
  %553 = vrot.lane.b32.xlu0 %v551, 64
  %v554 = vpop.permute.xlu0 %553
  %v556 = vmul.f32 %v539, %v554
  %vm557 = vcmp.gt.f32.partialorder %v41, 3.0
  %v558 = vsel %vm557, 1, 0
  %v559 = vcvt.s32.f32 %v558
  %561 = vset.pattern.permute.xlu0 0
  %562 = vperm.xlu0 %561, %v559
  %v563 = vpop.permute.xlu0 %562
  %v565 = vmul.f32 %v563, %v550
  %v566 = vsub.f32 1.0, %v559
  %568 = vset.pattern.permute.xlu0 0
  %569 = vperm.xlu0 %568, %v566
  %v570 = vpop.permute.xlu0 %569
  %v572 = vmul.f32 %v570, %v474
  %v573 = vadd.f32 %v565, %v572
  %v574 = vmul.f32 %v563, %v556
  %v575 = vmul.f32 %v570, %v477
  %v576 = vadd.f32 %v574, %v575
  %v577 = vmul.f32 %v576, %v563
  %579 = vrot.lane.b32.xlu0 %v577, 32
  %v580 = vpop.permute.xlu0 %579
  %582 = vst.msk [vmem:[#allocation2 + $0x18] sm:$0xff] %vm97, %v580
  %v583 = vpack.c.bf16 %v576, %v576
  %585 = vrot.lane.b32.xlu0 %v583, 32
  %v586 = vpop.permute.xlu0 %585
  %v588 = vsel %vm97, %v586, 0
  %590 = vmatprep.subr.bf16.mxu0 0
  %591 = vmatpush1.bf16.msra.mxu0 0
  %592 = vmatprep.subr.bf16.mxu0 0
  %593 = vmatpush1.bf16.msra.mxu0 0
  %594 = vmatprep.subr.bf16.mxu0 0
  %595 = vmatpush1.bf16.msra.mxu0 0
  %596 = vmatprep.subr.bf16.mxu0 0
  %597 = vmatpush1.bf16.msra.mxu0 0
  %598 = vmatprep.subr.bf16.mxu0 0
  %599 = vmatpush1.bf16.msra.mxu0 0
  %600 = vmatprep.subr.bf16.mxu0 0
  %601 = vmatpush1.bf16.msra.mxu0 0
  %602 = vmatprep.subr.bf16.mxu0 0
  %603 = vmatpush1.bf16.msra.mxu0 %v189
  %604 = vmatprep.subr.bf16.mxu0 0
  %605 = vmatpush1.bf16.msra.mxu0 %v188
  %606 = vmatprep.subr.bf16.mxu0 0
  %607 = vmatpush2.bf16.msra.mxu0 0
  %608 = vmatprep.subr.bf16.mxu0 0
  %609 = vmatpush2.bf16.msra.mxu0 0
  %610 = vmatprep.subr.bf16.mxu0 0
  %611 = vmatpush2.bf16.msra.mxu0 0
  %612 = vmatprep.subr.bf16.mxu0 0
  %613 = vmatpush2.bf16.msra.mxu0 0
  %614 = vmatprep.subr.bf16.mxu0 0
  %615 = vmatpush2.bf16.msra.mxu0 0
  %616 = vmatprep.subr.bf16.mxu0 0
  %617 = vmatpush2.bf16.msra.mxu0 0
  %618 = vmatprep.subr.bf16.mxu0 0
  %619 = vmatpush2.bf16.msra.mxu0 0
  %620 = vmatprep.subr.bf16.mxu0 0
  %621 = vmatpush2.bf16.msra.mxu0 0
  %622 = vmatprep.mubr.bf16.mxu0 0
  %623 = vmatmul.mubr.bf16.gmra.mxu0 %v588
  %v624 = vpop.f32.mrf.mxu0
  %v625 = vadd.f32 0.0, %v624
  %v626 = vpop.f32.mrf.mxu0
  %v627 = vpop.f32.mrf.mxu0
  %v628 = vpop.f32.mrf.mxu0
  %629 = vdwg.mxu0
  %v630 = vadd.f32 %v161, %v625
  %v631 = vtanh.pop %v630
  %v632 = vxor.u32 %v630, 2147483648
  %v633 = vmul.f32 %v632, 1.442695
  %v634 = vpow.pop %v633
  %v635 = vadd.f32 %v634, 1.0
  %v636 = vrcp.pop %v635
  %v637 = vmul.f32 1.0, %v636
  %v638 = vsel %vm179, %v631, %v637
  %v639 = vmul.f32 %v638, %v573
  %641 = vrot.lane.b32.xlu0 %v638, 64
  %v642 = vpop.permute.xlu0 %641
  %v644 = vmul.f32 %v638, %v642
  %646 = vrot.lane.b32.xlu0 %v644, 32
  %v647 = vpop.permute.xlu0 %646
  %v649 = vadd.f32 %v639, %v647
  %v650 = vtanh.pop %v649
  %652 = vrot.lane.b32.xlu0 %v650, 64
  %v653 = vpop.permute.xlu0 %652
  %v655 = vmul.f32 %v638, %v653
  %vm656 = vcmp.gt.f32.partialorder %v41, 4.0
  %v657 = vsel %vm656, 1, 0
  %v658 = vcvt.s32.f32 %v657
  %660 = vset.pattern.permute.xlu0 0
  %661 = vperm.xlu0 %660, %v658
  %v662 = vpop.permute.xlu0 %661
  %v664 = vmul.f32 %v662, %v649
  %v665 = vsub.f32 1.0, %v658
  %667 = vset.pattern.permute.xlu0 0
  %668 = vperm.xlu0 %667, %v665
  %v669 = vpop.permute.xlu0 %668
  %v671 = vmul.f32 %v669, %v573
  %v672 = vadd.f32 %v664, %v671
  %v673 = vmul.f32 %v662, %v655
  %v674 = vmul.f32 %v669, %v576
  %v675 = vadd.f32 %v673, %v674
  %v676 = vmul.f32 %v675, %v662
  %678 = vrot.lane.b32.xlu0 %v676, 32
  %v679 = vpop.permute.xlu0 %678
  %681 = vst.msk [vmem:[#allocation2 + $0x20] sm:$0xff] %vm97, %v679
  %v682 = vpack.c.bf16 %v675, %v675
  %684 = vrot.lane.b32.xlu0 %v682, 32
  %v685 = vpop.permute.xlu0 %684
  %v687 = vsel %vm97, %v685, 0
  %689 = vmatprep.subr.bf16.mxu0 0
  %690 = vmatpush1.bf16.msra.mxu0 0
  %691 = vmatprep.subr.bf16.mxu0 0
  %692 = vmatpush1.bf16.msra.mxu0 0
  %693 = vmatprep.subr.bf16.mxu0 0
  %694 = vmatpush1.bf16.msra.mxu0 0
  %695 = vmatprep.subr.bf16.mxu0 0
  %696 = vmatpush1.bf16.msra.mxu0 0
  %697 = vmatprep.subr.bf16.mxu0 0
  %698 = vmatpush1.bf16.msra.mxu0 0
  %699 = vmatprep.subr.bf16.mxu0 0
  %700 = vmatpush1.bf16.msra.mxu0 0
  %701 = vmatprep.subr.bf16.mxu0 0
  %702 = vmatpush1.bf16.msra.mxu0 %v189
  %703 = vmatprep.subr.bf16.mxu0 0
  %704 = vmatpush1.bf16.msra.mxu0 %v188
  %705 = vmatprep.subr.bf16.mxu0 0
  %706 = vmatpush2.bf16.msra.mxu0 0
  %707 = vmatprep.subr.bf16.mxu0 0
  %708 = vmatpush2.bf16.msra.mxu0 0
  %709 = vmatprep.subr.bf16.mxu0 0
  %710 = vmatpush2.bf16.msra.mxu0 0
  %711 = vmatprep.subr.bf16.mxu0 0
  %712 = vmatpush2.bf16.msra.mxu0 0
  %713 = vmatprep.subr.bf16.mxu0 0
  %714 = vmatpush2.bf16.msra.mxu0 0
  %715 = vmatprep.subr.bf16.mxu0 0
  %716 = vmatpush2.bf16.msra.mxu0 0
  %717 = vmatprep.subr.bf16.mxu0 0
  %718 = vmatpush2.bf16.msra.mxu0 0
  %719 = vmatprep.subr.bf16.mxu0 0
  %720 = vmatpush2.bf16.msra.mxu0 0
  %721 = vmatprep.mubr.bf16.mxu0 0
  %722 = vmatmul.mubr.bf16.gmra.mxu0 %v687
  %v723 = vpop.f32.mrf.mxu0
  %v724 = vadd.f32 0.0, %v723
  %v725 = vpop.f32.mrf.mxu0
  %v726 = vpop.f32.mrf.mxu0
  %v727 = vpop.f32.mrf.mxu0
  %728 = vdwg.mxu0
  %v729 = vadd.f32 %v164, %v724
  %v730 = vtanh.pop %v729
  %v731 = vxor.u32 %v729, 2147483648
  %v732 = vmul.f32 %v731, 1.442695
  %v733 = vpow.pop %v732
  %v734 = vadd.f32 %v733, 1.0
  %v735 = vrcp.pop %v734
  %v736 = vmul.f32 1.0, %v735
  %v737 = vsel %vm179, %v730, %v736
  %v738 = vmul.f32 %v737, %v672
  %740 = vrot.lane.b32.xlu0 %v737, 64
  %v741 = vpop.permute.xlu0 %740
  %v743 = vmul.f32 %v737, %v741
  %745 = vrot.lane.b32.xlu0 %v743, 32
  %v746 = vpop.permute.xlu0 %745
  %v748 = vadd.f32 %v738, %v746
  %v749 = vtanh.pop %v748
  %751 = vrot.lane.b32.xlu0 %v749, 64
  %v752 = vpop.permute.xlu0 %751
  %v754 = vmul.f32 %v737, %v752
  %vm755 = vcmp.gt.f32.partialorder %v41, 5.0
  %v756 = vsel %vm755, 1, 0
  %v757 = vcvt.s32.f32 %v756
  %759 = vset.pattern.permute.xlu0 0
  %760 = vperm.xlu0 %759, %v757
  %v761 = vpop.permute.xlu0 %760
  %v763 = vmul.f32 %v761, %v748
  %v764 = vsub.f32 1.0, %v757
  %766 = vset.pattern.permute.xlu0 0
  %767 = vperm.xlu0 %766, %v764
  %v768 = vpop.permute.xlu0 %767
  %v770 = vmul.f32 %v768, %v672
  %v771 = vadd.f32 %v763, %v770
  %v772 = vmul.f32 %v761, %v754
  %v773 = vmul.f32 %v768, %v675
  %v774 = vadd.f32 %v772, %v773
  %v775 = vmul.f32 %v774, %v761
  %777 = vrot.lane.b32.xlu0 %v775, 32
  %v778 = vpop.permute.xlu0 %777
  %780 = vst.msk [vmem:[#allocation2 + $0x28] sm:$0xff] %vm97, %v778
  %v781 = vpack.c.bf16 %v774, %v774
  %783 = vrot.lane.b32.xlu0 %v781, 32
  %v784 = vpop.permute.xlu0 %783
  %v786 = vsel %vm97, %v784, 0
  %788 = vmatprep.subr.bf16.mxu0 0
  %789 = vmatpush1.bf16.msra.mxu0 0
  %790 = vmatprep.subr.bf16.mxu0 0
  %791 = vmatpush1.bf16.msra.mxu0 0
  %792 = vmatprep.subr.bf16.mxu0 0
  %793 = vmatpush1.bf16.msra.mxu0 0
  %794 = vmatprep.subr.bf16.mxu0 0
  %795 = vmatpush1.bf16.msra.mxu0 0
  %796 = vmatprep.subr.bf16.mxu0 0
  %797 = vmatpush1.bf16.msra.mxu0 0
  %798 = vmatprep.subr.bf16.mxu0 0
  %799 = vmatpush1.bf16.msra.mxu0 0
  %800 = vmatprep.subr.bf16.mxu0 0
  %801 = vmatpush1.bf16.msra.mxu0 %v189
  %802 = vmatprep.subr.bf16.mxu0 0
  %803 = vmatpush1.bf16.msra.mxu0 %v188
  %804 = vmatprep.subr.bf16.mxu0 0
  %805 = vmatpush2.bf16.msra.mxu0 0
  %806 = vmatprep.subr.bf16.mxu0 0
  %807 = vmatpush2.bf16.msra.mxu0 0
  %808 = vmatprep.subr.bf16.mxu0 0
  %809 = vmatpush2.bf16.msra.mxu0 0
  %810 = vmatprep.subr.bf16.mxu0 0
  %811 = vmatpush2.bf16.msra.mxu0 0
  %812 = vmatprep.subr.bf16.mxu0 0
  %813 = vmatpush2.bf16.msra.mxu0 0
  %814 = vmatprep.subr.bf16.mxu0 0
  %815 = vmatpush2.bf16.msra.mxu0 0
  %816 = vmatprep.subr.bf16.mxu0 0
  %817 = vmatpush2.bf16.msra.mxu0 0
  %818 = vmatprep.subr.bf16.mxu0 0
  %819 = vmatpush2.bf16.msra.mxu0 0
  %820 = vmatprep.mubr.bf16.mxu0 0
  %821 = vmatmul.mubr.bf16.gmra.mxu0 %v786
  %v822 = vpop.f32.mrf.mxu0
  %v823 = vadd.f32 0.0, %v822
  %v824 = vpop.f32.mrf.mxu0
  %v825 = vpop.f32.mrf.mxu0
  %v826 = vpop.f32.mrf.mxu0
  %827 = vdwg.mxu0
  %v828 = vadd.f32 %v169, %v823
  %v829 = vtanh.pop %v828
  %v830 = vxor.u32 %v828, 2147483648
  %v831 = vmul.f32 %v830, 1.442695
  %v832 = vpow.pop %v831
  %v833 = vadd.f32 %v832, 1.0
  %v834 = vrcp.pop %v833
  %v835 = vmul.f32 1.0, %v834
  %v836 = vsel %vm179, %v829, %v835
  %v837 = vmul.f32 %v836, %v771
  %839 = vrot.lane.b32.xlu0 %v836, 64
  %v840 = vpop.permute.xlu0 %839
  %v842 = vmul.f32 %v836, %v840
  %844 = vrot.lane.b32.xlu0 %v842, 32
  %v845 = vpop.permute.xlu0 %844
  %v847 = vadd.f32 %v837, %v845
  %v848 = vtanh.pop %v847
  %850 = vrot.lane.b32.xlu0 %v848, 64
  %v851 = vpop.permute.xlu0 %850
  %v853 = vmul.f32 %v836, %v851
  %vm854 = vcmp.gt.f32.partialorder %v41, 6.0
  %v855 = vsel %vm854, 1, 0
  %v856 = vcvt.s32.f32 %v855
  %858 = vset.pattern.permute.xlu0 0
  %859 = vperm.xlu0 %858, %v856
  %v860 = vpop.permute.xlu0 %859
  %v862 = vmul.f32 %v860, %v847
  %v863 = vsub.f32 1.0, %v856
  %865 = vset.pattern.permute.xlu0 0
  %866 = vperm.xlu0 %865, %v863
  %v867 = vpop.permute.xlu0 %866
  %v869 = vmul.f32 %v867, %v771
  %v870 = vadd.f32 %v862, %v869
  %v871 = vmul.f32 %v860, %v853
  %v872 = vmul.f32 %v867, %v774
  %v873 = vadd.f32 %v871, %v872
  %v874 = vmul.f32 %v873, %v860
  %876 = vrot.lane.b32.xlu0 %v874, 32
  %v877 = vpop.permute.xlu0 %876
  %879 = vst.msk [vmem:[#allocation2 + $0x30] sm:$0xff] %vm97, %v877
  %v880 = vpack.c.bf16 %v873, %v873
  %882 = vrot.lane.b32.xlu0 %v880, 32
  %v883 = vpop.permute.xlu0 %882
  %v885 = vsel %vm97, %v883, 0
  %887 = vmatprep.subr.bf16.mxu0 0
  %888 = vmatpush1.bf16.msra.mxu0 0
  %889 = vmatprep.subr.bf16.mxu0 0
  %890 = vmatpush1.bf16.msra.mxu0 0
  %891 = vmatprep.subr.bf16.mxu0 0
  %892 = vmatpush1.bf16.msra.mxu0 0
  %893 = vmatprep.subr.bf16.mxu0 0
  %894 = vmatpush1.bf16.msra.mxu0 0
  %895 = vmatprep.subr.bf16.mxu0 0
  %896 = vmatpush1.bf16.msra.mxu0 0
  %897 = vmatprep.subr.bf16.mxu0 0
  %898 = vmatpush1.bf16.msra.mxu0 0
  %899 = vmatprep.subr.bf16.mxu0 0
  %900 = vmatpush1.bf16.msra.mxu0 %v189
  %901 = vmatprep.subr.bf16.mxu0 0
  %902 = vmatpush1.bf16.msra.mxu0 %v188
  %903 = vmatprep.subr.bf16.mxu0 0
  %904 = vmatpush2.bf16.msra.mxu0 0
  %905 = vmatprep.subr.bf16.mxu0 0
  %906 = vmatpush2.bf16.msra.mxu0 0
  %907 = vmatprep.subr.bf16.mxu0 0
  %908 = vmatpush2.bf16.msra.mxu0 0
  %909 = vmatprep.subr.bf16.mxu0 0
  %910 = vmatpush2.bf16.msra.mxu0 0
  %911 = vmatprep.subr.bf16.mxu0 0
  %912 = vmatpush2.bf16.msra.mxu0 0
  %913 = vmatprep.subr.bf16.mxu0 0
  %914 = vmatpush2.bf16.msra.mxu0 0
  %915 = vmatprep.subr.bf16.mxu0 0
  %916 = vmatpush2.bf16.msra.mxu0 0
  %917 = vmatprep.subr.bf16.mxu0 0
  %918 = vmatpush2.bf16.msra.mxu0 0
  %919 = vmatprep.mubr.bf16.mxu0 0
  %920 = vmatmul.mubr.bf16.gmra.mxu0 %v885
  %v921 = vpop.f32.mrf.mxu0
  %v922 = vadd.f32 0.0, %v921
  %v923 = vpop.f32.mrf.mxu0
  %v924 = vpop.f32.mrf.mxu0
  %v925 = vpop.f32.mrf.mxu0
  %926 = vdwg.mxu0
  %v927 = vadd.f32 %v172, %v922
  %v928 = vtanh.pop %v927
  %v929 = vxor.u32 %v927, 2147483648
  %v930 = vmul.f32 %v929, 1.442695
  %v931 = vpow.pop %v930
  %v932 = vadd.f32 %v931, 1.0
  %v933 = vrcp.pop %v932
  %v934 = vmul.f32 1.0, %v933
  %v935 = vsel %vm179, %v928, %v934
  %v936 = vmul.f32 %v935, %v870
  %938 = vrot.lane.b32.xlu0 %v935, 64
  %v939 = vpop.permute.xlu0 %938
  %v941 = vmul.f32 %v935, %v939
  %943 = vrot.lane.b32.xlu0 %v941, 32
  %v944 = vpop.permute.xlu0 %943
  %v946 = vadd.f32 %v936, %v944
  %v947 = vtanh.pop %v946
  %949 = vrot.lane.b32.xlu0 %v947, 64
  %v950 = vpop.permute.xlu0 %949
  %v952 = vmul.f32 %v935, %v950
  %vm953 = vcmp.gt.f32.partialorder %v41, 7.0
  %v954 = vsel %vm953, 1, 0
  %v955 = vcvt.s32.f32 %v954
  %957 = vset.pattern.permute.xlu0 0
  %958 = vperm.xlu0 %957, %v955
  %v959 = vpop.permute.xlu0 %958
  %v961 = vmul.f32 %v959, %v952
  %v962 = vsub.f32 1.0, %v955
  %964 = vset.pattern.permute.xlu0 0
  %965 = vperm.xlu0 %964, %v962
  %v966 = vpop.permute.xlu0 %965
  %v968 = vmul.f32 %v966, %v873
  %v969 = vadd.f32 %v961, %v968
  %v970 = vmul.f32 %v969, %v959
  %972 = vrot.lane.b32.xlu0 %v970, 32
  %v973 = vpop.permute.xlu0 %972
  %975 = vst.msk [vmem:[#allocation2 + $0x38] sm:$0xff] %vm97, %v973
  %v976 = vld [vmem:[#allocation2] sm:$0xff]
  %v977 = vld [vmem:[#allocation2 + $0x8] sm:$0xff]
  %v978 = vld [vmem:[#allocation2 + $0x10] sm:$0xff]
  %v979 = vld [vmem:[#allocation2 + $0x18] sm:$0xff]
  %v980 = vld [vmem:[#allocation2 + $0x20] sm:$0xff]
  %v981 = vld [vmem:[#allocation2 + $0x28] sm:$0xff]
  %v982 = vld [vmem:[#allocation2 + $0x30] sm:$0xff]
  %v983 = vld [vmem:[#allocation2 + $0x38] sm:$0xff]
  %v984 = vpack.c.bf16 %v977, %v976
  %v985 = vpack.c.bf16 %v979, %v978
  %v986 = vpack.c.bf16 %v981, %v980
  %v987 = vpack.c.bf16 %v983, %v982
  %v988 = vld [vmem:[%s5] sm:$0xf]
  %v989 = vld [vmem:[%s5 + $0x4] sm:$0xf]
  %v990 = vld [vmem:[%s5 + $0x8] sm:$0xf]
  %v991 = vld [vmem:[%s5 + $0xc] sm:$0xf]
  %v992 = vld [vmem:[%s6] sm:$0x1]
  %v994 = vlaneseq
  %v995 = vshrl.u32 %v994, 7
  %v996 = vsub.s32 0, %v995
  %v997 = vrot.slane %v992, %v996
  %v1003 = vunpack.c.l.b16 %v988
  %v1004 = vunpack.c.l.b16 %v989
  %v1005 = vunpack.c.l.b16 %v990
  %v1006 = vunpack.c.l.b16 %v991
  %v1007 = vpack.c.b16 %v1004, %v1003
  %v1008 = vpack.c.b16 %v1006, %v1005
  %v1012 = vsel %vm97, %v984, 0
  %v1015 = vsel %vm97, %v985, 0
  %v1018 = vsel %vm97, %v986, 0
  %v1021 = vsel %vm97, %v987, 0
  %1023 = vmatprep.subr.bf16.mxu0 0
  %1024 = vmatpush1.bf16.msra.mxu0 0
  %1025 = vmatprep.subr.bf16.mxu0 0
  %1026 = vmatpush1.bf16.msra.mxu0 0
  %1027 = vmatprep.subr.bf16.mxu0 0
  %1028 = vmatpush1.bf16.msra.mxu0 0
  %1029 = vmatprep.subr.bf16.mxu0 0
  %1030 = vmatpush1.bf16.msra.mxu0 0
  %1031 = vmatprep.subr.bf16.mxu0 0
  %1032 = vmatpush1.bf16.msra.mxu0 0
  %1033 = vmatprep.subr.bf16.mxu0 0
  %1034 = vmatpush1.bf16.msra.mxu0 0
  %1035 = vmatprep.subr.bf16.mxu0 0
  %1036 = vmatpush1.bf16.msra.mxu0 %v1008
  %1037 = vmatprep.subr.bf16.mxu0 0
  %1038 = vmatpush1.bf16.msra.mxu0 %v1007
  %1039 = vmatprep.subr.bf16.mxu0 0
  %1040 = vmatpush2.bf16.msra.mxu0 0
  %1041 = vmatprep.subr.bf16.mxu0 0
  %1042 = vmatpush2.bf16.msra.mxu0 0
  %1043 = vmatprep.subr.bf16.mxu0 0
  %1044 = vmatpush2.bf16.msra.mxu0 0
  %1045 = vmatprep.subr.bf16.mxu0 0
  %1046 = vmatpush2.bf16.msra.mxu0 0
  %1047 = vmatprep.subr.bf16.mxu0 0
  %1048 = vmatpush2.bf16.msra.mxu0 0
  %1049 = vmatprep.subr.bf16.mxu0 0
  %1050 = vmatpush2.bf16.msra.mxu0 0
  %1051 = vmatprep.subr.bf16.mxu0 0
  %1052 = vmatpush2.bf16.msra.mxu0 0
  %1053 = vmatprep.subr.bf16.mxu0 0
  %1054 = vmatpush2.bf16.msra.mxu0 0
  %1055 = vmatprep.mubr.bf16.mxu0 0
  %1056 = vmatmul.mubr.bf16.gmra.mxu0 %v1012
  %v1057 = vpop.f32.mrf.mxu0
  %v1058 = vadd.f32 %v997, %v1057
  %v1059 = vpop.f32.mrf.mxu0
  %v1060 = vpop.f32.mrf.mxu0
  %v1061 = vadd.f32 %v997, %v1060
  %v1062 = vpop.f32.mrf.mxu0
  %1063 = vmatprep.mubr.bf16.mxu0 0
  %1064 = vmatmul.mubr.bf16.gmra.mxu0 %v1015
  %v1065 = vpop.f32.mrf.mxu0
  %v1066 = vadd.f32 %v997, %v1065
  %v1067 = vpop.f32.mrf.mxu0
  %v1068 = vpop.f32.mrf.mxu0
  %v1069 = vadd.f32 %v997, %v1068
  %v1070 = vpop.f32.mrf.mxu0
  %1071 = vmatprep.mubr.bf16.mxu0 0
  %1072 = vmatmul.mubr.bf16.gmra.mxu0 %v1018
  %v1073 = vpop.f32.mrf.mxu0
  %v1074 = vadd.f32 %v997, %v1073
  %v1075 = vpop.f32.mrf.mxu0
  %v1076 = vpop.f32.mrf.mxu0
  %v1077 = vadd.f32 %v997, %v1076
  %v1078 = vpop.f32.mrf.mxu0
  %1079 = vmatprep.mubr.bf16.mxu0 0
  %1080 = vmatmul.mubr.bf16.gmra.mxu0 %v1021
  %v1081 = vpop.f32.mrf.mxu0
  %v1082 = vadd.f32 %v997, %v1081
  %v1083 = vpop.f32.mrf.mxu0
  %v1084 = vpop.f32.mrf.mxu0
  %v1085 = vadd.f32 %v997, %v1084
  %v1086 = vpop.f32.mrf.mxu0
  %1087 = vdwg.mxu0
  %v1088 = vsel %vm97, %v1058, 0.0
  %1089 = vadd.xlane.f32.xlu0 %v1088
  %v1090 = vpop.xlane.xlu0 %1089
  %v1091 = vsel %vm97, %v1061, 0.0
  %1092 = vadd.xlane.f32.xlu0 %v1091
  %v1093 = vpop.xlane.xlu0 %1092
  %v1094 = vsel %vm97, %v1066, 0.0
  %1095 = vadd.xlane.f32.xlu0 %v1094
  %v1096 = vpop.xlane.xlu0 %1095
  %v1097 = vsel %vm97, %v1069, 0.0
  %1098 = vadd.xlane.f32.xlu0 %v1097
  %v1099 = vpop.xlane.xlu0 %1098
  %v1100 = vsel %vm97, %v1074, 0.0
  %1101 = vadd.xlane.f32.xlu0 %v1100
  %v1102 = vpop.xlane.xlu0 %1101
  %v1103 = vsel %vm97, %v1077, 0.0
  %1104 = vadd.xlane.f32.xlu0 %v1103
  %v1105 = vpop.xlane.xlu0 %1104
  %v1106 = vsel %vm97, %v1082, 0.0
  %1107 = vadd.xlane.f32.xlu0 %v1106
  %v1108 = vpop.xlane.xlu0 %1107
  %v1109 = vsel %vm97, %v1085, 0.0
  %1110 = vadd.xlane.f32.xlu0 %v1109
  %v1111 = vpop.xlane.xlu0 %1110
  %v1112 = vrcp.pop 32.0
  %v1113 = vmul.f32 %v1090, %v1112
  %v1114 = vmul.f32 %v1093, %v1112
  %v1115 = vmul.f32 %v1096, %v1112
  %v1116 = vmul.f32 %v1099, %v1112
  %v1117 = vmul.f32 %v1102, %v1112
  %v1118 = vmul.f32 %v1105, %v1112
  %v1119 = vmul.f32 %v1108, %v1112
  %v1120 = vmul.f32 %v1111, %v1112
  %v1121 = vsub.f32 %v1058, %v1113
  %v1122 = vsub.f32 %v1061, %v1114
  %v1123 = vsub.f32 %v1066, %v1115
  %v1124 = vsub.f32 %v1069, %v1116
  %v1125 = vsub.f32 %v1074, %v1117
  %v1126 = vsub.f32 %v1077, %v1118
  %v1127 = vsub.f32 %v1082, %v1119
  %v1128 = vsub.f32 %v1085, %v1120
  %v1129 = vmul.f32 %v1121, %v1121
  %v1130 = vmul.f32 %v1122, %v1122
  %v1131 = vmul.f32 %v1123, %v1123
  %v1132 = vmul.f32 %v1124, %v1124
  %v1133 = vmul.f32 %v1125, %v1125
  %v1134 = vmul.f32 %v1126, %v1126
  %v1135 = vmul.f32 %v1127, %v1127
  %v1136 = vmul.f32 %v1128, %v1128
  %v1137 = vsel %vm97, %v1129, 0.0
  %1138 = vadd.xlane.f32.xlu0 %v1137
  %v1139 = vpop.xlane.xlu0 %1138
  %v1140 = vsel %vm97, %v1130, 0.0
  %1141 = vadd.xlane.f32.xlu0 %v1140
  %v1142 = vpop.xlane.xlu0 %1141
  %v1143 = vsel %vm97, %v1131, 0.0
  %1144 = vadd.xlane.f32.xlu0 %v1143
  %v1145 = vpop.xlane.xlu0 %1144
  %v1146 = vsel %vm97, %v1132, 0.0
  %1147 = vadd.xlane.f32.xlu0 %v1146
  %v1148 = vpop.xlane.xlu0 %1147
  %v1149 = vsel %vm97, %v1133, 0.0
  %1150 = vadd.xlane.f32.xlu0 %v1149
  %v1151 = vpop.xlane.xlu0 %1150
  %v1152 = vsel %vm97, %v1134, 0.0
  %1153 = vadd.xlane.f32.xlu0 %v1152
  %v1154 = vpop.xlane.xlu0 %1153
  %v1155 = vsel %vm97, %v1135, 0.0
  %1156 = vadd.xlane.f32.xlu0 %v1155
  %v1157 = vpop.xlane.xlu0 %1156
  %v1158 = vsel %vm97, %v1136, 0.0
  %1159 = vadd.xlane.f32.xlu0 %v1158
  %v1160 = vpop.xlane.xlu0 %1159
  %v1161 = vmul.f32 %v1139, %v1112
  %v1162 = vmul.f32 %v1142, %v1112
  %v1163 = vmul.f32 %v1145, %v1112
  %v1164 = vmul.f32 %v1148, %v1112
  %v1165 = vmul.f32 %v1151, %v1112
  %v1166 = vmul.f32 %v1154, %v1112
  %v1167 = vmul.f32 %v1157, %v1112
  %v1168 = vmul.f32 %v1160, %v1112
  %v1169 = vadd.f32 %v1161, 1e-05
  %v1170 = vadd.f32 %v1162, 1e-05
  %v1171 = vadd.f32 %v1163, 1e-05
  %v1172 = vadd.f32 %v1164, 1e-05
  %v1173 = vadd.f32 %v1165, 1e-05
  %v1174 = vadd.f32 %v1166, 1e-05
  %v1175 = vadd.f32 %v1167, 1e-05
  %v1176 = vadd.f32 %v1168, 1e-05
  %v1177 = vrsqrt.pop %v1169
  %v1178 = vrsqrt.pop %v1170
  %v1179 = vrsqrt.pop %v1171
  %v1180 = vrsqrt.pop %v1172
  %v1181 = vrsqrt.pop %v1173
  %v1182 = vrsqrt.pop %v1174
  %v1183 = vrsqrt.pop %v1175
  %v1184 = vrsqrt.pop %v1176
  %v1185 = vmul.f32 %v1121, %v1177
  %v1186 = vmul.f32 %v1122, %v1178
  %v1187 = vmul.f32 %v1123, %v1179
  %v1188 = vmul.f32 %v1124, %v1180
  %v1189 = vmul.f32 %v1125, %v1181
  %v1190 = vmul.f32 %v1126, %v1182
  %v1191 = vmul.f32 %v1127, %v1183
  %v1192 = vmul.f32 %v1128, %v1184
  %v1193 = vld [vmem:[%s7] sm:$0x1]
  %v1195 = vlaneseq
  %v1196 = vshrl.u32 %v1195, 7
  %v1197 = vsub.s32 0, %v1196
  %v1198 = vrot.slane %v1193, %v1197
  %v1200 = vmul.f32 %v1185, %v1198
  %v1201 = vmul.f32 %v1186, %v1198
  %v1202 = vmul.f32 %v1187, %v1198
  %v1203 = vmul.f32 %v1188, %v1198
  %v1204 = vmul.f32 %v1189, %v1198
  %v1205 = vmul.f32 %v1190, %v1198
  %v1206 = vmul.f32 %v1191, %v1198
  %v1207 = vmul.f32 %v1192, %v1198
  %v1208 = vld [vmem:[%s8] sm:$0x1]
  %v1210 = vlaneseq
  %v1211 = vshrl.u32 %v1210, 7
  %v1212 = vsub.s32 0, %v1211
  %v1213 = vrot.slane %v1208, %v1212
  %v1215 = vadd.f32 %v1200, %v1213
  %v1216 = vadd.f32 %v1201, %v1213
  %v1217 = vadd.f32 %v1202, %v1213
  %v1218 = vadd.f32 %v1203, %v1213
  %v1219 = vadd.f32 %v1204, %v1213
  %v1220 = vadd.f32 %v1205, %v1213
  %v1221 = vadd.f32 %v1206, %v1213
  %v1222 = vadd.f32 %v1207, %v1213
  %v1223 = vtanh.pop %v1215
  %v1224 = vtanh.pop %v1216
  %v1225 = vtanh.pop %v1217
  %v1226 = vtanh.pop %v1218
  %v1227 = vtanh.pop %v1219
  %v1228 = vtanh.pop %v1220
  %v1229 = vtanh.pop %v1221
  %v1230 = vtanh.pop %v1222
  %v1231 = vld [vmem:[%s9] sm:$0x1]
  %v1233 = vlaneseq
  %v1234 = vshrl.u32 %v1233, 7
  %v1235 = vsub.s32 0, %v1234
  %v1236 = vrot.slane %v1231, %v1235
  %v1238 = vmul.f32 %v1223, %v1236
  %v1239 = vmul.f32 %v1224, %v1236
  %v1240 = vmul.f32 %v1225, %v1236
  %v1241 = vmul.f32 %v1226, %v1236
  %v1242 = vmul.f32 %v1227, %v1236
  %v1243 = vmul.f32 %v1228, %v1236
  %v1244 = vmul.f32 %v1229, %v1236
  %v1245 = vmul.f32 %v1230, %v1236
  %v1246 = vsel %vm97, %v1238, 0.0
  %1247 = vadd.xlane.f32.xlu0 %v1246
  %v1248 = vpop.xlane.xlu0 %1247
  %v1249 = vsel %vm97, %v1239, 0.0
  %1250 = vadd.xlane.f32.xlu0 %v1249
  %v1251 = vpop.xlane.xlu0 %1250
  %v1252 = vsel %vm97, %v1240, 0.0
  %1253 = vadd.xlane.f32.xlu0 %v1252
  %v1254 = vpop.xlane.xlu0 %1253
  %v1255 = vsel %vm97, %v1241, 0.0
  %1256 = vadd.xlane.f32.xlu0 %v1255
  %v1257 = vpop.xlane.xlu0 %1256
  %v1258 = vsel %vm97, %v1242, 0.0
  %1259 = vadd.xlane.f32.xlu0 %v1258
  %v1260 = vpop.xlane.xlu0 %1259
  %v1261 = vsel %vm97, %v1243, 0.0
  %1262 = vadd.xlane.f32.xlu0 %v1261
  %v1263 = vpop.xlane.xlu0 %1262
  %v1264 = vsel %vm97, %v1244, 0.0
  %1265 = vadd.xlane.f32.xlu0 %v1264
  %v1266 = vpop.xlane.xlu0 %1265
  %v1267 = vsel %vm97, %v1245, 0.0
  %1268 = vadd.xlane.f32.xlu0 %v1267
  %v1269 = vpop.xlane.xlu0 %1268
  %v1270 = vld [vmem:[#allocation3] sm:$0x1]
  %v1272 = vlaneseq
  %v1273 = vshrl.u32 %v1272, 7
  %v1274 = vsub.s32 0, %v1273
  %v1275 = vrot.slane %v1270, %v1274
  %v1277 = vadd.f32 %v1248, %v1275
  %v1278 = vadd.f32 %v1251, %v1275
  %v1279 = vadd.f32 %v1254, %v1275
  %v1280 = vadd.f32 %v1257, %v1275
  %v1281 = vadd.f32 %v1260, %v1275
  %v1282 = vadd.f32 %v1263, %v1275
  %v1283 = vadd.f32 %v1266, %v1275
  %v1284 = vadd.f32 %v1269, %v1275
  %v1285 = vcvt.s32.f32 0
  %v1286 = vcvt.s32.f32 1
  %v1287 = vcvt.s32.f32 2
  %v1288 = vcvt.s32.f32 3
  %v1289 = vcvt.s32.f32 4
  %v1290 = vcvt.s32.f32 5
  %v1291 = vcvt.s32.f32 6
  %v1292 = vcvt.s32.f32 7
  %vm1293 = vcmp.lt.f32.partialorder %v1285, %v41
  %vm1294 = vcmp.lt.f32.partialorder %v1286, %v41
  %vm1295 = vcmp.lt.f32.partialorder %v1287, %v41
  %vm1296 = vcmp.lt.f32.partialorder %v1288, %v41
  %vm1297 = vcmp.lt.f32.partialorder %v1289, %v41
  %vm1298 = vcmp.lt.f32.partialorder %v1290, %v41
  %vm1299 = vcmp.lt.f32.partialorder %v1291, %v41
  %vm1300 = vcmp.lt.f32.partialorder %v1292, %v41
  %v1301 = vsel %vm1293, %v1277, -1e+09
  %v1302 = vsel %vm1294, %v1278, -1e+09
  %v1303 = vsel %vm1295, %v1279, -1e+09
  %v1304 = vsel %vm1296, %v1280, -1e+09
  %v1305 = vsel %vm1297, %v1281, -1e+09
  %v1306 = vsel %vm1298, %v1282, -1e+09
  %v1307 = vsel %vm1299, %v1283, -1e+09
  %v1308 = vsel %vm1300, %v1284, -1e+09
  %vm1309 = vcmask 7168
  %v1310 = vsel %vm1309, %v1301, -inf
  %v1311 = vsel %vm1309, %v1302, -inf
  %v1312 = vsel %vm1309, %v1303, -inf
  %v1313 = vsel %vm1309, %v1304, -inf
  %v1314 = vsel %vm1309, %v1305, -inf
  %v1315 = vmax.f32 %v1310, %v1314
  %v1316 = vsel %vm1309, %v1306, -inf
  %v1317 = vmax.f32 %v1311, %v1316
  %v1318 = vsel %vm1309, %v1307, -inf
  %v1319 = vmax.f32 %v1312, %v1318
  %v1320 = vsel %vm1309, %v1308, -inf
  %v1321 = vmax.f32 %v1313, %v1320
  %v1322 = vmax.f32 %v1315, %v1317
  %v1323 = vmax.f32 %v1319, %v1321
  %v1324 = vmax.f32 %v1322, %v1323
  %v1325 = vsub.f32 %v1301, %v1324
  %v1326 = vsub.f32 %v1302, %v1324
  %v1327 = vsub.f32 %v1303, %v1324
  %v1328 = vsub.f32 %v1304, %v1324
  %v1329 = vsub.f32 %v1305, %v1324
  %v1330 = vsub.f32 %v1306, %v1324
  %v1331 = vsub.f32 %v1307, %v1324
  %v1332 = vsub.f32 %v1308, %v1324
  %v1333 = vmul.f32 %v1325, 1.442695
  %v1334 = vpow.pop %v1333
  %v1335 = vmul.f32 %v1326, 1.442695
  %v1336 = vpow.pop %v1335
  %v1337 = vmul.f32 %v1327, 1.442695
  %v1338 = vpow.pop %v1337
  %v1339 = vmul.f32 %v1328, 1.442695
  %v1340 = vpow.pop %v1339
  %v1341 = vmul.f32 %v1329, 1.442695
  %v1342 = vpow.pop %v1341
  %v1343 = vmul.f32 %v1330, 1.442695
  %v1344 = vpow.pop %v1343
  %v1345 = vmul.f32 %v1331, 1.442695
  %v1346 = vpow.pop %v1345
  %v1347 = vmul.f32 %v1332, 1.442695
  %v1348 = vpow.pop %v1347
  %v1349 = vsel %vm1309, %v1334, 0.0
  %v1350 = vsel %vm1309, %v1336, 0.0
  %v1351 = vadd.f32 %v1349, %v1350
  %v1352 = vsel %vm1309, %v1338, 0.0
  %v1353 = vadd.f32 %v1351, %v1352
  %v1354 = vsel %vm1309, %v1340, 0.0
  %v1355 = vadd.f32 %v1353, %v1354
  %v1356 = vsel %vm1309, %v1342, 0.0
  %v1357 = vadd.f32 %v1355, %v1356
  %v1358 = vsel %vm1309, %v1344, 0.0
  %v1359 = vadd.f32 %v1357, %v1358
  %v1360 = vsel %vm1309, %v1346, 0.0
  %v1361 = vadd.f32 %v1359, %v1360
  %v1362 = vsel %vm1309, %v1348, 0.0
  %v1363 = vadd.f32 %v1361, %v1362
  %1365 = vset.pattern.permute.xlu0 0
  %1366 = vperm.xlu0 %1365, %v1334
  %v1367 = vpop.permute.xlu0 %1366
  %1370 = vset.pattern.permute.xlu0 0
  %1371 = vperm.xlu0 %1370, %v1336
  %v1372 = vpop.permute.xlu0 %1371
  %1375 = vset.pattern.permute.xlu0 0
  %1376 = vperm.xlu0 %1375, %v1338
  %v1377 = vpop.permute.xlu0 %1376
  %1380 = vset.pattern.permute.xlu0 0
  %1381 = vperm.xlu0 %1380, %v1340
  %v1382 = vpop.permute.xlu0 %1381
  %1385 = vset.pattern.permute.xlu0 0
  %1386 = vperm.xlu0 %1385, %v1342
  %v1387 = vpop.permute.xlu0 %1386
  %1390 = vset.pattern.permute.xlu0 0
  %1391 = vperm.xlu0 %1390, %v1344
  %v1392 = vpop.permute.xlu0 %1391
  %1395 = vset.pattern.permute.xlu0 0
  %1396 = vperm.xlu0 %1395, %v1346
  %v1397 = vpop.permute.xlu0 %1396
  %1400 = vset.pattern.permute.xlu0 0
  %1401 = vperm.xlu0 %1400, %v1348
  %v1402 = vpop.permute.xlu0 %1401
  %v1404 = vmul.f32 %v1367, %v1058
  %v1405 = vmul.f32 %v1372, %v1061
  %v1406 = vmul.f32 %v1377, %v1066
  %v1407 = vmul.f32 %v1382, %v1069
  %v1408 = vmul.f32 %v1387, %v1074
  %v1409 = vmul.f32 %v1392, %v1077
  %v1410 = vmul.f32 %v1397, %v1082
  %v1411 = vmul.f32 %v1402, %v1085
  %v1412 = vsel %vm97, %v1404, 0.0
  %v1413 = vsel %vm97, %v1405, 0.0
  %v1414 = vadd.f32 %v1412, %v1413
  %v1415 = vsel %vm97, %v1406, 0.0
  %v1416 = vadd.f32 %v1414, %v1415
  %v1417 = vsel %vm97, %v1407, 0.0
  %v1418 = vadd.f32 %v1416, %v1417
  %v1419 = vsel %vm97, %v1408, 0.0
  %v1420 = vadd.f32 %v1418, %v1419
  %v1421 = vsel %vm97, %v1409, 0.0
  %v1422 = vadd.f32 %v1420, %v1421
  %v1423 = vsel %vm97, %v1410, 0.0
  %v1424 = vadd.f32 %v1422, %v1423
  %v1425 = vsel %vm97, %v1411, 0.0
  %v1426 = vadd.f32 %v1424, %v1425
  %v1427 = vrcp.pop %v1363
  %1429 = vset.pattern.permute.xlu0 0
  %1430 = vperm.xlu0 %1429, %v1427
  %v1431 = vpop.permute.xlu0 %1430
  %v1433 = vmul.f32 %v1426, %v1431
  %v1434 = vmul.f32 %v1433, %v267
  %1435 = vst.msk [vmem:[%s11] sm:$0xff] %vm97, %v1434
  // Predicated region
  $region46: #{_device_forward.2} parent=0 // pred_check
    _
  $region47: #{_device_forward.2} parent=0 // pred_check_branch
    %1437 = sbr.rel (0) target = $region49
  $region48: #{_device_forward.2} parent=0 // pred_region
    _
  $region49: #{_device_forward.2} parent=0 // pred_fallthru
    _
  // Predicated region
  $region50: #{_device_forward.2} parent=0 // pred_check
    _
  $region51: #{_device_forward.2} parent=0 // pred_check_branch
    %1439 = sbr.rel (0) target = $region53
  $region52: #{_device_forward.2} parent=0 // pred_region
    _
  $region53: #{_device_forward.2} parent=0 // pred_fallthru
    _

</llo_original>
